<compile_context>
chip_gen: v5e
topology: v5e:2x2
jax: 0.10.0
libtpu: 0.0.40
codegen_flags: <defaults>
</compile_context>

<pallas_src>
import numpy as np
import jax
import jax.numpy as jnp
from jax import lax
from jax.experimental import pallas as pl
from jax.experimental.pallas import tpu as pltpu


# ---------------------------------------------------------------------------
# Host-side constant-matrix construction (deterministic "parameters")
# ---------------------------------------------------------------------------
def _gauss1d(size, sigma):
    ax = np.linspace(-(size - 1) / 2.0, (size - 1) / 2.0, size)
    g = np.exp(-0.5 * np.square(ax) / (float(sigma) ** 2))
    return g / g.sum()          # torch 2D kernel == outer(g, g) exactly (separable)


def _conv_matrix(n, g1d):
    """1D zero-padded 'same' convolution (matches F.conv2d zero padding)."""
    K = len(g1d)
    p = K // 2
    M = np.zeros((n, n), np.float64)
    for i in range(n):
        for k in range(K):
            j = i + k - p
            if 0 <= j < n:
                M[i, j] += g1d[k]
    return M


def _down_matrix(n):
    """x[::2] as a (ceil(n/2), n) selection matrix."""
    m = (n + 1) // 2
    D = np.zeros((m, n), np.float64)
    for i in range(m):
        D[i, 2 * i] = 1.0
    return D


def _bilinear_matrix(out_n, in_n):
    """F.interpolate(mode='bilinear', align_corners=True) along one axis."""
    B = np.zeros((out_n, in_n), np.float64)
    if in_n == 1:
        B[:, 0] = 1.0
        return B
    for o in range(out_n):
        src = o * (in_n - 1) / (out_n - 1) if out_n > 1 else 0.0
        i0 = min(int(np.floor(src)), in_n - 2)
        f = src - i0
        B[o, i0] += 1.0 - f
        B[o, i0 + 1] += f
    return B


def _build_perms(n0, levels):
    """Per-level 'evens then odds' permutations sigma_l (generalized bit reversal).

    sigma_L = id;  sigma_l(i) = 2*sigma_{l+1}(i)           for i <  n_{l+1}
               sigma_l(n_{l+1}+i) = 2*sigma_{l+1}(i) + 1    for i >= n_{l+1}
    With these, P_l @ Upsample_nn @ P_{l+1}^T == [I; I], so nearest-2x upsampling in
    permuted coordinates is a pure 2x2 block tile (concatenates, no matmul).
    """
    sizes = [n0 // (2 ** l) for l in range(levels + 1)]
    perms = [None] * (levels + 1)
    perms[levels] = np.arange(sizes[levels], dtype=np.int64)
    for l in range(levels - 1, -1, -1):
        half = sizes[l + 1]
        p = np.empty(sizes[l], dtype=np.int64)
        p[:half] = 2 * perms[l + 1]
        p[half:] = 2 * perms[l + 1] + 1
        perms[l] = p
    return perms


# ---------------------------------------------------------------------------
# In-kernel helpers: separable spatial operators as large-M MXU matmuls
# ---------------------------------------------------------------------------
def _rmul(x3, mat, precision):
    """(N, a, b) contracted with (b, c) over the lane axis -> (N, a, c), f32 acc."""
    N, a, b = x3.shape
    c = mat.shape[1]
    x3 = x3.astype(mat.dtype)
    if a % 8 == 0:
        # Layout-trivial merge of the leading dim into the sublane dim -> ONE big 2D
        # MXU matmul with M = N*a rows (no matrix broadcast, no per-image matmuls).
        y = jnp.dot(x3.reshape(N * a, b), mat,
                    preferred_element_type=jnp.float32, precision=precision)
        return y.reshape(N, a, c)
    # Tiny deep-pyramid levels only (a < 8; never hit when min(H, W) >= 8*2**levels):
    # data here is < one vreg per image, so the batched form is noise.
    mat_b = jnp.broadcast_to(mat[None], (N, b, c))
    return lax.dot_general(x3, mat_b,
                           dimension_numbers=(((2,), (1,)), ((0,), (0,))),
                           preferred_element_type=jnp.float32, precision=precision)


def _lmul_t(mat_t, x3, precision):
    """Apply M (p, q) on the left of x3 (N, q, r) -> (N, p, r);  mat_t = M^T (q, p).

    swapaxes (XLU, overlaps MXU) + one large-M 2D matmul + swapaxes: the matrix is
    never replicated across the batch.
    """
    x_t = jnp.swapaxes(x3, 1, 2)                 # (N, r, q)
    y_t = _rmul(x_t, mat_t, precision)           # (N, r, p)
    return jnp.swapaxes(y_t, 1, 2)               # (N, p, r)


def _sigmoid(z):
    # z >= 0 at both call sites (mean of |diff|, and a value clamped to [0, 1]),
    # so exp(-z) <= 1 and the plain form is numerically safe.
    return 1.0 / (1.0 + jnp.exp(-z))


# ---------------------------------------------------------------------------
# Pallas kernel + wrapper
# ---------------------------------------------------------------------------
def make_laplacian_pyramid_fn(B, C, H, W, max_levels=3, kernel_size=5, sigma=1.0,
                              matmul_dtype=jnp.float32):
    assert H % (2 ** max_levels) == 0 and W % (2 ** max_levels) == 0, (
        "H and W must be divisible by 2**max_levels (same restriction as the "
        "PyTorch downsample/nearest-upsample round trip).")

    L = max_levels
    g1 = _gauss1d(kernel_size, sigma)
    hs = [H // (2 ** l) for l in range(L + 1)]
    ws = [W // (2 ** l) for l in range(L + 1)]
    ph = _build_perms(H, L)
    pw = _build_perms(W, L)

    # 1/C channel-mean and 1/max_levels folded into the bilinear matrices (level 0's
    # bilinear is the identity -> one scalar multiply in the kernel).
    inv_scale = 1.0 / (C * max_levels)

    # Constant matrices, conjugated by the per-level permutations on the host.
    mats_np = []
    for l in range(L):
        Ah = _down_matrix(hs[l]) @ _conv_matrix(hs[l], g1)      # (h_{l+1}, h_l)
        Aw = _down_matrix(ws[l]) @ _conv_matrix(ws[l], g1)      # (w_{l+1}, w_l)
        AhP = Ah[np.ix_(ph[l + 1], ph[l])]
        AwP = Aw[np.ix_(pw[l + 1], pw[l])]
        mats_np += [AwP.T, AhP.T]                               # (w_l,w_{l+1}),(h_l,h_{l+1})
        if l >= 1:                                              # level 0 needs no resize
            Bh = _bilinear_matrix(H, hs[l]) * inv_scale         # pre-scaled
            Bw = _bilinear_matrix(W, ws[l])
            BhP = Bh[np.ix_(ph[0], ph[l])]
            BwP = Bw[np.ix_(pw[0], pw[l])]
            mats_np += [BwP.T, BhP.T]                           # (w_l, W), (h_l, H)
    mats = [jnp.asarray(m, matmul_dtype) for m in mats_np]

    precision = (lax.Precision.HIGHEST
                 if jnp.dtype(matmul_dtype) == jnp.dtype(jnp.float32)
                 else lax.Precision.DEFAULT)

    # ---- explicit VMEM accounting -> Bb, vmem_limit ------------------------------
    mat_itemsize = jnp.dtype(matmul_dtype).itemsize
    const_bytes = sum(int(np.prod(m.shape)) for m in mats_np) * mat_itemsize
    single_buffer_consts = const_bytes > (4 << 20)   # only worth it when they are big
    const_buf = 1 if single_buffer_consts else 2

    try:
        phys_vmem = int(getattr(pltpu.get_tpu_info(), "vmem_capacity_bytes",
                                64 * 1024 * 1024))
    except Exception:
        phys_vmem = 64 * 1024 * 1024                 # assume the smallest (v7x per-TC)

    in_img = C * H * W * 4                            # one batch element, f32
    out_img = H * W * 4

    def vmem_need(bb):
        io = 2 * bb * (in_img + out_img)              # double-buffered I/O blocks
        tmp = 4 * bb * in_img                         # peak live f32 temporaries
        return io + tmp + const_bytes * const_buf

    # Largest divisor of B fitting ~70% of physical VMEM; keep >=2 grid steps when
    # B >= 2 so the "parallel" axis can actually be split across two TensorCores.
    target = int(0.70 * phys_vmem)
    bb_cap = B // 2 if B >= 2 else B
    Bb = 1
    for cand in range(max(bb_cap, 1), 0, -1):
        if B % cand == 0 and vmem_need(cand) <= target:
            Bb = cand
            break
    n_steps = B // Bb
    vmem_limit = int(min(0.85 * phys_vmem,
                         max(2 * vmem_need(Bb), 32 * 1024 * 1024)))

    # ---- kernel -------------------------------------------------------------------
    def kernel(x_ref, *refs):
        out_ref = refs[-1]
        m = refs[:-1]

        BC = Bb * C
        # (Bb, C, H, W) -> (Bb*C, H, W): leading-dims-only reshape (layout-free).
        curP = x_ref[...].reshape(BC, H, W)

        total = None
        idx = 0
        for l in range(L):
            h_l, w_l = hs[l], ws[l]
            AwT = m[idx][...]
            AhT = m[idx + 1][...]
            idx += 2

            # Gaussian blur + stride-2 downsample in permuted coords:
            #   downP = (P Ah P^T) @ curP @ (P Aw P^T)^T, all Bb*C images at once.
            t = _rmul(curP, AwT, precision)            # (BC, h_l, w_{l+1})
            downP = _lmul_t(AhT, t, precision)         # (BC, h_{l+1}, w_{l+1})

            # nearest-2x upsample == 2x2 block tile in evens-then-odds coordinates
            # (replaces the Uh/Uw selection matmuls; pure VPU/XLU work).
            row = jnp.concatenate([downP, downP], axis=2)   # (BC, h_{l+1}, w_l)
            up = jnp.concatenate([row, row], axis=1)        # (BC, h_l,     w_l)

            diff = jnp.abs(curP - up)                  # (BC, h_l, w_l), f32
            d4 = diff.reshape(Bb, C, h_l, w_l)         # leading split (layout-free)
            lap = d4[:, 0]
            for c in range(1, C):                      # channel SUM; 1/C folded into Bh
                lap = lap + d4[:, c]

            # Fused bilinear(align_corners=True)-to-(H, W) combine.
            if l == 0:
                total = lap * inv_scale                # level-0 resize is the identity
            else:
                BwT = m[idx][...]
                BhT = m[idx + 1][...]
                idx += 2
                lw = _rmul(lap, BwT, precision)              # (Bb, h_l, W)
                total = total + _lmul_t(BhT, lw, precision)  # (Bb, H,  W)

            curP = downP

        s = jnp.minimum(jnp.abs(_sigmoid(total) - 0.5) * 100.0, 1.0)   # .clamp(max=1)
        # TODO(synk): save_image(...) PNG dump is a host-side I/O side effect; omitted.
        out_ref[...] = (2.0 * (1.0 - _sigmoid(0.5 * s))).astype(out_ref.dtype)

    # ---- specs / pallas_call --------------------------------------------------------
    in_specs = [pl.BlockSpec((Bb, C, H, W), lambda b: (b, 0, 0, 0))]
    for mat in mats:
        if single_buffer_consts:
            # Grid-invariant constants: single-buffer to halve their VMEM footprint at
            # large resolutions (matters under v7x's 64 MiB VMEM).
            in_specs.append(pl.BlockSpec(mat.shape, lambda b: (0, 0),
                                         pipeline_mode=pl.Buffered(1)))
        else:
            in_specs.append(pl.BlockSpec(mat.shape, lambda b: (0, 0)))

    grid_spec = pltpu.PrefetchScalarGridSpec(
        num_scalar_prefetch=0,
        grid=(n_steps,),
        in_specs=in_specs,
        out_specs=pl.BlockSpec((Bb, H, W), lambda b: (b, 0, 0)),
    )

    flops = 0
    for l in range(L):
        flops += 2 * B * C * hs[l] * ws[l] * ws[l + 1]          # W-direction blur+down
        flops += 2 * B * C * ws[l + 1] * hs[l] * hs[l + 1]      # H-direction blur+down
        if l >= 1:
            flops += 2 * B * hs[l] * ws[l] * W                  # bilinear, W direction
            flops += 2 * B * W * hs[l] * H                      # bilinear, H direction
    cost = pl.CostEstimate(
        flops=int(flops),
        transcendentals=int(2 * B * H * W),
        bytes_accessed=int(B * C * H * W * 4 + B * H * W * 4 + const_bytes))

    call = pl.pallas_call(
        kernel,
        out_shape=jax.ShapeDtypeStruct((B, H, W), jnp.float32),
        grid_spec=grid_spec,
        compiler_params=pltpu.CompilerParams(
            dimension_semantics=("parallel",),
            vmem_limit_bytes=vmem_limit,
        ),
        cost_estimate=cost,
    )

    # ---- wrapper: enter / leave the permuted coordinate system ----------------------
    perm_h0 = jnp.asarray(ph[0], jnp.int32)
    perm_w0 = jnp.asarray(pw[0], jnp.int32)
    inv_h0 = jnp.asarray(np.argsort(ph[0]), jnp.int32)
    inv_w0 = jnp.asarray(np.argsort(pw[0]), jnp.int32)

    def forward(x):
        # O(S^2) XLA gathers outside the kernel vs the kernel's O(S^3) matmuls.
        xP = jnp.take(jnp.take(x, perm_h0, axis=2), perm_w0, axis=3)
        outP = call(xP, *mats)
        return jnp.take(jnp.take(outP, inv_h0, axis=1), inv_w0, axis=2)

    return forward


# ---------------------------------------------------------------------------
# Pure-JAX reference (mirrors the PyTorch code path op-for-op) for validation
# ---------------------------------------------------------------------------
def ref_forward(x, max_levels=3, kernel_size=5, sigma=1.0):
    b, c, h, w = x.shape
    g1 = _gauss1d(kernel_size, sigma)
    k2d = np.outer(g1, g1).astype(np.float32)
    weight = jnp.broadcast_to(jnp.asarray(k2d), (c, 1, kernel_size, kernel_size))
    pad = kernel_size // 2

    def gconv(z):
        return lax.conv_general_dilated(
            z, weight, window_strides=(1, 1), padding=((pad, pad), (pad, pad)),
            feature_group_count=c, dimension_numbers=("NCHW", "OIHW", "NCHW"))

    def up_nn(z):
        return jnp.repeat(jnp.repeat(z, 2, axis=2), 2, axis=3)

    def bilinear_ac(z, out_h, out_w):
        def interp(arr, axis, out_size):
            in_size = arr.shape[axis]
            if in_size == 1:
                reps = [1] * arr.ndim
                reps[axis] = out_size
                return jnp.tile(arr, reps)
            scale = (in_size - 1) / (out_size - 1) if out_size > 1 else 0.0
            src = jnp.arange(out_size) * scale
            i0 = jnp.clip(jnp.floor(src).astype(jnp.int32), 0, in_size - 2)
            f = (src - i0).astype(arr.dtype)
            a0 = jnp.take(arr, i0, axis=axis)
            a1 = jnp.take(arr, i0 + 1, axis=axis)
            shape = [1] * arr.ndim
            shape[axis] = out_size
            f = f.reshape(shape)
            return a0 * (1.0 - f) + a1 * f
        return interp(interp(z, 2, out_h), 3, out_w)

    cur = x
    laps = []
    for _ in range(max_levels):
        g = gconv(cur)
        down = g[:, :, ::2, ::2]
        lap = jnp.abs(cur - up_nn(down))
        lap = jnp.mean(lap, axis=1, keepdims=True)
        laps.append(lap)
        cur = down

    total = jnp.zeros((b, 1, h, w), x.dtype)
    for lp in laps:
        total = total + bilinear_ac(lp, h, w)
    total = total / float(max_levels)
    s = jnp.minimum(jnp.abs(jax.nn.sigmoid(total) - 0.5) * 100.0, 1.0)
    return (2.0 * (1.0 - jax.nn.sigmoid(0.5 * s))).reshape(b, h, w)


# ---------------------------------------------------------------------------
if __name__ == "__main__":
    B, C, H, W = 2, 3, 16, 16  # module defaults: channels=3, max_levels=3
    key = jax.random.PRNGKey(0)
    x = jax.random.normal(key, (B, C, H, W), dtype=jnp.float32)

    fwd = make_laplacian_pyramid_fn(B, C, H, W, max_levels=3, kernel_size=5, sigma=1.0)
    out = jax.block_until_ready(fwd(x))

    ref = jax.block_until_ready(ref_forward(x, max_levels=3, kernel_size=5, sigma=1.0))
    np.testing.assert_allclose(np.asarray(out), np.asarray(ref), rtol=2e-5, atol=2e-5)

    print("KERNEL_OK")
</pallas_src>

<mosaic_0001>
module attributes {stable_mosaic.version = 11 : i64} {
  func.func @kernel(%arg0: i32, %arg1: memref<1x3x16x16xf32, #tpu.memory_space<vmem>>, %arg2: memref<16x8xf32, #tpu.memory_space<vmem>>, %arg3: memref<16x8xf32, #tpu.memory_space<vmem>>, %arg4: memref<8x4xf32, #tpu.memory_space<vmem>>, %arg5: memref<8x4xf32, #tpu.memory_space<vmem>>, %arg6: memref<8x16xf32, #tpu.memory_space<vmem>>, %arg7: memref<8x16xf32, #tpu.memory_space<vmem>>, %arg8: memref<4x2xf32, #tpu.memory_space<vmem>>, %arg9: memref<4x2xf32, #tpu.memory_space<vmem>>, %arg10: memref<4x16xf32, #tpu.memory_space<vmem>>, %arg11: memref<4x16xf32, #tpu.memory_space<vmem>>, %arg12: memref<1x16x16xf32, #tpu.memory_space<vmem>>) attributes {dimension_semantics = [#tpu.dimension_semantics<parallel>], iteration_bounds = array<i64: 2>, scalar_prefetch = 0 : i64, scratch_operands = 0 : i64, tpu.core_type = #tpu.core_type<tc>, window_params = [{transform_indices = @transform_0, window_bounds = array<i64: 1, 3, 16, 16>}, {pipeline_mode = #tpu.pipeline_mode<synchronous>, transform_indices = @transform_1, window_bounds = array<i64: 16, 8>}, {pipeline_mode = #tpu.pipeline_mode<synchronous>, transform_indices = @transform_2, window_bounds = array<i64: 16, 8>}, {pipeline_mode = #tpu.pipeline_mode<synchronous>, transform_indices = @transform_3, window_bounds = array<i64: 8, 4>}, {pipeline_mode = #tpu.pipeline_mode<synchronous>, transform_indices = @transform_4, window_bounds = array<i64: 8, 4>}, {pipeline_mode = #tpu.pipeline_mode<synchronous>, transform_indices = @transform_5, window_bounds = array<i64: 8, 16>}, {pipeline_mode = #tpu.pipeline_mode<synchronous>, transform_indices = @transform_6, window_bounds = array<i64: 8, 16>}, {pipeline_mode = #tpu.pipeline_mode<synchronous>, transform_indices = @transform_7, window_bounds = array<i64: 4, 2>}, {pipeline_mode = #tpu.pipeline_mode<synchronous>, transform_indices = @transform_8, window_bounds = array<i64: 4, 2>}, {pipeline_mode = #tpu.pipeline_mode<synchronous>, transform_indices = @transform_9, window_bounds = array<i64: 4, 16>}, {pipeline_mode = #tpu.pipeline_mode<synchronous>, transform_indices = @transform_10, window_bounds = array<i64: 4, 16>}, {transform_indices = @transform_11, window_bounds = array<i64: 1, 16, 16>}]} {
    %c0 = arith.constant 0 : index
    %c0_0 = arith.constant 0 : index
    %c0_1 = arith.constant 0 : index
    %c0_2 = arith.constant 0 : index
    %0 = vector.load %arg1[%c0, %c0_0, %c0_1, %c0_2] : memref<1x3x16x16xf32, #tpu.memory_space<vmem>>, vector<1x3x16x16xf32>
    %1 = vector.shape_cast %0 : vector<1x3x16x16xf32> to vector<3x16x16xf32>
    %c0_3 = arith.constant 0 : index
    %c0_4 = arith.constant 0 : index
    %2 = vector.load %arg2[%c0_3, %c0_4] : memref<16x8xf32, #tpu.memory_space<vmem>>, vector<16x8xf32>
    %c0_5 = arith.constant 0 : index
    %c0_6 = arith.constant 0 : index
    %3 = vector.load %arg3[%c0_5, %c0_6] : memref<16x8xf32, #tpu.memory_space<vmem>>, vector<16x8xf32>
    %4 = vector.shape_cast %1 : vector<3x16x16xf32> to vector<48x16xf32>
    %cst = arith.constant dense<0.000000e+00> : vector<48x8xf32>
    %5 = tpu.matmul %4, %2, %cst {dimension_numbers = #tpu.dot_dimension_numbers<[1], [0], [0], [1], [0, 0, 1, 1], [], []>, precision = #tpu.contract_precision<fp32>} : vector<48x16xf32>, vector<16x8xf32>, vector<48x8xf32> -> vector<48x8xf32>
    %6 = vector.shape_cast %5 : vector<48x8xf32> to vector<3x16x8xf32>
    %7 = tpu.transpose %6, [0, 2, 1] : vector<3x16x8xf32> -> vector<3x8x16xf32>
    %8 = vector.shape_cast %7 : vector<3x8x16xf32> to vector<24x16xf32>
    %cst_7 = arith.constant dense<0.000000e+00> : vector<24x8xf32>
    %9 = tpu.matmul %8, %3, %cst_7 {dimension_numbers = #tpu.dot_dimension_numbers<[1], [0], [0], [1], [0, 0, 1, 1], [], []>, precision = #tpu.contract_precision<fp32>} : vector<24x16xf32>, vector<16x8xf32>, vector<24x8xf32> -> vector<24x8xf32>
    %10 = vector.shape_cast %9 : vector<24x8xf32> to vector<3x8x8xf32>
    %11 = tpu.transpose %10, [0, 2, 1] : vector<3x8x8xf32> -> vector<3x8x8xf32>
    %12 = tpu.concatenate %11, %11 in 2 : vector<3x8x8xf32>, vector<3x8x8xf32> -> vector<3x8x16xf32>
    %13 = tpu.concatenate %12, %12 in 1 : vector<3x8x16xf32>, vector<3x8x16xf32> -> vector<3x16x16xf32>
    %14 = arith.subf %1, %13 : vector<3x16x16xf32>
    %15 = math.absf %14 : vector<3x16x16xf32>
    %16 = vector.shape_cast %15 : vector<3x16x16xf32> to vector<1x3x16x16xf32>
    %17 = vector.extract_strided_slice %16 {offsets = [0, 0, 0, 0], sizes = [1, 1, 16, 16], strides = [1, 1, 1, 1]} : vector<1x3x16x16xf32> to vector<1x1x16x16xf32>
    %18 = vector.shape_cast %17 : vector<1x1x16x16xf32> to vector<1x16x16xf32>
    %19 = vector.extract_strided_slice %16 {offsets = [0, 1, 0, 0], sizes = [1, 1, 16, 16], strides = [1, 1, 1, 1]} : vector<1x3x16x16xf32> to vector<1x1x16x16xf32>
    %20 = vector.shape_cast %19 : vector<1x1x16x16xf32> to vector<1x16x16xf32>
    %21 = arith.addf %18, %20 : vector<1x16x16xf32>
    %22 = vector.extract_strided_slice %16 {offsets = [0, 2, 0, 0], sizes = [1, 1, 16, 16], strides = [1, 1, 1, 1]} : vector<1x3x16x16xf32> to vector<1x1x16x16xf32>
    %23 = vector.shape_cast %22 : vector<1x1x16x16xf32> to vector<1x16x16xf32>
    %24 = arith.addf %21, %23 : vector<1x16x16xf32>
    %cst_8 = arith.constant 0.111111112 : f32
    %25 = vector.broadcast %cst_8 : f32 to vector<1x16x16xf32>
    %26 = arith.mulf %24, %25 : vector<1x16x16xf32>
    %c0_9 = arith.constant 0 : index
    %c0_10 = arith.constant 0 : index
    %27 = vector.load %arg4[%c0_9, %c0_10] : memref<8x4xf32, #tpu.memory_space<vmem>>, vector<8x4xf32>
    %c0_11 = arith.constant 0 : index
    %c0_12 = arith.constant 0 : index
    %28 = vector.load %arg5[%c0_11, %c0_12] : memref<8x4xf32, #tpu.memory_space<vmem>>, vector<8x4xf32>
    %29 = vector.shape_cast %11 : vector<3x8x8xf32> to vector<24x8xf32>
    %cst_13 = arith.constant dense<0.000000e+00> : vector<24x4xf32>
    %30 = tpu.matmul %29, %27, %cst_13 {dimension_numbers = #tpu.dot_dimension_numbers<[1], [0], [0], [1], [0, 0, 1, 1], [], []>, precision = #tpu.contract_precision<fp32>} : vector<24x8xf32>, vector<8x4xf32>, vector<24x4xf32> -> vector<24x4xf32>
    %31 = vector.shape_cast %30 : vector<24x4xf32> to vector<3x8x4xf32>
    %32 = tpu.transpose %31, [0, 2, 1] : vector<3x8x4xf32> -> vector<3x4x8xf32>
    %33 = vector.shape_cast %28 : vector<8x4xf32> to vector<1x8x4xf32>
    %34 = vector.shape_cast %33 : vector<1x8x4xf32> to vector<1x8x4xf32>
    %35 = vector.broadcast %34 : vector<1x8x4xf32> to vector<3x8x4xf32>
    %cst_14 = arith.constant dense<0.000000e+00> : vector<3x4x4xf32>
    %36 = tpu.matmul %32, %35, %cst_14 {dimension_numbers = #tpu.dot_dimension_numbers<[2], [1], [1], [2], [0, 0, 0, 1, 1, 2], [0], [0]>, precision = #tpu.contract_precision<fp32>} : vector<3x4x8xf32>, vector<3x8x4xf32>, vector<3x4x4xf32> -> vector<3x4x4xf32>
    %37 = tpu.transpose %36, [0, 2, 1] : vector<3x4x4xf32> -> vector<3x4x4xf32>
    %38 = tpu.concatenate %37, %37 in 2 : vector<3x4x4xf32>, vector<3x4x4xf32> -> vector<3x4x8xf32>
    %39 = tpu.concatenate %38, %38 in 1 : vector<3x4x8xf32>, vector<3x4x8xf32> -> vector<3x8x8xf32>
    %40 = arith.subf %11, %39 : vector<3x8x8xf32>
    %41 = math.absf %40 : vector<3x8x8xf32>
    %42 = vector.shape_cast %41 : vector<3x8x8xf32> to vector<1x3x8x8xf32>
    %43 = vector.extract_strided_slice %42 {offsets = [0, 0, 0, 0], sizes = [1, 1, 8, 8], strides = [1, 1, 1, 1]} : vector<1x3x8x8xf32> to vector<1x1x8x8xf32>
    %44 = vector.shape_cast %43 : vector<1x1x8x8xf32> to vector<1x8x8xf32>
    %45 = vector.extract_strided_slice %42 {offsets = [0, 1, 0, 0], sizes = [1, 1, 8, 8], strides = [1, 1, 1, 1]} : vector<1x3x8x8xf32> to vector<1x1x8x8xf32>
    %46 = vector.shape_cast %45 : vector<1x1x8x8xf32> to vector<1x8x8xf32>
    %47 = arith.addf %44, %46 : vector<1x8x8xf32>
    %48 = vector.extract_strided_slice %42 {offsets = [0, 2, 0, 0], sizes = [1, 1, 8, 8], strides = [1, 1, 1, 1]} : vector<1x3x8x8xf32> to vector<1x1x8x8xf32>
    %49 = vector.shape_cast %48 : vector<1x1x8x8xf32> to vector<1x8x8xf32>
    %50 = arith.addf %47, %49 : vector<1x8x8xf32>
    %c0_15 = arith.constant 0 : index
    %c0_16 = arith.constant 0 : index
    %51 = vector.load %arg6[%c0_15, %c0_16] : memref<8x16xf32, #tpu.memory_space<vmem>>, vector<8x16xf32>
    %c0_17 = arith.constant 0 : index
    %c0_18 = arith.constant 0 : index
    %52 = vector.load %arg7[%c0_17, %c0_18] : memref<8x16xf32, #tpu.memory_space<vmem>>, vector<8x16xf32>
    %53 = vector.shape_cast %50 : vector<1x8x8xf32> to vector<8x8xf32>
    %cst_19 = arith.constant dense<0.000000e+00> : vector<8x16xf32>
    %54 = tpu.matmul %53, %51, %cst_19 {dimension_numbers = #tpu.dot_dimension_numbers<[1], [0], [0], [1], [0, 0, 1, 1], [], []>, precision = #tpu.contract_precision<fp32>} : vector<8x8xf32>, vector<8x16xf32>, vector<8x16xf32> -> vector<8x16xf32>
    %55 = vector.shape_cast %54 : vector<8x16xf32> to vector<1x8x16xf32>
    %56 = tpu.transpose %55, [0, 2, 1] : vector<1x8x16xf32> -> vector<1x16x8xf32>
    %57 = vector.shape_cast %56 : vector<1x16x8xf32> to vector<16x8xf32>
    %cst_20 = arith.constant dense<0.000000e+00> : vector<16x16xf32>
    %58 = tpu.matmul %57, %52, %cst_20 {dimension_numbers = #tpu.dot_dimension_numbers<[1], [0], [0], [1], [0, 0, 1, 1], [], []>, precision = #tpu.contract_precision<fp32>} : vector<16x8xf32>, vector<8x16xf32>, vector<16x16xf32> -> vector<16x16xf32>
    %59 = vector.shape_cast %58 : vector<16x16xf32> to vector<1x16x16xf32>
    %60 = tpu.transpose %59, [0, 2, 1] : vector<1x16x16xf32> -> vector<1x16x16xf32>
    %61 = arith.addf %26, %60 : vector<1x16x16xf32>
    %c0_21 = arith.constant 0 : index
    %c0_22 = arith.constant 0 : index
    %62 = vector.load %arg8[%c0_21, %c0_22] : memref<4x2xf32, #tpu.memory_space<vmem>>, vector<4x2xf32>
    %c0_23 = arith.constant 0 : index
    %c0_24 = arith.constant 0 : index
    %63 = vector.load %arg9[%c0_23, %c0_24] : memref<4x2xf32, #tpu.memory_space<vmem>>, vector<4x2xf32>
    %64 = vector.shape_cast %62 : vector<4x2xf32> to vector<1x4x2xf32>
    %65 = vector.shape_cast %64 : vector<1x4x2xf32> to vector<1x4x2xf32>
    %66 = vector.broadcast %65 : vector<1x4x2xf32> to vector<3x4x2xf32>
    %cst_25 = arith.constant dense<0.000000e+00> : vector<3x4x2xf32>
    %67 = tpu.matmul %37, %66, %cst_25 {dimension_numbers = #tpu.dot_dimension_numbers<[2], [1], [1], [2], [0, 0, 0, 1, 1, 2], [0], [0]>, precision = #tpu.contract_precision<fp32>} : vector<3x4x4xf32>, vector<3x4x2xf32>, vector<3x4x2xf32> -> vector<3x4x2xf32>
    %68 = tpu.transpose %67, [0, 2, 1] : vector<3x4x2xf32> -> vector<3x2x4xf32>
    %69 = vector.shape_cast %63 : vector<4x2xf32> to vector<1x4x2xf32>
    %70 = vector.shape_cast %69 : vector<1x4x2xf32> to vector<1x4x2xf32>
    %71 = vector.broadcast %70 : vector<1x4x2xf32> to vector<3x4x2xf32>
    %cst_26 = arith.constant dense<0.000000e+00> : vector<3x2x2xf32>
    %72 = tpu.matmul %68, %71, %cst_26 {dimension_numbers = #tpu.dot_dimension_numbers<[2], [1], [1], [2], [0, 0, 0, 1, 1, 2], [0], [0]>, precision = #tpu.contract_precision<fp32>} : vector<3x2x4xf32>, vector<3x4x2xf32>, vector<3x2x2xf32> -> vector<3x2x2xf32>
    %73 = tpu.transpose %72, [0, 2, 1] : vector<3x2x2xf32> -> vector<3x2x2xf32>
    %74 = tpu.concatenate %73, %73 in 2 : vector<3x2x2xf32>, vector<3x2x2xf32> -> vector<3x2x4xf32>
    %75 = tpu.concatenate %74, %74 in 1 : vector<3x2x4xf32>, vector<3x2x4xf32> -> vector<3x4x4xf32>
    %76 = arith.subf %37, %75 : vector<3x4x4xf32>
    %77 = math.absf %76 : vector<3x4x4xf32>
    %78 = vector.shape_cast %77 : vector<3x4x4xf32> to vector<1x3x4x4xf32>
    %79 = vector.extract_strided_slice %78 {offsets = [0, 0, 0, 0], sizes = [1, 1, 4, 4], strides = [1, 1, 1, 1]} : vector<1x3x4x4xf32> to vector<1x1x4x4xf32>
    %80 = vector.shape_cast %79 : vector<1x1x4x4xf32> to vector<1x4x4xf32>
    %81 = vector.extract_strided_slice %78 {offsets = [0, 1, 0, 0], sizes = [1, 1, 4, 4], strides = [1, 1, 1, 1]} : vector<1x3x4x4xf32> to vector<1x1x4x4xf32>
    %82 = vector.shape_cast %81 : vector<1x1x4x4xf32> to vector<1x4x4xf32>
    %83 = arith.addf %80, %82 : vector<1x4x4xf32>
    %84 = vector.extract_strided_slice %78 {offsets = [0, 2, 0, 0], sizes = [1, 1, 4, 4], strides = [1, 1, 1, 1]} : vector<1x3x4x4xf32> to vector<1x1x4x4xf32>
    %85 = vector.shape_cast %84 : vector<1x1x4x4xf32> to vector<1x4x4xf32>
    %86 = arith.addf %83, %85 : vector<1x4x4xf32>
    %c0_27 = arith.constant 0 : index
    %c0_28 = arith.constant 0 : index
    %87 = vector.load %arg10[%c0_27, %c0_28] : memref<4x16xf32, #tpu.memory_space<vmem>>, vector<4x16xf32>
    %c0_29 = arith.constant 0 : index
    %c0_30 = arith.constant 0 : index
    %88 = vector.load %arg11[%c0_29, %c0_30] : memref<4x16xf32, #tpu.memory_space<vmem>>, vector<4x16xf32>
    %89 = vector.shape_cast %87 : vector<4x16xf32> to vector<1x4x16xf32>
    %cst_31 = arith.constant dense<0.000000e+00> : vector<1x4x16xf32>
    %90 = tpu.matmul %86, %89, %cst_31 {dimension_numbers = #tpu.dot_dimension_numbers<[2], [1], [1], [2], [0, 0, 0, 1, 1, 2], [0], [0]>, precision = #tpu.contract_precision<fp32>} : vector<1x4x4xf32>, vector<1x4x16xf32>, vector<1x4x16xf32> -> vector<1x4x16xf32>
    %91 = tpu.transpose %90, [0, 2, 1] : vector<1x4x16xf32> -> vector<1x16x4xf32>
    %92 = vector.shape_cast %91 : vector<1x16x4xf32> to vector<16x4xf32>
    %cst_32 = arith.constant dense<0.000000e+00> : vector<16x16xf32>
    %93 = tpu.matmul %92, %88, %cst_32 {dimension_numbers = #tpu.dot_dimension_numbers<[1], [0], [0], [1], [0, 0, 1, 1], [], []>, precision = #tpu.contract_precision<fp32>} : vector<16x4xf32>, vector<4x16xf32>, vector<16x16xf32> -> vector<16x16xf32>
    %94 = vector.shape_cast %93 : vector<16x16xf32> to vector<1x16x16xf32>
    %95 = tpu.transpose %94, [0, 2, 1] : vector<1x16x16xf32> -> vector<1x16x16xf32>
    %96 = arith.addf %61, %95 : vector<1x16x16xf32>
    %cst_33 = arith.constant 0.000000e+00 : f32
    %97 = vector.broadcast %cst_33 : f32 to vector<1x16x16xf32>
    %98 = arith.subf %97, %96 : vector<1x16x16xf32>
    %99 = math.exp %98 : vector<1x16x16xf32>
    %cst_34 = arith.constant 1.000000e+00 : f32
    %100 = vector.broadcast %cst_34 : f32 to vector<1x16x16xf32>
    %101 = arith.addf %100, %99 : vector<1x16x16xf32>
    %cst_35 = arith.constant 1.000000e+00 : f32
    %102 = vector.broadcast %cst_35 : f32 to vector<1x16x16xf32>
    %103 = arith.divf %102, %101 : vector<1x16x16xf32>
    %cst_36 = arith.constant 5.000000e-01 : f32
    %104 = vector.broadcast %cst_36 : f32 to vector<1x16x16xf32>
    %105 = arith.subf %103, %104 : vector<1x16x16xf32>
    %106 = math.absf %105 : vector<1x16x16xf32>
    %cst_37 = arith.constant 1.000000e+02 : f32
    %107 = vector.broadcast %cst_37 : f32 to vector<1x16x16xf32>
    %108 = arith.mulf %106, %107 : vector<1x16x16xf32>
    %cst_38 = arith.constant 1.000000e+00 : f32
    %109 = vector.broadcast %cst_38 : f32 to vector<1x16x16xf32>
    %110 = arith.minimumf %108, %109 : vector<1x16x16xf32>
    %cst_39 = arith.constant 5.000000e-01 : f32
    %111 = vector.broadcast %cst_39 : f32 to vector<1x16x16xf32>
    %112 = arith.mulf %111, %110 : vector<1x16x16xf32>
    %cst_40 = arith.constant 0.000000e+00 : f32
    %113 = vector.broadcast %cst_40 : f32 to vector<1x16x16xf32>
    %114 = arith.subf %113, %112 : vector<1x16x16xf32>
    %115 = math.exp %114 : vector<1x16x16xf32>
    %cst_41 = arith.constant 1.000000e+00 : f32
    %116 = vector.broadcast %cst_41 : f32 to vector<1x16x16xf32>
    %117 = arith.addf %116, %115 : vector<1x16x16xf32>
    %cst_42 = arith.constant 1.000000e+00 : f32
    %118 = vector.broadcast %cst_42 : f32 to vector<1x16x16xf32>
    %119 = arith.divf %118, %117 : vector<1x16x16xf32>
    %cst_43 = arith.constant 1.000000e+00 : f32
    %120 = vector.broadcast %cst_43 : f32 to vector<1x16x16xf32>
    %121 = arith.subf %120, %119 : vector<1x16x16xf32>
    %cst_44 = arith.constant 2.000000e+00 : f32
    %122 = vector.broadcast %cst_44 : f32 to vector<1x16x16xf32>
    %123 = arith.mulf %122, %121 : vector<1x16x16xf32>
    %c0_45 = arith.constant 0 : index
    %c0_46 = arith.constant 0 : index
    %c0_47 = arith.constant 0 : index
    %124 = vector.load %arg12[%c0_45, %c0_46, %c0_47] : memref<1x16x16xf32, #tpu.memory_space<vmem>>, vector<1x16x16xf32>
    tpu.vector_store %arg12[%c0_45, %c0_46, %c0_47], %123 {strides = array<i32>} : memref<1x16x16xf32, #tpu.memory_space<vmem>>, vector<1x16x16xf32>,
    return
  }
  func.func @transform_0(%arg0: i32) -> (i32, i32, i32, i32) {
    %c0_i32 = arith.constant 0 : i32
    %c0_i32_0 = arith.constant 0 : i32
    %c0_i32_1 = arith.constant 0 : i32
    %c0_i32_2 = arith.constant 0 : i32
    return %arg0, %c0_i32, %c0_i32_0, %c0_i32_1 : i32, i32, i32, i32
  }
  func.func @transform_1(%arg0: i32) -> (i32, i32) {
    %c0_i32 = arith.constant 0 : i32
    %c0_i32_0 = arith.constant 0 : i32
    %c0_i32_1 = arith.constant 0 : i32
    return %c0_i32, %c0_i32_0 : i32, i32
  }
  func.func @transform_2(%arg0: i32) -> (i32, i32) {
    %c0_i32 = arith.constant 0 : i32
    %c0_i32_0 = arith.constant 0 : i32
    %c0_i32_1 = arith.constant 0 : i32
    return %c0_i32, %c0_i32_0 : i32, i32
  }
  func.func @transform_3(%arg0: i32) -> (i32, i32) {
    %c0_i32 = arith.constant 0 : i32
    %c0_i32_0 = arith.constant 0 : i32
    %c0_i32_1 = arith.constant 0 : i32
    return %c0_i32, %c0_i32_0 : i32, i32
  }
  func.func @transform_4(%arg0: i32) -> (i32, i32) {
    %c0_i32 = arith.constant 0 : i32
    %c0_i32_0 = arith.constant 0 : i32
    %c0_i32_1 = arith.constant 0 : i32
    return %c0_i32, %c0_i32_0 : i32, i32
  }
  func.func @transform_5(%arg0: i32) -> (i32, i32) {
    %c0_i32 = arith.constant 0 : i32
    %c0_i32_0 = arith.constant 0 : i32
    %c0_i32_1 = arith.constant 0 : i32
    return %c0_i32, %c0_i32_0 : i32, i32
  }
  func.func @transform_6(%arg0: i32) -> (i32, i32) {
    %c0_i32 = arith.constant 0 : i32
    %c0_i32_0 = arith.constant 0 : i32
    %c0_i32_1 = arith.constant 0 : i32
    return %c0_i32, %c0_i32_0 : i32, i32
  }
  func.func @transform_7(%arg0: i32) -> (i32, i32) {
    %c0_i32 = arith.constant 0 : i32
    %c0_i32_0 = arith.constant 0 : i32
    %c0_i32_1 = arith.constant 0 : i32
    return %c0_i32, %c0_i32_0 : i32, i32
  }
  func.func @transform_8(%arg0: i32) -> (i32, i32) {
    %c0_i32 = arith.constant 0 : i32
    %c0_i32_0 = arith.constant 0 : i32
    %c0_i32_1 = arith.constant 0 : i32
    return %c0_i32, %c0_i32_0 : i32, i32
  }
  func.func @transform_9(%arg0: i32) -> (i32, i32) {
    %c0_i32 = arith.constant 0 : i32
    %c0_i32_0 = arith.constant 0 : i32
    %c0_i32_1 = arith.constant 0 : i32
    return %c0_i32, %c0_i32_0 : i32, i32
  }
  func.func @transform_10(%arg0: i32) -> (i32, i32) {
    %c0_i32 = arith.constant 0 : i32
    %c0_i32_0 = arith.constant 0 : i32
    %c0_i32_1 = arith.constant 0 : i32
    return %c0_i32, %c0_i32_0 : i32, i32
  }
  func.func @transform_11(%arg0: i32) -> (i32, i32, i32) {
    %c0_i32 = arith.constant 0 : i32
    %c0_i32_0 = arith.constant 0 : i32
    %c0_i32_1 = arith.constant 0 : i32
    return %arg0, %c0_i32, %c0_i32_0 : i32, i32, i32
  }
}

</mosaic_0001>

<llo_original>
// kernel: tpu_custom_call.1
$region0: #{tpu_custom_call.1}
  #allocation0 [shape = 'u32[]', space=smem, size = 0x4, offset = 0x4, fixed_abs, tag = 'smem constant byte address 0x4 - core index']
  #allocation1 [shape = 'u32[72,128]{1,0:T(1,128)}', space=vmem, size = 0x9000, scoped, tag = 'internal scratch']
  %s0 = inlined_call_operand.hbm [shape: f32[2,3,16,16], index: 0, kind: input, shape index: {}]
  %s1 = inlined_call_operand.vmem [shape: f32[16,8], index: 1, kind: input, shape index: {}]
  %s2 = inlined_call_operand.vmem [shape: f32[16,8], index: 2, kind: input, shape index: {}]
  %s3 = inlined_call_operand.vmem [shape: f32[8,4], index: 3, kind: input, shape index: {}]
  %s4 = inlined_call_operand.vmem [shape: f32[8,4], index: 4, kind: input, shape index: {}]
  %s5 = inlined_call_operand.vmem [shape: f32[8,16], index: 5, kind: input, shape index: {}]
  %s6 = inlined_call_operand.vmem [shape: f32[8,16], index: 6, kind: input, shape index: {}]
  %s7 = inlined_call_operand.vmem [shape: f32[4,2], index: 7, kind: input, shape index: {}]
  %s8 = inlined_call_operand.vmem [shape: f32[4,2], index: 8, kind: input, shape index: {}]
  %s9 = inlined_call_operand.vmem [shape: f32[4,16], index: 9, kind: input, shape index: {}]
  %s10 = inlined_call_operand.vmem [shape: f32[4,16], index: 10, kind: input, shape index: {}]
  %s11 = inlined_call_operand.hbm [shape: f32[2,16,16], index: 11, kind: output, shape index: {}]
  %s12 = sld [smem:[#allocation0]]
  $region81: #{tpu_custom_call.1} parent=0
    _
  %s14 = ssub.s32 1, %s12
  %s15 = scalar_select 0, %s14, %s12
  $region1: #{tpu_custom_call.1} parent=0
    #allocation2 [shape = 'u8[49152]{0}', space=vmem, size = 0xc000, scoped, tag = 'input window, operand 0']
    #allocation3 [shape = 's32[2]{0}', space=sflag, size = 0x8, scoped, tag = 'scoped memory for tpu_custom_call.1']
    #allocation4 [shape = 's32[2]{0}', space=sflag, size = 0x8, scoped, tag = 'scoped memory for tpu_custom_call.1']
    #allocation5 [shape = 'u8[16384]{0}', space=vmem, size = 0x4000, scoped, tag = 'output window, operand 0']
    %16 = vsyncpa [#allocation3], 0
    %s17 = scalar_lea.sflag [#allocation3], 1
    %18 = vsyncpa %s17, 0
    %19 = vsyncpa [#allocation4], 0
    %s20 = scalar_lea.sflag [#allocation4], 1
    %21 = vsyncpa %s20, 0
    loop: start=0, step=1, limit=4
    $region2: #{tpu_custom_call.1} parent=1 // loop_pre_header
      _
    $region3: #{tpu_custom_call.1} parent=1 // loop_header
      %s23 = sphi 0, %s27
      %p24 = scmp.ge.s32.totalorder %s23, 4
      %s33 = sphi 0, %s35
      %s36 = sphi 0, %s33
      %s37 = sphi 0, %s36
      %s53 = sphi 0, %s37
      %s57 = sphi 0, %s57
      %s59 = sphi 0, %s57
      %s60 = sphi 0, %s59
      %s74 = sphi 0, %s60
      %s78 = sphi 0, %s78
      %s80 = sphi 0, %s78
      %s81 = sphi 0, %s80
      %s95 = sphi 0, %s81
      %s99 = sphi 0, %s99
      %s101 = sphi 0, %s99
      %s102 = sphi 0, %s101
      %s116 = sphi 0, %s102
      %s120 = sphi 0, %s120
      %s122 = sphi 0, %s120
      %s123 = sphi 0, %s122
      %s137 = sphi 0, %s123
      %s141 = sphi 0, %s141
      %s143 = sphi 0, %s141
      %s144 = sphi 0, %s143
      %s158 = sphi 0, %s144
      %s162 = sphi 0, %s162
      %s164 = sphi 0, %s162
      %s165 = sphi 0, %s164
      %s179 = sphi 0, %s165
      %s183 = sphi 0, %s183
      %s185 = sphi 0, %s183
      %s186 = sphi 0, %s185
      %s200 = sphi 0, %s186
      %s204 = sphi 0, %s204
      %s206 = sphi 0, %s204
      %s207 = sphi 0, %s206
      %s221 = sphi 0, %s207
      %s225 = sphi 0, %s225
      %s227 = sphi 0, %s225
      %s228 = sphi 0, %s227
      %s242 = sphi 0, %s228
      %s246 = sphi 0, %s246
      %s248 = sphi 0, %s246
      %s249 = sphi 0, %s248
      %s263 = sphi 0, %s249
      %s269 = sphi 0, %s271
      %s272 = sphi 0, %s269
      %s273 = sphi 0, %s272
      %s289 = sphi 0, %s273
    $region4: #{tpu_custom_call.1} parent=1 // loop_header_branch
      %26 = sbr.rel (%p24) target = $region8
    $region5: #{tpu_custom_call.1} parent=1 // loop_body
      %s28 = ssub.s32 %s23, 1
      %s29 = ssub.s32 %s23, 2
      %s30 = sadd.s32 %s23, 1
      %s31 = ssub.s32 %s23, %s30
      %p32 = scmp.eq.s32.totalorder %s31, 0
      %s34 = sadd.s32 %s33, 1
      %s35 = scalar_select %p32, %s33, %s34
      %p38 = pneg %p32
      %p39 = scmp.eq.s32.totalorder %s23, 1
      %p40 = por %p38, %p39
      %p41 = scmp.ne.s32.totalorder %s33, %s36
      %p42 = scmp.eq.s32.totalorder %s23, 0
      %p43 = por %p41, %p42
      %p44 = scmp.ne.s32.totalorder %s33, %s36
      %p45 = scmp.eq.s32.totalorder %s28, 1
      %p46 = por %p44, %p45
      %p47 = scmp.ne.s32.totalorder %s36, %s37
      %p48 = scmp.eq.s32.totalorder %s28, 0
      %p49 = por %p47, %p48
      %p50 = scmp.ne.s32.totalorder %s36, %s37
      %p51 = scmp.eq.s32.totalorder %s29, 1
      %p52 = por %p50, %p51
      %p54 = scmp.ne.s32.totalorder %s37, %s53
      %p55 = scmp.eq.s32.totalorder %s29, 0
      %p56 = por %p54, %p55
      %s58 = sadd.s32 %s57, 1
      %p61 = scmp.eq.s32.totalorder %s23, 1
      %p62 = scmp.ne.s32.totalorder %s57, %s59
      %p63 = scmp.eq.s32.totalorder %s23, 0
      %p64 = por %p62, %p63
      %p65 = scmp.ne.s32.totalorder %s57, %s59
      %p66 = scmp.eq.s32.totalorder %s28, 1
      %p67 = por %p65, %p66
      %p68 = scmp.ne.s32.totalorder %s59, %s60
      %p69 = scmp.eq.s32.totalorder %s28, 0
      %p70 = por %p68, %p69
      %p71 = scmp.ne.s32.totalorder %s59, %s60
      %p72 = scmp.eq.s32.totalorder %s29, 1
      %p73 = por %p71, %p72
      %p75 = scmp.ne.s32.totalorder %s60, %s74
      %p76 = scmp.eq.s32.totalorder %s29, 0
      %p77 = por %p75, %p76
      %s79 = sadd.s32 %s78, 1
      %p82 = scmp.eq.s32.totalorder %s23, 1
      %p83 = scmp.ne.s32.totalorder %s78, %s80
      %p84 = scmp.eq.s32.totalorder %s23, 0
      %p85 = por %p83, %p84
      %p86 = scmp.ne.s32.totalorder %s78, %s80
      %p87 = scmp.eq.s32.totalorder %s28, 1
      %p88 = por %p86, %p87
      %p89 = scmp.ne.s32.totalorder %s80, %s81
      %p90 = scmp.eq.s32.totalorder %s28, 0
      %p91 = por %p89, %p90
      %p92 = scmp.ne.s32.totalorder %s80, %s81
      %p93 = scmp.eq.s32.totalorder %s29, 1
      %p94 = por %p92, %p93
      %p96 = scmp.ne.s32.totalorder %s81, %s95
      %p97 = scmp.eq.s32.totalorder %s29, 0
      %p98 = por %p96, %p97
      %s100 = sadd.s32 %s99, 1
      %p103 = scmp.eq.s32.totalorder %s23, 1
      %p104 = scmp.ne.s32.totalorder %s99, %s101
      %p105 = scmp.eq.s32.totalorder %s23, 0
      %p106 = por %p104, %p105
      %p107 = scmp.ne.s32.totalorder %s99, %s101
      %p108 = scmp.eq.s32.totalorder %s28, 1
      %p109 = por %p107, %p108
      %p110 = scmp.ne.s32.totalorder %s101, %s102
      %p111 = scmp.eq.s32.totalorder %s28, 0
      %p112 = por %p110, %p111
      %p113 = scmp.ne.s32.totalorder %s101, %s102
      %p114 = scmp.eq.s32.totalorder %s29, 1
      %p115 = por %p113, %p114
      %p117 = scmp.ne.s32.totalorder %s102, %s116
      %p118 = scmp.eq.s32.totalorder %s29, 0
      %p119 = por %p117, %p118
      %s121 = sadd.s32 %s120, 1
      %p124 = scmp.eq.s32.totalorder %s23, 1
      %p125 = scmp.ne.s32.totalorder %s120, %s122
      %p126 = scmp.eq.s32.totalorder %s23, 0
      %p127 = por %p125, %p126
      %p128 = scmp.ne.s32.totalorder %s120, %s122
      %p129 = scmp.eq.s32.totalorder %s28, 1
      %p130 = por %p128, %p129
      %p131 = scmp.ne.s32.totalorder %s122, %s123
      %p132 = scmp.eq.s32.totalorder %s28, 0
      %p133 = por %p131, %p132
      %p134 = scmp.ne.s32.totalorder %s122, %s123
      %p135 = scmp.eq.s32.totalorder %s29, 1
      %p136 = por %p134, %p135
      %p138 = scmp.ne.s32.totalorder %s123, %s137
      %p139 = scmp.eq.s32.totalorder %s29, 0
      %p140 = por %p138, %p139
      %s142 = sadd.s32 %s141, 1
      %p145 = scmp.eq.s32.totalorder %s23, 1
      %p146 = scmp.ne.s32.totalorder %s141, %s143
      %p147 = scmp.eq.s32.totalorder %s23, 0
      %p148 = por %p146, %p147
      %p149 = scmp.ne.s32.totalorder %s141, %s143
      %p150 = scmp.eq.s32.totalorder %s28, 1
      %p151 = por %p149, %p150
      %p152 = scmp.ne.s32.totalorder %s143, %s144
      %p153 = scmp.eq.s32.totalorder %s28, 0
      %p154 = por %p152, %p153
      %p155 = scmp.ne.s32.totalorder %s143, %s144
      %p156 = scmp.eq.s32.totalorder %s29, 1
      %p157 = por %p155, %p156
      %p159 = scmp.ne.s32.totalorder %s144, %s158
      %p160 = scmp.eq.s32.totalorder %s29, 0
      %p161 = por %p159, %p160
      %s163 = sadd.s32 %s162, 1
      %p166 = scmp.eq.s32.totalorder %s23, 1
      %p167 = scmp.ne.s32.totalorder %s162, %s164
      %p168 = scmp.eq.s32.totalorder %s23, 0
      %p169 = por %p167, %p168
      %p170 = scmp.ne.s32.totalorder %s162, %s164
      %p171 = scmp.eq.s32.totalorder %s28, 1
      %p172 = por %p170, %p171
      %p173 = scmp.ne.s32.totalorder %s164, %s165
      %p174 = scmp.eq.s32.totalorder %s28, 0
      %p175 = por %p173, %p174
      %p176 = scmp.ne.s32.totalorder %s164, %s165
      %p177 = scmp.eq.s32.totalorder %s29, 1
      %p178 = por %p176, %p177
      %p180 = scmp.ne.s32.totalorder %s165, %s179
      %p181 = scmp.eq.s32.totalorder %s29, 0
      %p182 = por %p180, %p181
      %s184 = sadd.s32 %s183, 1
      %p187 = scmp.eq.s32.totalorder %s23, 1
      %p188 = scmp.ne.s32.totalorder %s183, %s185
      %p189 = scmp.eq.s32.totalorder %s23, 0
      %p190 = por %p188, %p189
      %p191 = scmp.ne.s32.totalorder %s183, %s185
      %p192 = scmp.eq.s32.totalorder %s28, 1
      %p193 = por %p191, %p192
      %p194 = scmp.ne.s32.totalorder %s185, %s186
      %p195 = scmp.eq.s32.totalorder %s28, 0
      %p196 = por %p194, %p195
      %p197 = scmp.ne.s32.totalorder %s185, %s186
      %p198 = scmp.eq.s32.totalorder %s29, 1
      %p199 = por %p197, %p198
      %p201 = scmp.ne.s32.totalorder %s186, %s200
      %p202 = scmp.eq.s32.totalorder %s29, 0
      %p203 = por %p201, %p202
      %s205 = sadd.s32 %s204, 1
      %p208 = scmp.eq.s32.totalorder %s23, 1
      %p209 = scmp.ne.s32.totalorder %s204, %s206
      %p210 = scmp.eq.s32.totalorder %s23, 0
      %p211 = por %p209, %p210
      %p212 = scmp.ne.s32.totalorder %s204, %s206
      %p213 = scmp.eq.s32.totalorder %s28, 1
      %p214 = por %p212, %p213
      %p215 = scmp.ne.s32.totalorder %s206, %s207
      %p216 = scmp.eq.s32.totalorder %s28, 0
      %p217 = por %p215, %p216
      %p218 = scmp.ne.s32.totalorder %s206, %s207
      %p219 = scmp.eq.s32.totalorder %s29, 1
      %p220 = por %p218, %p219
      %p222 = scmp.ne.s32.totalorder %s207, %s221
      %p223 = scmp.eq.s32.totalorder %s29, 0
      %p224 = por %p222, %p223
      %s226 = sadd.s32 %s225, 1
      %p229 = scmp.eq.s32.totalorder %s23, 1
      %p230 = scmp.ne.s32.totalorder %s225, %s227
      %p231 = scmp.eq.s32.totalorder %s23, 0
      %p232 = por %p230, %p231
      %p233 = scmp.ne.s32.totalorder %s225, %s227
      %p234 = scmp.eq.s32.totalorder %s28, 1
      %p235 = por %p233, %p234
      %p236 = scmp.ne.s32.totalorder %s227, %s228
      %p237 = scmp.eq.s32.totalorder %s28, 0
      %p238 = por %p236, %p237
      %p239 = scmp.ne.s32.totalorder %s227, %s228
      %p240 = scmp.eq.s32.totalorder %s29, 1
      %p241 = por %p239, %p240
      %p243 = scmp.ne.s32.totalorder %s228, %s242
      %p244 = scmp.eq.s32.totalorder %s29, 0
      %p245 = por %p243, %p244
      %s247 = sadd.s32 %s246, 1
      %p250 = scmp.eq.s32.totalorder %s23, 1
      %p251 = scmp.ne.s32.totalorder %s246, %s248
      %p252 = scmp.eq.s32.totalorder %s23, 0
      %p253 = por %p251, %p252
      %p254 = scmp.ne.s32.totalorder %s246, %s248
      %p255 = scmp.eq.s32.totalorder %s28, 1
      %p256 = por %p254, %p255
      %p257 = scmp.ne.s32.totalorder %s248, %s249
      %p258 = scmp.eq.s32.totalorder %s28, 0
      %p259 = por %p257, %p258
      %p260 = scmp.ne.s32.totalorder %s248, %s249
      %p261 = scmp.eq.s32.totalorder %s29, 1
      %p262 = por %p260, %p261
      %p264 = scmp.ne.s32.totalorder %s249, %s263
      %p265 = scmp.eq.s32.totalorder %s29, 0
      %p266 = por %p264, %p265
      %s267 = ssub.s32 %s23, %s30
      %p268 = scmp.eq.s32.totalorder %s267, 0
      %s270 = sadd.s32 %s269, 1
      %s271 = scalar_select %p268, %s269, %s270
      %p274 = pneg %p268
      %p275 = scmp.eq.s32.totalorder %s23, 1
      %p276 = por %p274, %p275
      %p277 = scmp.ne.s32.totalorder %s269, %s272
      %p278 = scmp.eq.s32.totalorder %s23, 0
      %p279 = por %p277, %p278
      %p280 = scmp.ne.s32.totalorder %s269, %s272
      %p281 = scmp.eq.s32.totalorder %s28, 1
      %p282 = por %p280, %p281
      %p283 = scmp.ne.s32.totalorder %s272, %s273
      %p284 = scmp.eq.s32.totalorder %s28, 0
      %p285 = por %p283, %p284
      %p286 = scmp.ne.s32.totalorder %s272, %s273
      %p287 = scmp.eq.s32.totalorder %s29, 1
      %p288 = por %p286, %p287
      %p290 = scmp.ne.s32.totalorder %s273, %s289
      %p291 = scmp.eq.s32.totalorder %s29, 0
      %p292 = por %p290, %p291
      %p293 = scmp.le.s32.totalorder 1, %s23
      %p294 = scmp.lt.s32.totalorder %s23, 3
      %p295 = pnand %p293, %p294
      %p296 = pneg %p295
      // Predicated region
      $region9: #{tpu_custom_call.1} parent=5 // pred_check
        _
      $region10: #{tpu_custom_call.1} parent=5 // pred_check_branch
        %298 = sbr.rel (%p295) target = $region12
      $region11: #{tpu_custom_call.1} parent=5 // pred_region
        %s299 = ssub.s32 %s23, 1
        // Predicated region
        $region13: #{tpu_custom_call.1} parent=11 // pred_check
          %p300 = pneg %p70
        $region14: #{tpu_custom_call.1} parent=11 // pred_check_branch
          %302 = sbr.rel (%p300) target = $region16
        $region15: #{tpu_custom_call.1} parent=11 // pred_region
          _
        $region16: #{tpu_custom_call.1} parent=11 // pred_fallthru
          _
        // Predicated region
        $region17: #{tpu_custom_call.1} parent=11 // pred_check
          %p303 = pneg %p91
        $region18: #{tpu_custom_call.1} parent=11 // pred_check_branch
          %305 = sbr.rel (%p303) target = $region20
        $region19: #{tpu_custom_call.1} parent=11 // pred_region
          _
        $region20: #{tpu_custom_call.1} parent=11 // pred_fallthru
          _
        // Predicated region
        $region21: #{tpu_custom_call.1} parent=11 // pred_check
          %p306 = pneg %p112
        $region22: #{tpu_custom_call.1} parent=11 // pred_check_branch
          %308 = sbr.rel (%p306) target = $region24
        $region23: #{tpu_custom_call.1} parent=11 // pred_region
          _
        $region24: #{tpu_custom_call.1} parent=11 // pred_fallthru
          _
        // Predicated region
        $region25: #{tpu_custom_call.1} parent=11 // pred_check
          %p309 = pneg %p133
        $region26: #{tpu_custom_call.1} parent=11 // pred_check_branch
          %311 = sbr.rel (%p309) target = $region28
        $region27: #{tpu_custom_call.1} parent=11 // pred_region
          _
        $region28: #{tpu_custom_call.1} parent=11 // pred_fallthru
          _
        // Predicated region
        $region29: #{tpu_custom_call.1} parent=11 // pred_check
          %p312 = pneg %p154
        $region30: #{tpu_custom_call.1} parent=11 // pred_check_branch
          %314 = sbr.rel (%p312) target = $region32
        $region31: #{tpu_custom_call.1} parent=11 // pred_region
          _
        $region32: #{tpu_custom_call.1} parent=11 // pred_fallthru
          _
        // Predicated region
        $region33: #{tpu_custom_call.1} parent=11 // pred_check
          %p315 = pneg %p175
        $region34: #{tpu_custom_call.1} parent=11 // pred_check_branch
          %317 = sbr.rel (%p315) target = $region36
        $region35: #{tpu_custom_call.1} parent=11 // pred_region
          _
        $region36: #{tpu_custom_call.1} parent=11 // pred_fallthru
          _
        // Predicated region
        $region37: #{tpu_custom_call.1} parent=11 // pred_check
          %p318 = pneg %p196
        $region38: #{tpu_custom_call.1} parent=11 // pred_check_branch
          %320 = sbr.rel (%p318) target = $region40
        $region39: #{tpu_custom_call.1} parent=11 // pred_region
          _
        $region40: #{tpu_custom_call.1} parent=11 // pred_fallthru
          _
        // Predicated region
        $region41: #{tpu_custom_call.1} parent=11 // pred_check
          %p321 = pneg %p217
        $region42: #{tpu_custom_call.1} parent=11 // pred_check_branch
          %323 = sbr.rel (%p321) target = $region44
        $region43: #{tpu_custom_call.1} parent=11 // pred_region
          _
        $region44: #{tpu_custom_call.1} parent=11 // pred_fallthru
          _
        // Predicated region
        $region45: #{tpu_custom_call.1} parent=11 // pred_check
          %p324 = pneg %p238
        $region46: #{tpu_custom_call.1} parent=11 // pred_check_branch
          %326 = sbr.rel (%p324) target = $region48
        $region47: #{tpu_custom_call.1} parent=11 // pred_region
          _
        $region48: #{tpu_custom_call.1} parent=11 // pred_fallthru
          _
        // Predicated region
        $region49: #{tpu_custom_call.1} parent=11 // pred_check
          %p327 = pneg %p259
        $region50: #{tpu_custom_call.1} parent=11 // pred_check_branch
          %329 = sbr.rel (%p327) target = $region52
        $region51: #{tpu_custom_call.1} parent=11 // pred_region
          _
        $region52: #{tpu_custom_call.1} parent=11 // pred_fallthru
          _
      $region12: #{tpu_custom_call.1} parent=5 // pred_fallthru
        _
      %p330 = scmp.lt.s32.totalorder %s23, 2
      // Predicated region
      $region53: #{tpu_custom_call.1} parent=5 // pred_check
        %p331 = pneg %p330
      $region54: #{tpu_custom_call.1} parent=5 // pred_check_branch
        %333 = sbr.rel (%p331) target = $region56
      $region55: #{tpu_custom_call.1} parent=5 // pred_region
        // Predicated region
        $region57: #{tpu_custom_call.1} parent=55 // pred_check
          %p334 = pneg %p43
        $region58: #{tpu_custom_call.1} parent=55 // pred_check_branch
          %336 = sbr.rel (%p334) target = $region60
        $region59: #{tpu_custom_call.1} parent=55 // pred_region
          %s337 = sand.u32 %s33, 1
          %s338 = scalar_lea.sflag [#allocation3], %s337
          %s339 = sand.u32 %s33, 1
          %s340 = smul.addr %s339, 48
          %s341 = scalar_lea.vmem [#allocation2], %s340
          %343 = vsyncadd %s338, 0
          %s344 = smul.addr %s23, 6
          %s345 = smul.addr %s344, 8
          %s346 = scalar_lea.hbm %s0, %s345
          %s347 = sshll.u32 %s346, 4
          %s348 = int_to_ptr.hbm [resolvable:$true] %s347
          %s349 = sshll.u32 %s341, 4
          %s350 = int_to_ptr.vmem [resolvable:$true] %s349
          %355 = dma.hbm_to_vmem [thread:$0]  %s348, 768, %s350, %s338, 128, 128, 8
        $region60: #{tpu_custom_call.1} parent=55 // pred_fallthru
          _
      $region56: #{tpu_custom_call.1} parent=5 // pred_fallthru
        _
      %p356 = scmp.le.s32.totalorder 1, %s23
      %p357 = scmp.lt.s32.totalorder %s23, 3
      %p358 = pnand %p356, %p357
      %p359 = pneg %p358
      // Predicated region
      $region61: #{tpu_custom_call.1} parent=5 // pred_check
        _
      $region62: #{tpu_custom_call.1} parent=5 // pred_check_branch
        %361 = sbr.rel (%p358) target = $region64
      $region63: #{tpu_custom_call.1} parent=5 // pred_region
        %s362 = ssub.s32 %s23, 1
        %s363 = sand.u32 %s36, 1
        %s364 = scalar_lea.sflag [#allocation3], %s363
        %s365 = sand.u32 %s36, 1
        %s366 = smul.addr %s365, 48
        %s367 = scalar_lea.vmem [#allocation2], %s366
        // Predicated region
        $region65: #{tpu_custom_call.1} parent=63 // pred_check
          %p368 = pneg %p49
        $region66: #{tpu_custom_call.1} parent=63 // pred_check_branch
          %370 = sbr.rel (%p368) target = $region68
        $region67: #{tpu_custom_call.1} parent=63 // pred_region
          %372 = dma.done %s364, 768
        $region68: #{tpu_custom_call.1} parent=63 // pred_fallthru
          _
        %s373 = sand.u32 %s36, 1
        %s374 = scalar_lea.sflag [#allocation3], %s373
        %s375 = sand.u32 %s36, 1
        %s376 = smul.addr %s375, 48
        %s377 = scalar_lea.vmem [#allocation2], %s376
        %p378 = pneg %p49
        %p379 = pneg %p46
        %p380 = pneg %p70
        %p381 = pneg %p67
        %p382 = pneg %p91
        %p383 = pneg %p88
        %p384 = pneg %p112
        %p385 = pneg %p109
        %p386 = pneg %p133
        %p387 = pneg %p130
        %p388 = pneg %p154
        %p389 = pneg %p151
        %p390 = pneg %p175
        %p391 = pneg %p172
        %p392 = pneg %p196
        %p393 = pneg %p193
        %p394 = pneg %p217
        %p395 = pneg %p214
        %p396 = pneg %p238
        %p397 = pneg %p235
        %p398 = pneg %p259
        %p399 = pneg %p256
        %p400 = pneg %p285
        %p401 = pneg %p282
        %s402 = sand.u32 %s272, 1
        %s403 = scalar_lea.sflag [#allocation4], %s402
        %s404 = sand.u32 %s272, 1
        %s405 = smul.addr %s404, 16
        %s406 = scalar_lea.vmem [#allocation5], %s405
        %v407 = vld [vmem:[%s367] sm:$0xff]
        %v408 = vld [vmem:[%s367 + $0x8] sm:$0xff]
        %v409 = vld [vmem:[%s367 + $0x10] sm:$0xff]
        %v410 = vld [vmem:[%s367 + $0x18] sm:$0xff]
        %v411 = vld [vmem:[%s367 + $0x20] sm:$0xff]
        %v412 = vld [vmem:[%s367 + $0x28] sm:$0xff]
        %v413 = vld [vmem:[%s1] sm:$0xff]
        %v414 = vld [vmem:[%s1 + $0x8] sm:$0xff]
        %v415 = vld [vmem:[%s2] sm:$0xff]
        %v416 = vld [vmem:[%s2 + $0x8] sm:$0xff]
        %vm417 = vcmask 130048
        %v419 = vsel %vm417, %v407, 0
        %v422 = vsel %vm417, %v408, 0
        %v425 = vsel %vm417, %v409, 0
        %v428 = vsel %vm417, %v410, 0
        %v431 = vsel %vm417, %v411, 0
        %v434 = vsel %vm417, %v412, 0
        %436 = vmatpush.msra.mxu0 0.0
        %437 = vmatpush.msra.mxu0 0.0
        %438 = vmatpush.msra.mxu0 0.0
        %439 = vmatpush.msra.mxu0 0.0
        %440 = vmatpush.msra.mxu0 0.0
        %441 = vmatpush.msra.mxu0 0.0
        %442 = vmatpush.msra.mxu0 0.0
        %443 = vmatpush.msra.mxu0 0.0
        %444 = vmatpush.msra.mxu0 0.0
        %445 = vmatpush.msra.mxu0 0.0
        %446 = vmatpush.msra.mxu0 0.0
        %447 = vmatpush.msra.mxu0 0.0
        %448 = vmatpush.msra.mxu0 0.0
        %449 = vmatpush.msra.mxu0 0.0
        %v450 = vand.u32 %v414, 4294901760
        %451 = vmatpush.msra.mxu0 %v450
        %v452 = vand.u32 %v413, 4294901760
        %453 = vmatpush.msra.mxu0 %v452
        %v454 = vand.u32 %v419, 4294901760
        %v455 = vsub.f32 %v419, %v454
        %v456 = vand.u32 %v455, 4294901760
        %v457 = vsub.f32 %v455, %v456
        %v458 = vand.u32 %v457, 4294901760
        %459 = vmatmul.f32.gmra.mxu0 %v458
        %v460 = vpop.f32.mrf.mxu0
        %v461 = vadd.f32 0.0, %v460
        %v462 = vand.u32 %v422, 4294901760
        %v463 = vsub.f32 %v422, %v462
        %v464 = vand.u32 %v463, 4294901760
        %v465 = vsub.f32 %v463, %v464
        %v466 = vand.u32 %v465, 4294901760
        %467 = vmatmul.f32.gmra.mxu0 %v466
        %v468 = vpop.f32.mrf.mxu0
        %v469 = vadd.f32 0.0, %v468
        %v470 = vand.u32 %v425, 4294901760
        %v471 = vsub.f32 %v425, %v470
        %v472 = vand.u32 %v471, 4294901760
        %v473 = vsub.f32 %v471, %v472
        %v474 = vand.u32 %v473, 4294901760
        %475 = vmatmul.f32.gmra.mxu0 %v474
        %v476 = vpop.f32.mrf.mxu0
        %v477 = vadd.f32 0.0, %v476
        %v478 = vand.u32 %v428, 4294901760
        %v479 = vsub.f32 %v428, %v478
        %v480 = vand.u32 %v479, 4294901760
        %v481 = vsub.f32 %v479, %v480
        %v482 = vand.u32 %v481, 4294901760
        %483 = vmatmul.f32.gmra.mxu0 %v482
        %v484 = vpop.f32.mrf.mxu0
        %v485 = vadd.f32 0.0, %v484
        %v486 = vand.u32 %v431, 4294901760
        %v487 = vsub.f32 %v431, %v486
        %v488 = vand.u32 %v487, 4294901760
        %v489 = vsub.f32 %v487, %v488
        %v490 = vand.u32 %v489, 4294901760
        %491 = vmatmul.f32.gmra.mxu0 %v490
        %v492 = vpop.f32.mrf.mxu0
        %v493 = vadd.f32 0.0, %v492
        %v494 = vand.u32 %v434, 4294901760
        %v495 = vsub.f32 %v434, %v494
        %v496 = vand.u32 %v495, 4294901760
        %v497 = vsub.f32 %v495, %v496
        %v498 = vand.u32 %v497, 4294901760
        %499 = vmatmul.f32.gmra.mxu0 %v498
        %v500 = vpop.f32.mrf.mxu0
        %v501 = vadd.f32 0.0, %v500
        %502 = vdwg.mxu0
        %503 = vmatpush.msra.mxu0 0.0
        %504 = vmatpush.msra.mxu0 0.0
        %505 = vmatpush.msra.mxu0 0.0
        %506 = vmatpush.msra.mxu0 0.0
        %507 = vmatpush.msra.mxu0 0.0
        %508 = vmatpush.msra.mxu0 0.0
        %509 = vmatpush.msra.mxu0 0.0
        %510 = vmatpush.msra.mxu0 0.0
        %511 = vmatpush.msra.mxu0 0.0
        %512 = vmatpush.msra.mxu0 0.0
        %513 = vmatpush.msra.mxu0 0.0
        %514 = vmatpush.msra.mxu0 0.0
        %515 = vmatpush.msra.mxu0 0.0
        %516 = vmatpush.msra.mxu0 0.0
        %v517 = vand.u32 %v414, 4294901760
        %v518 = vsub.f32 %v414, %v517
        %v519 = vand.u32 %v518, 4294901760
        %v520 = vsub.f32 %v518, %v519
        %v521 = vand.u32 %v520, 4294901760
        %522 = vmatpush.msra.mxu0 %v521
        %v523 = vand.u32 %v413, 4294901760
        %v524 = vsub.f32 %v413, %v523
        %v525 = vand.u32 %v524, 4294901760
        %v526 = vsub.f32 %v524, %v525
        %v527 = vand.u32 %v526, 4294901760
        %528 = vmatpush.msra.mxu0 %v527
        %v529 = vand.u32 %v419, 4294901760
        %530 = vmatmul.f32.gmra.mxu0 %v529
        %v531 = vpop.f32.mrf.mxu0
        %v532 = vadd.f32 %v461, %v531
        %v533 = vand.u32 %v422, 4294901760
        %534 = vmatmul.f32.gmra.mxu0 %v533
        %v535 = vpop.f32.mrf.mxu0
        %v536 = vadd.f32 %v469, %v535
        %v537 = vand.u32 %v425, 4294901760
        %538 = vmatmul.f32.gmra.mxu0 %v537
        %v539 = vpop.f32.mrf.mxu0
        %v540 = vadd.f32 %v477, %v539
        %v541 = vand.u32 %v428, 4294901760
        %542 = vmatmul.f32.gmra.mxu0 %v541
        %v543 = vpop.f32.mrf.mxu0
        %v544 = vadd.f32 %v485, %v543
        %v545 = vand.u32 %v431, 4294901760
        %546 = vmatmul.f32.gmra.mxu0 %v545
        %v547 = vpop.f32.mrf.mxu0
        %v548 = vadd.f32 %v493, %v547
        %v549 = vand.u32 %v434, 4294901760
        %550 = vmatmul.f32.gmra.mxu0 %v549
        %v551 = vpop.f32.mrf.mxu0
        %v552 = vadd.f32 %v501, %v551
        %553 = vdwg.mxu0
        %554 = vmatpush.msra.mxu0 0.0
        %555 = vmatpush.msra.mxu0 0.0
        %556 = vmatpush.msra.mxu0 0.0
        %557 = vmatpush.msra.mxu0 0.0
        %558 = vmatpush.msra.mxu0 0.0
        %559 = vmatpush.msra.mxu0 0.0
        %560 = vmatpush.msra.mxu0 0.0
        %561 = vmatpush.msra.mxu0 0.0
        %562 = vmatpush.msra.mxu0 0.0
        %563 = vmatpush.msra.mxu0 0.0
        %564 = vmatpush.msra.mxu0 0.0
        %565 = vmatpush.msra.mxu0 0.0
        %566 = vmatpush.msra.mxu0 0.0
        %567 = vmatpush.msra.mxu0 0.0
        %v568 = vand.u32 %v414, 4294901760
        %v569 = vsub.f32 %v414, %v568
        %570 = vmatpush.msra.mxu0 %v569
        %v571 = vand.u32 %v413, 4294901760
        %v572 = vsub.f32 %v413, %v571
        %573 = vmatpush.msra.mxu0 %v572
        %v574 = vand.u32 %v419, 4294901760
        %v575 = vsub.f32 %v419, %v574
        %576 = vmatmul.f32.gmra.mxu0 %v575
        %v577 = vpop.f32.mrf.mxu0
        %v578 = vadd.f32 %v532, %v577
        %v579 = vand.u32 %v422, 4294901760
        %v580 = vsub.f32 %v422, %v579
        %581 = vmatmul.f32.gmra.mxu0 %v580
        %v582 = vpop.f32.mrf.mxu0
        %v583 = vadd.f32 %v536, %v582
        %v584 = vand.u32 %v425, 4294901760
        %v585 = vsub.f32 %v425, %v584
        %586 = vmatmul.f32.gmra.mxu0 %v585
        %v587 = vpop.f32.mrf.mxu0
        %v588 = vadd.f32 %v540, %v587
        %v589 = vand.u32 %v428, 4294901760
        %v590 = vsub.f32 %v428, %v589
        %591 = vmatmul.f32.gmra.mxu0 %v590
        %v592 = vpop.f32.mrf.mxu0
        %v593 = vadd.f32 %v544, %v592
        %v594 = vand.u32 %v431, 4294901760
        %v595 = vsub.f32 %v431, %v594
        %596 = vmatmul.f32.gmra.mxu0 %v595
        %v597 = vpop.f32.mrf.mxu0
        %v598 = vadd.f32 %v548, %v597
        %v599 = vand.u32 %v434, 4294901760
        %v600 = vsub.f32 %v434, %v599
        %601 = vmatmul.f32.gmra.mxu0 %v600
        %v602 = vpop.f32.mrf.mxu0
        %v603 = vadd.f32 %v552, %v602
        %604 = vdwg.mxu0
        %605 = vmatpush.msra.mxu0 0.0
        %606 = vmatpush.msra.mxu0 0.0
        %607 = vmatpush.msra.mxu0 0.0
        %608 = vmatpush.msra.mxu0 0.0
        %609 = vmatpush.msra.mxu0 0.0
        %610 = vmatpush.msra.mxu0 0.0
        %611 = vmatpush.msra.mxu0 0.0
        %612 = vmatpush.msra.mxu0 0.0
        %613 = vmatpush.msra.mxu0 0.0
        %614 = vmatpush.msra.mxu0 0.0
        %615 = vmatpush.msra.mxu0 0.0
        %616 = vmatpush.msra.mxu0 0.0
        %617 = vmatpush.msra.mxu0 0.0
        %618 = vmatpush.msra.mxu0 0.0
        %v619 = vand.u32 %v414, 4294901760
        %620 = vmatpush.msra.mxu0 %v619
        %v621 = vand.u32 %v413, 4294901760
        %622 = vmatpush.msra.mxu0 %v621
        %v623 = vand.u32 %v419, 4294901760
        %v624 = vsub.f32 %v419, %v623
        %v625 = vand.u32 %v624, 4294901760
        %626 = vmatmul.f32.gmra.mxu0 %v625
        %v627 = vpop.f32.mrf.mxu0
        %v628 = vadd.f32 %v578, %v627
        %v629 = vand.u32 %v422, 4294901760
        %v630 = vsub.f32 %v422, %v629
        %v631 = vand.u32 %v630, 4294901760
        %632 = vmatmul.f32.gmra.mxu0 %v631
        %v633 = vpop.f32.mrf.mxu0
        %v634 = vadd.f32 %v583, %v633
        %v635 = vand.u32 %v425, 4294901760
        %v636 = vsub.f32 %v425, %v635
        %v637 = vand.u32 %v636, 4294901760
        %638 = vmatmul.f32.gmra.mxu0 %v637
        %v639 = vpop.f32.mrf.mxu0
        %v640 = vadd.f32 %v588, %v639
        %v641 = vand.u32 %v428, 4294901760
        %v642 = vsub.f32 %v428, %v641
        %v643 = vand.u32 %v642, 4294901760
        %644 = vmatmul.f32.gmra.mxu0 %v643
        %v645 = vpop.f32.mrf.mxu0
        %v646 = vadd.f32 %v593, %v645
        %v647 = vand.u32 %v431, 4294901760
        %v648 = vsub.f32 %v431, %v647
        %v649 = vand.u32 %v648, 4294901760
        %650 = vmatmul.f32.gmra.mxu0 %v649
        %v651 = vpop.f32.mrf.mxu0
        %v652 = vadd.f32 %v598, %v651
        %v653 = vand.u32 %v434, 4294901760
        %v654 = vsub.f32 %v434, %v653
        %v655 = vand.u32 %v654, 4294901760
        %656 = vmatmul.f32.gmra.mxu0 %v655
        %v657 = vpop.f32.mrf.mxu0
        %v658 = vadd.f32 %v603, %v657
        %659 = vdwg.mxu0
        %660 = vmatpush.msra.mxu0 0.0
        %661 = vmatpush.msra.mxu0 0.0
        %662 = vmatpush.msra.mxu0 0.0
        %663 = vmatpush.msra.mxu0 0.0
        %664 = vmatpush.msra.mxu0 0.0
        %665 = vmatpush.msra.mxu0 0.0
        %666 = vmatpush.msra.mxu0 0.0
        %667 = vmatpush.msra.mxu0 0.0
        %668 = vmatpush.msra.mxu0 0.0
        %669 = vmatpush.msra.mxu0 0.0
        %670 = vmatpush.msra.mxu0 0.0
        %671 = vmatpush.msra.mxu0 0.0
        %672 = vmatpush.msra.mxu0 0.0
        %673 = vmatpush.msra.mxu0 0.0
        %v674 = vand.u32 %v414, 4294901760
        %v675 = vsub.f32 %v414, %v674
        %v676 = vand.u32 %v675, 4294901760
        %677 = vmatpush.msra.mxu0 %v676
        %v678 = vand.u32 %v413, 4294901760
        %v679 = vsub.f32 %v413, %v678
        %v680 = vand.u32 %v679, 4294901760
        %681 = vmatpush.msra.mxu0 %v680
        %v682 = vand.u32 %v419, 4294901760
        %683 = vmatmul.f32.gmra.mxu0 %v682
        %v684 = vpop.f32.mrf.mxu0
        %v685 = vadd.f32 %v628, %v684
        %v686 = vand.u32 %v422, 4294901760
        %687 = vmatmul.f32.gmra.mxu0 %v686
        %v688 = vpop.f32.mrf.mxu0
        %v689 = vadd.f32 %v634, %v688
        %v690 = vand.u32 %v425, 4294901760
        %691 = vmatmul.f32.gmra.mxu0 %v690
        %v692 = vpop.f32.mrf.mxu0
        %v693 = vadd.f32 %v640, %v692
        %v694 = vand.u32 %v428, 4294901760
        %695 = vmatmul.f32.gmra.mxu0 %v694
        %v696 = vpop.f32.mrf.mxu0
        %v697 = vadd.f32 %v646, %v696
        %v698 = vand.u32 %v431, 4294901760
        %699 = vmatmul.f32.gmra.mxu0 %v698
        %v700 = vpop.f32.mrf.mxu0
        %v701 = vadd.f32 %v652, %v700
        %v702 = vand.u32 %v434, 4294901760
        %703 = vmatmul.f32.gmra.mxu0 %v702
        %v704 = vpop.f32.mrf.mxu0
        %v705 = vadd.f32 %v658, %v704
        %706 = vdwg.mxu0
        %707 = vmatpush.msra.mxu0 0.0
        %708 = vmatpush.msra.mxu0 0.0
        %709 = vmatpush.msra.mxu0 0.0
        %710 = vmatpush.msra.mxu0 0.0
        %711 = vmatpush.msra.mxu0 0.0
        %712 = vmatpush.msra.mxu0 0.0
        %713 = vmatpush.msra.mxu0 0.0
        %714 = vmatpush.msra.mxu0 0.0
        %715 = vmatpush.msra.mxu0 0.0
        %716 = vmatpush.msra.mxu0 0.0
        %717 = vmatpush.msra.mxu0 0.0
        %718 = vmatpush.msra.mxu0 0.0
        %719 = vmatpush.msra.mxu0 0.0
        %720 = vmatpush.msra.mxu0 0.0
        %v721 = vand.u32 %v414, 4294901760
        %722 = vmatpush.msra.mxu0 %v721
        %v723 = vand.u32 %v413, 4294901760
        %724 = vmatpush.msra.mxu0 %v723
        %v725 = vand.u32 %v419, 4294901760
        %726 = vmatmul.f32.gmra.mxu0 %v725
        %v727 = vpop.f32.mrf.mxu0
        %v728 = vadd.f32 %v685, %v727
        %v729 = vand.u32 %v422, 4294901760
        %730 = vmatmul.f32.gmra.mxu0 %v729
        %v731 = vpop.f32.mrf.mxu0
        %v732 = vadd.f32 %v689, %v731
        %v733 = vand.u32 %v425, 4294901760
        %734 = vmatmul.f32.gmra.mxu0 %v733
        %v735 = vpop.f32.mrf.mxu0
        %v736 = vadd.f32 %v693, %v735
        %v737 = vand.u32 %v428, 4294901760
        %738 = vmatmul.f32.gmra.mxu0 %v737
        %v739 = vpop.f32.mrf.mxu0
        %v740 = vadd.f32 %v697, %v739
        %v741 = vand.u32 %v431, 4294901760
        %742 = vmatmul.f32.gmra.mxu0 %v741
        %v743 = vpop.f32.mrf.mxu0
        %v744 = vadd.f32 %v701, %v743
        %v745 = vand.u32 %v434, 4294901760
        %746 = vmatmul.f32.gmra.mxu0 %v745
        %v747 = vpop.f32.mrf.mxu0
        %v748 = vadd.f32 %v705, %v747
        %749 = vdwg.mxu0
        %750 = vxpose.xlu0.b32.start [1/16] %v728, 128
        %751 = vxpose.xlu0.b32.cont [2/16] %v732, 128
        %752 = vxpose.xlu0.b32.cont [3/16] 0.0, 128
        %753 = vxpose.xlu0.b32.cont [4/16] 0.0, 128
        %754 = vxpose.xlu0.b32.cont [5/16] 0.0, 128
        %755 = vxpose.xlu0.b32.cont [6/16] 0.0, 128
        %756 = vxpose.xlu0.b32.cont [7/16] 0.0, 128
        %757 = vxpose.xlu0.b32.cont [8/16] 0.0, 128
        %758 = vxpose.xlu0.b32.cont [9/16] 0.0, 128
        %759 = vxpose.xlu0.b32.cont [10/16] 0.0, 128
        %760 = vxpose.xlu0.b32.cont [11/16] 0.0, 128
        %761 = vxpose.xlu0.b32.cont [12/16] 0.0, 128
        %762 = vxpose.xlu0.b32.cont [13/16] 0.0, 128
        %763 = vxpose.xlu0.b32.cont [14/16] 0.0, 128
        %764 = vxpose.xlu0.b32.cont [15/16] 0.0, 128
        %765 = vxpose.xlu0.b32.end [16/16] 0.0, 128
        %v766 = vpop.trf.xlu0
        %v767 = vpop.trf.xlu0
        %v768 = vpop.trf.xlu0
        %v769 = vpop.trf.xlu0
        %v770 = vpop.trf.xlu0
        %v771 = vpop.trf.xlu0
        %v772 = vpop.trf.xlu0
        %v773 = vpop.trf.xlu0
        %v774 = vpop.trf.xlu0
        %v775 = vpop.trf.xlu0
        %v776 = vpop.trf.xlu0
        %v777 = vpop.trf.xlu0
        %v778 = vpop.trf.xlu0
        %v779 = vpop.trf.xlu0
        %v780 = vpop.trf.xlu0
        %v781 = vpop.trf.xlu0
        %782 = vxpose.xlu0.b32.start [1/16] %v736, 128
        %783 = vxpose.xlu0.b32.cont [2/16] %v740, 128
        %784 = vxpose.xlu0.b32.cont [3/16] 0.0, 128
        %785 = vxpose.xlu0.b32.cont [4/16] 0.0, 128
        %786 = vxpose.xlu0.b32.cont [5/16] 0.0, 128
        %787 = vxpose.xlu0.b32.cont [6/16] 0.0, 128
        %788 = vxpose.xlu0.b32.cont [7/16] 0.0, 128
        %789 = vxpose.xlu0.b32.cont [8/16] 0.0, 128
        %790 = vxpose.xlu0.b32.cont [9/16] 0.0, 128
        %791 = vxpose.xlu0.b32.cont [10/16] 0.0, 128
        %792 = vxpose.xlu0.b32.cont [11/16] 0.0, 128
        %793 = vxpose.xlu0.b32.cont [12/16] 0.0, 128
        %794 = vxpose.xlu0.b32.cont [13/16] 0.0, 128
        %795 = vxpose.xlu0.b32.cont [14/16] 0.0, 128
        %796 = vxpose.xlu0.b32.cont [15/16] 0.0, 128
        %797 = vxpose.xlu0.b32.end [16/16] 0.0, 128
        %v798 = vpop.trf.xlu0
        %v799 = vpop.trf.xlu0
        %v800 = vpop.trf.xlu0
        %v801 = vpop.trf.xlu0
        %v802 = vpop.trf.xlu0
        %v803 = vpop.trf.xlu0
        %v804 = vpop.trf.xlu0
        %v805 = vpop.trf.xlu0
        %v806 = vpop.trf.xlu0
        %v807 = vpop.trf.xlu0
        %v808 = vpop.trf.xlu0
        %v809 = vpop.trf.xlu0
        %v810 = vpop.trf.xlu0
        %v811 = vpop.trf.xlu0
        %v812 = vpop.trf.xlu0
        %v813 = vpop.trf.xlu0
        %814 = vxpose.xlu0.b32.start [1/16] %v744, 128
        %815 = vxpose.xlu0.b32.cont [2/16] %v748, 128
        %816 = vxpose.xlu0.b32.cont [3/16] 0.0, 128
        %817 = vxpose.xlu0.b32.cont [4/16] 0.0, 128
        %818 = vxpose.xlu0.b32.cont [5/16] 0.0, 128
        %819 = vxpose.xlu0.b32.cont [6/16] 0.0, 128
        %820 = vxpose.xlu0.b32.cont [7/16] 0.0, 128
        %821 = vxpose.xlu0.b32.cont [8/16] 0.0, 128
        %822 = vxpose.xlu0.b32.cont [9/16] 0.0, 128
        %823 = vxpose.xlu0.b32.cont [10/16] 0.0, 128
        %824 = vxpose.xlu0.b32.cont [11/16] 0.0, 128
        %825 = vxpose.xlu0.b32.cont [12/16] 0.0, 128
        %826 = vxpose.xlu0.b32.cont [13/16] 0.0, 128
        %827 = vxpose.xlu0.b32.cont [14/16] 0.0, 128
        %828 = vxpose.xlu0.b32.cont [15/16] 0.0, 128
        %829 = vxpose.xlu0.b32.end [16/16] 0.0, 128
        %v830 = vpop.trf.xlu0
        %v831 = vpop.trf.xlu0
        %v832 = vpop.trf.xlu0
        %v833 = vpop.trf.xlu0
        %v834 = vpop.trf.xlu0
        %v835 = vpop.trf.xlu0
        %v836 = vpop.trf.xlu0
        %v837 = vpop.trf.xlu0
        %v838 = vpop.trf.xlu0
        %v839 = vpop.trf.xlu0
        %v840 = vpop.trf.xlu0
        %v841 = vpop.trf.xlu0
        %v842 = vpop.trf.xlu0
        %v843 = vpop.trf.xlu0
        %v844 = vpop.trf.xlu0
        %v845 = vpop.trf.xlu0
        %v847 = vsel %vm417, %v766, 0
        %v850 = vsel %vm417, %v798, 0
        %v853 = vsel %vm417, %v830, 0
        %855 = vmatpush.msra.mxu0 0.0
        %856 = vmatpush.msra.mxu0 0.0
        %857 = vmatpush.msra.mxu0 0.0
        %858 = vmatpush.msra.mxu0 0.0
        %859 = vmatpush.msra.mxu0 0.0
        %860 = vmatpush.msra.mxu0 0.0
        %861 = vmatpush.msra.mxu0 0.0
        %862 = vmatpush.msra.mxu0 0.0
        %863 = vmatpush.msra.mxu0 0.0
        %864 = vmatpush.msra.mxu0 0.0
        %865 = vmatpush.msra.mxu0 0.0
        %866 = vmatpush.msra.mxu0 0.0
        %867 = vmatpush.msra.mxu0 0.0
        %868 = vmatpush.msra.mxu0 0.0
        %v869 = vand.u32 %v416, 4294901760
        %870 = vmatpush.msra.mxu0 %v869
        %v871 = vand.u32 %v415, 4294901760
        %872 = vmatpush.msra.mxu0 %v871
        %v873 = vand.u32 %v847, 4294901760
        %v874 = vsub.f32 %v847, %v873
        %v875 = vand.u32 %v874, 4294901760
        %v876 = vsub.f32 %v874, %v875
        %v877 = vand.u32 %v876, 4294901760
        %878 = vmatmul.f32.gmra.mxu0 %v877
        %v879 = vpop.f32.mrf.mxu0
        %v880 = vadd.f32 0.0, %v879
        %v881 = vand.u32 %v850, 4294901760
        %v882 = vsub.f32 %v850, %v881
        %v883 = vand.u32 %v882, 4294901760
        %v884 = vsub.f32 %v882, %v883
        %v885 = vand.u32 %v884, 4294901760
        %886 = vmatmul.f32.gmra.mxu0 %v885
        %v887 = vpop.f32.mrf.mxu0
        %v888 = vadd.f32 0.0, %v887
        %v889 = vand.u32 %v853, 4294901760
        %v890 = vsub.f32 %v853, %v889
        %v891 = vand.u32 %v890, 4294901760
        %v892 = vsub.f32 %v890, %v891
        %v893 = vand.u32 %v892, 4294901760
        %894 = vmatmul.f32.gmra.mxu0 %v893
        %v895 = vpop.f32.mrf.mxu0
        %v896 = vadd.f32 0.0, %v895
        %897 = vdwg.mxu0
        %898 = vmatpush.msra.mxu0 0.0
        %899 = vmatpush.msra.mxu0 0.0
        %900 = vmatpush.msra.mxu0 0.0
        %901 = vmatpush.msra.mxu0 0.0
        %902 = vmatpush.msra.mxu0 0.0
        %903 = vmatpush.msra.mxu0 0.0
        %904 = vmatpush.msra.mxu0 0.0
        %905 = vmatpush.msra.mxu0 0.0
        %906 = vmatpush.msra.mxu0 0.0
        %907 = vmatpush.msra.mxu0 0.0
        %908 = vmatpush.msra.mxu0 0.0
        %909 = vmatpush.msra.mxu0 0.0
        %910 = vmatpush.msra.mxu0 0.0
        %911 = vmatpush.msra.mxu0 0.0
        %v912 = vand.u32 %v416, 4294901760
        %v913 = vsub.f32 %v416, %v912
        %v914 = vand.u32 %v913, 4294901760
        %v915 = vsub.f32 %v913, %v914
        %v916 = vand.u32 %v915, 4294901760
        %917 = vmatpush.msra.mxu0 %v916
        %v918 = vand.u32 %v415, 4294901760
        %v919 = vsub.f32 %v415, %v918
        %v920 = vand.u32 %v919, 4294901760
        %v921 = vsub.f32 %v919, %v920
        %v922 = vand.u32 %v921, 4294901760
        %923 = vmatpush.msra.mxu0 %v922
        %v924 = vand.u32 %v847, 4294901760
        %925 = vmatmul.f32.gmra.mxu0 %v924
        %v926 = vpop.f32.mrf.mxu0
        %v927 = vadd.f32 %v880, %v926
        %v928 = vand.u32 %v850, 4294901760
        %929 = vmatmul.f32.gmra.mxu0 %v928
        %v930 = vpop.f32.mrf.mxu0
        %v931 = vadd.f32 %v888, %v930
        %v932 = vand.u32 %v853, 4294901760
        %933 = vmatmul.f32.gmra.mxu0 %v932
        %v934 = vpop.f32.mrf.mxu0
        %v935 = vadd.f32 %v896, %v934
        %936 = vdwg.mxu0
        %937 = vmatpush.msra.mxu0 0.0
        %938 = vmatpush.msra.mxu0 0.0
        %939 = vmatpush.msra.mxu0 0.0
        %940 = vmatpush.msra.mxu0 0.0
        %941 = vmatpush.msra.mxu0 0.0
        %942 = vmatpush.msra.mxu0 0.0
        %943 = vmatpush.msra.mxu0 0.0
        %944 = vmatpush.msra.mxu0 0.0
        %945 = vmatpush.msra.mxu0 0.0
        %946 = vmatpush.msra.mxu0 0.0
        %947 = vmatpush.msra.mxu0 0.0
        %948 = vmatpush.msra.mxu0 0.0
        %949 = vmatpush.msra.mxu0 0.0
        %950 = vmatpush.msra.mxu0 0.0
        %v951 = vand.u32 %v416, 4294901760
        %v952 = vsub.f32 %v416, %v951
        %953 = vmatpush.msra.mxu0 %v952
        %v954 = vand.u32 %v415, 4294901760
        %v955 = vsub.f32 %v415, %v954
        %956 = vmatpush.msra.mxu0 %v955
        %v957 = vand.u32 %v847, 4294901760
        %v958 = vsub.f32 %v847, %v957
        %959 = vmatmul.f32.gmra.mxu0 %v958
        %v960 = vpop.f32.mrf.mxu0
        %v961 = vadd.f32 %v927, %v960
        %v962 = vand.u32 %v850, 4294901760
        %v963 = vsub.f32 %v850, %v962
        %964 = vmatmul.f32.gmra.mxu0 %v963
        %v965 = vpop.f32.mrf.mxu0
        %v966 = vadd.f32 %v931, %v965
        %v967 = vand.u32 %v853, 4294901760
        %v968 = vsub.f32 %v853, %v967
        %969 = vmatmul.f32.gmra.mxu0 %v968
        %v970 = vpop.f32.mrf.mxu0
        %v971 = vadd.f32 %v935, %v970
        %972 = vdwg.mxu0
        %973 = vmatpush.msra.mxu0 0.0
        %974 = vmatpush.msra.mxu0 0.0
        %975 = vmatpush.msra.mxu0 0.0
        %976 = vmatpush.msra.mxu0 0.0
        %977 = vmatpush.msra.mxu0 0.0
        %978 = vmatpush.msra.mxu0 0.0
        %979 = vmatpush.msra.mxu0 0.0
        %980 = vmatpush.msra.mxu0 0.0
        %981 = vmatpush.msra.mxu0 0.0
        %982 = vmatpush.msra.mxu0 0.0
        %983 = vmatpush.msra.mxu0 0.0
        %984 = vmatpush.msra.mxu0 0.0
        %985 = vmatpush.msra.mxu0 0.0
        %986 = vmatpush.msra.mxu0 0.0
        %v987 = vand.u32 %v416, 4294901760
        %988 = vmatpush.msra.mxu0 %v987
        %v989 = vand.u32 %v415, 4294901760
        %990 = vmatpush.msra.mxu0 %v989
        %v991 = vand.u32 %v847, 4294901760
        %v992 = vsub.f32 %v847, %v991
        %v993 = vand.u32 %v992, 4294901760
        %994 = vmatmul.f32.gmra.mxu0 %v993
        %v995 = vpop.f32.mrf.mxu0
        %v996 = vadd.f32 %v961, %v995
        %v997 = vand.u32 %v850, 4294901760
        %v998 = vsub.f32 %v850, %v997
        %v999 = vand.u32 %v998, 4294901760
        %1000 = vmatmul.f32.gmra.mxu0 %v999
        %v1001 = vpop.f32.mrf.mxu0
        %v1002 = vadd.f32 %v966, %v1001
        %v1003 = vand.u32 %v853, 4294901760
        %v1004 = vsub.f32 %v853, %v1003
        %v1005 = vand.u32 %v1004, 4294901760
        %1006 = vmatmul.f32.gmra.mxu0 %v1005
        %v1007 = vpop.f32.mrf.mxu0
        %v1008 = vadd.f32 %v971, %v1007
        %1009 = vdwg.mxu0
        %1010 = vmatpush.msra.mxu0 0.0
        %1011 = vmatpush.msra.mxu0 0.0
        %1012 = vmatpush.msra.mxu0 0.0
        %1013 = vmatpush.msra.mxu0 0.0
        %1014 = vmatpush.msra.mxu0 0.0
        %1015 = vmatpush.msra.mxu0 0.0
        %1016 = vmatpush.msra.mxu0 0.0
        %1017 = vmatpush.msra.mxu0 0.0
        %1018 = vmatpush.msra.mxu0 0.0
        %1019 = vmatpush.msra.mxu0 0.0
        %1020 = vmatpush.msra.mxu0 0.0
        %1021 = vmatpush.msra.mxu0 0.0
        %1022 = vmatpush.msra.mxu0 0.0
        %1023 = vmatpush.msra.mxu0 0.0
        %v1024 = vand.u32 %v416, 4294901760
        %v1025 = vsub.f32 %v416, %v1024
        %v1026 = vand.u32 %v1025, 4294901760
        %1027 = vmatpush.msra.mxu0 %v1026
        %v1028 = vand.u32 %v415, 4294901760
        %v1029 = vsub.f32 %v415, %v1028
        %v1030 = vand.u32 %v1029, 4294901760
        %1031 = vmatpush.msra.mxu0 %v1030
        %v1032 = vand.u32 %v847, 4294901760
        %1033 = vmatmul.f32.gmra.mxu0 %v1032
        %v1034 = vpop.f32.mrf.mxu0
        %v1035 = vadd.f32 %v996, %v1034
        %v1036 = vand.u32 %v850, 4294901760
        %1037 = vmatmul.f32.gmra.mxu0 %v1036
        %v1038 = vpop.f32.mrf.mxu0
        %v1039 = vadd.f32 %v1002, %v1038
        %v1040 = vand.u32 %v853, 4294901760
        %1041 = vmatmul.f32.gmra.mxu0 %v1040
        %v1042 = vpop.f32.mrf.mxu0
        %v1043 = vadd.f32 %v1008, %v1042
        %1044 = vdwg.mxu0
        %1045 = vmatpush.msra.mxu0 0.0
        %1046 = vmatpush.msra.mxu0 0.0
        %1047 = vmatpush.msra.mxu0 0.0
        %1048 = vmatpush.msra.mxu0 0.0
        %1049 = vmatpush.msra.mxu0 0.0
        %1050 = vmatpush.msra.mxu0 0.0
        %1051 = vmatpush.msra.mxu0 0.0
        %1052 = vmatpush.msra.mxu0 0.0
        %1053 = vmatpush.msra.mxu0 0.0
        %1054 = vmatpush.msra.mxu0 0.0
        %1055 = vmatpush.msra.mxu0 0.0
        %1056 = vmatpush.msra.mxu0 0.0
        %1057 = vmatpush.msra.mxu0 0.0
        %1058 = vmatpush.msra.mxu0 0.0
        %v1059 = vand.u32 %v416, 4294901760
        %1060 = vmatpush.msra.mxu0 %v1059
        %v1061 = vand.u32 %v415, 4294901760
        %1062 = vmatpush.msra.mxu0 %v1061
        %v1063 = vand.u32 %v847, 4294901760
        %1064 = vmatmul.f32.gmra.mxu0 %v1063
        %v1065 = vpop.f32.mrf.mxu0
        %v1066 = vadd.f32 %v1035, %v1065
        %v1067 = vand.u32 %v850, 4294901760
        %1068 = vmatmul.f32.gmra.mxu0 %v1067
        %v1069 = vpop.f32.mrf.mxu0
        %v1070 = vadd.f32 %v1039, %v1069
        %v1071 = vand.u32 %v853, 4294901760
        %1072 = vmatmul.f32.gmra.mxu0 %v1071
        %v1073 = vpop.f32.mrf.mxu0
        %v1074 = vadd.f32 %v1043, %v1073
        %1075 = vdwg.mxu0
        %1076 = vxpose.xlu0.b32.start [1/16] %v1066, 128
        %1077 = vxpose.xlu0.b32.cont [2/16] 0.0, 128
        %1078 = vxpose.xlu0.b32.cont [3/16] 0.0, 128
        %1079 = vxpose.xlu0.b32.cont [4/16] 0.0, 128
        %1080 = vxpose.xlu0.b32.cont [5/16] 0.0, 128
        %1081 = vxpose.xlu0.b32.cont [6/16] 0.0, 128
        %1082 = vxpose.xlu0.b32.cont [7/16] 0.0, 128
        %1083 = vxpose.xlu0.b32.cont [8/16] 0.0, 128
        %1084 = vxpose.xlu0.b32.cont [9/16] 0.0, 128
        %1085 = vxpose.xlu0.b32.cont [10/16] 0.0, 128
        %1086 = vxpose.xlu0.b32.cont [11/16] 0.0, 128
        %1087 = vxpose.xlu0.b32.cont [12/16] 0.0, 128
        %1088 = vxpose.xlu0.b32.cont [13/16] 0.0, 128
        %1089 = vxpose.xlu0.b32.cont [14/16] 0.0, 128
        %1090 = vxpose.xlu0.b32.cont [15/16] 0.0, 128
        %1091 = vxpose.xlu0.b32.end [16/16] 0.0, 128
        %v1092 = vpop.trf.xlu0
        %v1093 = vpop.trf.xlu0
        %v1094 = vpop.trf.xlu0
        %v1095 = vpop.trf.xlu0
        %v1096 = vpop.trf.xlu0
        %v1097 = vpop.trf.xlu0
        %v1098 = vpop.trf.xlu0
        %v1099 = vpop.trf.xlu0
        %v1100 = vpop.trf.xlu0
        %v1101 = vpop.trf.xlu0
        %v1102 = vpop.trf.xlu0
        %v1103 = vpop.trf.xlu0
        %v1104 = vpop.trf.xlu0
        %v1105 = vpop.trf.xlu0
        %v1106 = vpop.trf.xlu0
        %v1107 = vpop.trf.xlu0
        %1108 = vxpose.xlu0.b32.start [1/16] %v1070, 128
        %1109 = vxpose.xlu0.b32.cont [2/16] 0.0, 128
        %1110 = vxpose.xlu0.b32.cont [3/16] 0.0, 128
        %1111 = vxpose.xlu0.b32.cont [4/16] 0.0, 128
        %1112 = vxpose.xlu0.b32.cont [5/16] 0.0, 128
        %1113 = vxpose.xlu0.b32.cont [6/16] 0.0, 128
        %1114 = vxpose.xlu0.b32.cont [7/16] 0.0, 128
        %1115 = vxpose.xlu0.b32.cont [8/16] 0.0, 128
        %1116 = vxpose.xlu0.b32.cont [9/16] 0.0, 128
        %1117 = vxpose.xlu0.b32.cont [10/16] 0.0, 128
        %1118 = vxpose.xlu0.b32.cont [11/16] 0.0, 128
        %1119 = vxpose.xlu0.b32.cont [12/16] 0.0, 128
        %1120 = vxpose.xlu0.b32.cont [13/16] 0.0, 128
        %1121 = vxpose.xlu0.b32.cont [14/16] 0.0, 128
        %1122 = vxpose.xlu0.b32.cont [15/16] 0.0, 128
        %1123 = vxpose.xlu0.b32.end [16/16] 0.0, 128
        %v1124 = vpop.trf.xlu0
        %v1125 = vpop.trf.xlu0
        %v1126 = vpop.trf.xlu0
        %v1127 = vpop.trf.xlu0
        %v1128 = vpop.trf.xlu0
        %v1129 = vpop.trf.xlu0
        %v1130 = vpop.trf.xlu0
        %v1131 = vpop.trf.xlu0
        %v1132 = vpop.trf.xlu0
        %v1133 = vpop.trf.xlu0
        %v1134 = vpop.trf.xlu0
        %v1135 = vpop.trf.xlu0
        %v1136 = vpop.trf.xlu0
        %v1137 = vpop.trf.xlu0
        %v1138 = vpop.trf.xlu0
        %v1139 = vpop.trf.xlu0
        %1140 = vxpose.xlu0.b32.start [1/16] %v1074, 128
        %1141 = vxpose.xlu0.b32.cont [2/16] 0.0, 128
        %1142 = vxpose.xlu0.b32.cont [3/16] 0.0, 128
        %1143 = vxpose.xlu0.b32.cont [4/16] 0.0, 128
        %1144 = vxpose.xlu0.b32.cont [5/16] 0.0, 128
        %1145 = vxpose.xlu0.b32.cont [6/16] 0.0, 128
        %1146 = vxpose.xlu0.b32.cont [7/16] 0.0, 128
        %1147 = vxpose.xlu0.b32.cont [8/16] 0.0, 128
        %1148 = vxpose.xlu0.b32.cont [9/16] 0.0, 128
        %1149 = vxpose.xlu0.b32.cont [10/16] 0.0, 128
        %1150 = vxpose.xlu0.b32.cont [11/16] 0.0, 128
        %1151 = vxpose.xlu0.b32.cont [12/16] 0.0, 128
        %1152 = vxpose.xlu0.b32.cont [13/16] 0.0, 128
        %1153 = vxpose.xlu0.b32.cont [14/16] 0.0, 128
        %1154 = vxpose.xlu0.b32.cont [15/16] 0.0, 128
        %1155 = vxpose.xlu0.b32.end [16/16] 0.0, 128
        %v1156 = vpop.trf.xlu0
        %v1157 = vpop.trf.xlu0
        %v1158 = vpop.trf.xlu0
        %v1159 = vpop.trf.xlu0
        %v1160 = vpop.trf.xlu0
        %v1161 = vpop.trf.xlu0
        %v1162 = vpop.trf.xlu0
        %v1163 = vpop.trf.xlu0
        %v1164 = vpop.trf.xlu0
        %v1165 = vpop.trf.xlu0
        %v1166 = vpop.trf.xlu0
        %v1167 = vpop.trf.xlu0
        %v1168 = vpop.trf.xlu0
        %v1169 = vpop.trf.xlu0
        %v1170 = vpop.trf.xlu0
        %v1171 = vpop.trf.xlu0
        %1175 = vrot.lane.b32.xlu0 %v1092, 8
        %v1176 = vpop.permute.xlu0 %1175
        %1177 = vrot.lane.b32.xlu0 %v1124, 8
        %v1178 = vpop.permute.xlu0 %1177
        %1179 = vrot.lane.b32.xlu0 %v1156, 8
        %v1180 = vpop.permute.xlu0 %1179
        %vm1184 = vcmask 64512
        %v1185 = vsel %vm1184, %v1092, %v1176
        %v1186 = vsel %vm1184, %v1124, %v1178
        %v1187 = vsel %vm1184, %v1156, %v1180
        %v1188 = vsub.f32 %v407, %v1185
        %v1189 = vsub.f32 %v408, %v1185
        %v1190 = vsub.f32 %v409, %v1186
        %v1191 = vsub.f32 %v410, %v1186
        %v1192 = vsub.f32 %v411, %v1187
        %v1193 = vsub.f32 %v412, %v1187
        %v1194 = vand.u32 2147483647, %v1188
        %v1195 = vand.u32 2147483647, %v1189
        %v1196 = vand.u32 2147483647, %v1190
        %v1197 = vand.u32 2147483647, %v1191
        %v1198 = vand.u32 2147483647, %v1192
        %v1199 = vand.u32 2147483647, %v1193
        %v1200 = vadd.f32 %v1194, %v1196
        %v1201 = vadd.f32 %v1195, %v1197
        %v1202 = vadd.f32 %v1200, %v1198
        %v1203 = vadd.f32 %v1201, %v1199
        %v1204 = vmul.f32 %v1202, 0.11111111
        %v1205 = vmul.f32 %v1203, 0.11111111
        %v1206 = vld [vmem:[%s3] sm:$0xff]
        %v1207 = vld [vmem:[%s4] sm:$0xff]
        %v1208 = vsel %vm1184, %v1092, 0
        %v1210 = vsel %vm1184, %v1124, 0
        %v1212 = vsel %vm1184, %v1156, 0
        %1214 = vmatpush.msra.mxu0 0.0
        %1215 = vmatpush.msra.mxu0 0.0
        %1216 = vmatpush.msra.mxu0 0.0
        %1217 = vmatpush.msra.mxu0 0.0
        %1218 = vmatpush.msra.mxu0 0.0
        %1219 = vmatpush.msra.mxu0 0.0
        %1220 = vmatpush.msra.mxu0 0.0
        %1221 = vmatpush.msra.mxu0 0.0
        %1222 = vmatpush.msra.mxu0 0.0
        %1223 = vmatpush.msra.mxu0 0.0
        %1224 = vmatpush.msra.mxu0 0.0
        %1225 = vmatpush.msra.mxu0 0.0
        %1226 = vmatpush.msra.mxu0 0.0
        %1227 = vmatpush.msra.mxu0 0.0
        %1228 = vmatpush.msra.mxu0 0.0
        %v1229 = vand.u32 %v1206, 4294901760
        %1230 = vmatpush.msra.mxu0 %v1229
        %v1231 = vand.u32 %v1208, 4294901760
        %v1232 = vsub.f32 %v1208, %v1231
        %v1233 = vand.u32 %v1232, 4294901760
        %v1234 = vsub.f32 %v1232, %v1233
        %v1235 = vand.u32 %v1234, 4294901760
        %1236 = vmatmul.f32.gmra.mxu0 %v1235
        %v1237 = vpop.f32.mrf.mxu0
        %v1238 = vadd.f32 0.0, %v1237
        %v1239 = vand.u32 %v1210, 4294901760
        %v1240 = vsub.f32 %v1210, %v1239
        %v1241 = vand.u32 %v1240, 4294901760
        %v1242 = vsub.f32 %v1240, %v1241
        %v1243 = vand.u32 %v1242, 4294901760
        %1244 = vmatmul.f32.gmra.mxu0 %v1243
        %v1245 = vpop.f32.mrf.mxu0
        %v1246 = vadd.f32 0.0, %v1245
        %v1247 = vand.u32 %v1212, 4294901760
        %v1248 = vsub.f32 %v1212, %v1247
        %v1249 = vand.u32 %v1248, 4294901760
        %v1250 = vsub.f32 %v1248, %v1249
        %v1251 = vand.u32 %v1250, 4294901760
        %1252 = vmatmul.f32.gmra.mxu0 %v1251
        %v1253 = vpop.f32.mrf.mxu0
        %v1254 = vadd.f32 0.0, %v1253
        %1255 = vdwg.mxu0
        %1256 = vmatpush.msra.mxu0 0.0
        %1257 = vmatpush.msra.mxu0 0.0
        %1258 = vmatpush.msra.mxu0 0.0
        %1259 = vmatpush.msra.mxu0 0.0
        %1260 = vmatpush.msra.mxu0 0.0
        %1261 = vmatpush.msra.mxu0 0.0
        %1262 = vmatpush.msra.mxu0 0.0
        %1263 = vmatpush.msra.mxu0 0.0
        %1264 = vmatpush.msra.mxu0 0.0
        %1265 = vmatpush.msra.mxu0 0.0
        %1266 = vmatpush.msra.mxu0 0.0
        %1267 = vmatpush.msra.mxu0 0.0
        %1268 = vmatpush.msra.mxu0 0.0
        %1269 = vmatpush.msra.mxu0 0.0
        %1270 = vmatpush.msra.mxu0 0.0
        %v1271 = vand.u32 %v1206, 4294901760
        %v1272 = vsub.f32 %v1206, %v1271
        %v1273 = vand.u32 %v1272, 4294901760
        %v1274 = vsub.f32 %v1272, %v1273
        %v1275 = vand.u32 %v1274, 4294901760
        %1276 = vmatpush.msra.mxu0 %v1275
        %v1277 = vand.u32 %v1208, 4294901760
        %1278 = vmatmul.f32.gmra.mxu0 %v1277
        %v1279 = vpop.f32.mrf.mxu0
        %v1280 = vadd.f32 %v1238, %v1279
        %v1281 = vand.u32 %v1210, 4294901760
        %1282 = vmatmul.f32.gmra.mxu0 %v1281
        %v1283 = vpop.f32.mrf.mxu0
        %v1284 = vadd.f32 %v1246, %v1283
        %v1285 = vand.u32 %v1212, 4294901760
        %1286 = vmatmul.f32.gmra.mxu0 %v1285
        %v1287 = vpop.f32.mrf.mxu0
        %v1288 = vadd.f32 %v1254, %v1287
        %1289 = vdwg.mxu0
        %1290 = vmatpush.msra.mxu0 0.0
        %1291 = vmatpush.msra.mxu0 0.0
        %1292 = vmatpush.msra.mxu0 0.0
        %1293 = vmatpush.msra.mxu0 0.0
        %1294 = vmatpush.msra.mxu0 0.0
        %1295 = vmatpush.msra.mxu0 0.0
        %1296 = vmatpush.msra.mxu0 0.0
        %1297 = vmatpush.msra.mxu0 0.0
        %1298 = vmatpush.msra.mxu0 0.0
        %1299 = vmatpush.msra.mxu0 0.0
        %1300 = vmatpush.msra.mxu0 0.0
        %1301 = vmatpush.msra.mxu0 0.0
        %1302 = vmatpush.msra.mxu0 0.0
        %1303 = vmatpush.msra.mxu0 0.0
        %1304 = vmatpush.msra.mxu0 0.0
        %v1305 = vand.u32 %v1206, 4294901760
        %v1306 = vsub.f32 %v1206, %v1305
        %1307 = vmatpush.msra.mxu0 %v1306
        %v1308 = vand.u32 %v1208, 4294901760
        %v1309 = vsub.f32 %v1208, %v1308
        %1310 = vmatmul.f32.gmra.mxu0 %v1309
        %v1311 = vpop.f32.mrf.mxu0
        %v1312 = vadd.f32 %v1280, %v1311
        %v1313 = vand.u32 %v1210, 4294901760
        %v1314 = vsub.f32 %v1210, %v1313
        %1315 = vmatmul.f32.gmra.mxu0 %v1314
        %v1316 = vpop.f32.mrf.mxu0
        %v1317 = vadd.f32 %v1284, %v1316
        %v1318 = vand.u32 %v1212, 4294901760
        %v1319 = vsub.f32 %v1212, %v1318
        %1320 = vmatmul.f32.gmra.mxu0 %v1319
        %v1321 = vpop.f32.mrf.mxu0
        %v1322 = vadd.f32 %v1288, %v1321
        %1323 = vdwg.mxu0
        %1324 = vmatpush.msra.mxu0 0.0
        %1325 = vmatpush.msra.mxu0 0.0
        %1326 = vmatpush.msra.mxu0 0.0
        %1327 = vmatpush.msra.mxu0 0.0
        %1328 = vmatpush.msra.mxu0 0.0
        %1329 = vmatpush.msra.mxu0 0.0
        %1330 = vmatpush.msra.mxu0 0.0
        %1331 = vmatpush.msra.mxu0 0.0
        %1332 = vmatpush.msra.mxu0 0.0
        %1333 = vmatpush.msra.mxu0 0.0
        %1334 = vmatpush.msra.mxu0 0.0
        %1335 = vmatpush.msra.mxu0 0.0
        %1336 = vmatpush.msra.mxu0 0.0
        %1337 = vmatpush.msra.mxu0 0.0
        %1338 = vmatpush.msra.mxu0 0.0
        %v1339 = vand.u32 %v1206, 4294901760
        %1340 = vmatpush.msra.mxu0 %v1339
        %v1341 = vand.u32 %v1208, 4294901760
        %v1342 = vsub.f32 %v1208, %v1341
        %v1343 = vand.u32 %v1342, 4294901760
        %1344 = vmatmul.f32.gmra.mxu0 %v1343
        %v1345 = vpop.f32.mrf.mxu0
        %v1346 = vadd.f32 %v1312, %v1345
        %v1347 = vand.u32 %v1210, 4294901760
        %v1348 = vsub.f32 %v1210, %v1347
        %v1349 = vand.u32 %v1348, 4294901760
        %1350 = vmatmul.f32.gmra.mxu0 %v1349
        %v1351 = vpop.f32.mrf.mxu0
        %v1352 = vadd.f32 %v1317, %v1351
        %v1353 = vand.u32 %v1212, 4294901760
        %v1354 = vsub.f32 %v1212, %v1353
        %v1355 = vand.u32 %v1354, 4294901760
        %1356 = vmatmul.f32.gmra.mxu0 %v1355
        %v1357 = vpop.f32.mrf.mxu0
        %v1358 = vadd.f32 %v1322, %v1357
        %1359 = vdwg.mxu0
        %1360 = vmatpush.msra.mxu0 0.0
        %1361 = vmatpush.msra.mxu0 0.0
        %1362 = vmatpush.msra.mxu0 0.0
        %1363 = vmatpush.msra.mxu0 0.0
        %1364 = vmatpush.msra.mxu0 0.0
        %1365 = vmatpush.msra.mxu0 0.0
        %1366 = vmatpush.msra.mxu0 0.0
        %1367 = vmatpush.msra.mxu0 0.0
        %1368 = vmatpush.msra.mxu0 0.0
        %1369 = vmatpush.msra.mxu0 0.0
        %1370 = vmatpush.msra.mxu0 0.0
        %1371 = vmatpush.msra.mxu0 0.0
        %1372 = vmatpush.msra.mxu0 0.0
        %1373 = vmatpush.msra.mxu0 0.0
        %1374 = vmatpush.msra.mxu0 0.0
        %v1375 = vand.u32 %v1206, 4294901760
        %v1376 = vsub.f32 %v1206, %v1375
        %v1377 = vand.u32 %v1376, 4294901760
        %1378 = vmatpush.msra.mxu0 %v1377
        %v1379 = vand.u32 %v1208, 4294901760
        %1380 = vmatmul.f32.gmra.mxu0 %v1379
        %v1381 = vpop.f32.mrf.mxu0
        %v1382 = vadd.f32 %v1346, %v1381
        %v1383 = vand.u32 %v1210, 4294901760
        %1384 = vmatmul.f32.gmra.mxu0 %v1383
        %v1385 = vpop.f32.mrf.mxu0
        %v1386 = vadd.f32 %v1352, %v1385
        %v1387 = vand.u32 %v1212, 4294901760
        %1388 = vmatmul.f32.gmra.mxu0 %v1387
        %v1389 = vpop.f32.mrf.mxu0
        %v1390 = vadd.f32 %v1358, %v1389
        %1391 = vdwg.mxu0
        %1392 = vmatpush.msra.mxu0 0.0
        %1393 = vmatpush.msra.mxu0 0.0
        %1394 = vmatpush.msra.mxu0 0.0
        %1395 = vmatpush.msra.mxu0 0.0
        %1396 = vmatpush.msra.mxu0 0.0
        %1397 = vmatpush.msra.mxu0 0.0
        %1398 = vmatpush.msra.mxu0 0.0
        %1399 = vmatpush.msra.mxu0 0.0
        %1400 = vmatpush.msra.mxu0 0.0
        %1401 = vmatpush.msra.mxu0 0.0
        %1402 = vmatpush.msra.mxu0 0.0
        %1403 = vmatpush.msra.mxu0 0.0
        %1404 = vmatpush.msra.mxu0 0.0
        %1405 = vmatpush.msra.mxu0 0.0
        %1406 = vmatpush.msra.mxu0 0.0
        %v1407 = vand.u32 %v1206, 4294901760
        %1408 = vmatpush.msra.mxu0 %v1407
        %v1409 = vand.u32 %v1208, 4294901760
        %1410 = vmatmul.f32.gmra.mxu0 %v1409
        %v1411 = vpop.f32.mrf.mxu0
        %v1412 = vadd.f32 %v1382, %v1411
        %v1413 = vand.u32 %v1210, 4294901760
        %1414 = vmatmul.f32.gmra.mxu0 %v1413
        %v1415 = vpop.f32.mrf.mxu0
        %v1416 = vadd.f32 %v1386, %v1415
        %v1417 = vand.u32 %v1212, 4294901760
        %1418 = vmatmul.f32.gmra.mxu0 %v1417
        %v1419 = vpop.f32.mrf.mxu0
        %v1420 = vadd.f32 %v1390, %v1419
        %1421 = vdwg.mxu0
        %1422 = vxpose.xlu0.b32.start [1/16] %v1412, 128
        %1423 = vxpose.xlu0.b32.cont [2/16] 0.0, 128
        %1424 = vxpose.xlu0.b32.cont [3/16] 0.0, 128
        %1425 = vxpose.xlu0.b32.cont [4/16] 0.0, 128
        %1426 = vxpose.xlu0.b32.cont [5/16] 0.0, 128
        %1427 = vxpose.xlu0.b32.cont [6/16] 0.0, 128
        %1428 = vxpose.xlu0.b32.cont [7/16] 0.0, 128
        %1429 = vxpose.xlu0.b32.cont [8/16] 0.0, 128
        %1430 = vxpose.xlu0.b32.cont [9/16] 0.0, 128
        %1431 = vxpose.xlu0.b32.cont [10/16] 0.0, 128
        %1432 = vxpose.xlu0.b32.cont [11/16] 0.0, 128
        %1433 = vxpose.xlu0.b32.cont [12/16] 0.0, 128
        %1434 = vxpose.xlu0.b32.cont [13/16] 0.0, 128
        %1435 = vxpose.xlu0.b32.cont [14/16] 0.0, 128
        %1436 = vxpose.xlu0.b32.cont [15/16] 0.0, 128
        %1437 = vxpose.xlu0.b32.end [16/16] 0.0, 128
        %v1438 = vpop.trf.xlu0
        %v1439 = vpop.trf.xlu0
        %v1440 = vpop.trf.xlu0
        %v1441 = vpop.trf.xlu0
        %v1442 = vpop.trf.xlu0
        %v1443 = vpop.trf.xlu0
        %v1444 = vpop.trf.xlu0
        %v1445 = vpop.trf.xlu0
        %v1446 = vpop.trf.xlu0
        %v1447 = vpop.trf.xlu0
        %v1448 = vpop.trf.xlu0
        %v1449 = vpop.trf.xlu0
        %v1450 = vpop.trf.xlu0
        %v1451 = vpop.trf.xlu0
        %v1452 = vpop.trf.xlu0
        %v1453 = vpop.trf.xlu0
        %1454 = vxpose.xlu0.b32.start [1/16] %v1416, 128
        %1455 = vxpose.xlu0.b32.cont [2/16] 0.0, 128
        %1456 = vxpose.xlu0.b32.cont [3/16] 0.0, 128
        %1457 = vxpose.xlu0.b32.cont [4/16] 0.0, 128
        %1458 = vxpose.xlu0.b32.cont [5/16] 0.0, 128
        %1459 = vxpose.xlu0.b32.cont [6/16] 0.0, 128
        %1460 = vxpose.xlu0.b32.cont [7/16] 0.0, 128
        %1461 = vxpose.xlu0.b32.cont [8/16] 0.0, 128
        %1462 = vxpose.xlu0.b32.cont [9/16] 0.0, 128
        %1463 = vxpose.xlu0.b32.cont [10/16] 0.0, 128
        %1464 = vxpose.xlu0.b32.cont [11/16] 0.0, 128
        %1465 = vxpose.xlu0.b32.cont [12/16] 0.0, 128
        %1466 = vxpose.xlu0.b32.cont [13/16] 0.0, 128
        %1467 = vxpose.xlu0.b32.cont [14/16] 0.0, 128
        %1468 = vxpose.xlu0.b32.cont [15/16] 0.0, 128
        %1469 = vxpose.xlu0.b32.end [16/16] 0.0, 128
        %v1470 = vpop.trf.xlu0
        %v1471 = vpop.trf.xlu0
        %v1472 = vpop.trf.xlu0
        %v1473 = vpop.trf.xlu0
        %v1474 = vpop.trf.xlu0
        %v1475 = vpop.trf.xlu0
        %v1476 = vpop.trf.xlu0
        %v1477 = vpop.trf.xlu0
        %v1478 = vpop.trf.xlu0
        %v1479 = vpop.trf.xlu0
        %v1480 = vpop.trf.xlu0
        %v1481 = vpop.trf.xlu0
        %v1482 = vpop.trf.xlu0
        %v1483 = vpop.trf.xlu0
        %v1484 = vpop.trf.xlu0
        %v1485 = vpop.trf.xlu0
        %1486 = vxpose.xlu0.b32.start [1/16] %v1420, 128
        %1487 = vxpose.xlu0.b32.cont [2/16] 0.0, 128
        %1488 = vxpose.xlu0.b32.cont [3/16] 0.0, 128
        %1489 = vxpose.xlu0.b32.cont [4/16] 0.0, 128
        %1490 = vxpose.xlu0.b32.cont [5/16] 0.0, 128
        %1491 = vxpose.xlu0.b32.cont [6/16] 0.0, 128
        %1492 = vxpose.xlu0.b32.cont [7/16] 0.0, 128
        %1493 = vxpose.xlu0.b32.cont [8/16] 0.0, 128
        %1494 = vxpose.xlu0.b32.cont [9/16] 0.0, 128
        %1495 = vxpose.xlu0.b32.cont [10/16] 0.0, 128
        %1496 = vxpose.xlu0.b32.cont [11/16] 0.0, 128
        %1497 = vxpose.xlu0.b32.cont [12/16] 0.0, 128
        %1498 = vxpose.xlu0.b32.cont [13/16] 0.0, 128
        %1499 = vxpose.xlu0.b32.cont [14/16] 0.0, 128
        %1500 = vxpose.xlu0.b32.cont [15/16] 0.0, 128
        %1501 = vxpose.xlu0.b32.end [16/16] 0.0, 128
        %v1502 = vpop.trf.xlu0
        %v1503 = vpop.trf.xlu0
        %v1504 = vpop.trf.xlu0
        %v1505 = vpop.trf.xlu0
        %v1506 = vpop.trf.xlu0
        %v1507 = vpop.trf.xlu0
        %v1508 = vpop.trf.xlu0
        %v1509 = vpop.trf.xlu0
        %v1510 = vpop.trf.xlu0
        %v1511 = vpop.trf.xlu0
        %v1512 = vpop.trf.xlu0
        %v1513 = vpop.trf.xlu0
        %v1514 = vpop.trf.xlu0
        %v1515 = vpop.trf.xlu0
        %v1516 = vpop.trf.xlu0
        %v1517 = vpop.trf.xlu0
        %v1519 = vsel %vm1184, %v1438, 0
        %1521 = vmatpush.msra.mxu0 0.0
        %1522 = vmatpush.msra.mxu0 0.0
        %1523 = vmatpush.msra.mxu0 0.0
        %1524 = vmatpush.msra.mxu0 0.0
        %1525 = vmatpush.msra.mxu0 0.0
        %1526 = vmatpush.msra.mxu0 0.0
        %1527 = vmatpush.msra.mxu0 0.0
        %1528 = vmatpush.msra.mxu0 0.0
        %1529 = vmatpush.msra.mxu0 0.0
        %1530 = vmatpush.msra.mxu0 0.0
        %1531 = vmatpush.msra.mxu0 0.0
        %1532 = vmatpush.msra.mxu0 0.0
        %1533 = vmatpush.msra.mxu0 0.0
        %1534 = vmatpush.msra.mxu0 0.0
        %1535 = vmatpush.msra.mxu0 0.0
        %v1536 = vand.u32 %v1207, 4294901760
        %1537 = vmatpush.msra.mxu0 %v1536
        %v1538 = vand.u32 %v1519, 4294901760
        %v1539 = vsub.f32 %v1519, %v1538
        %v1540 = vand.u32 %v1539, 4294901760
        %v1541 = vsub.f32 %v1539, %v1540
        %v1542 = vand.u32 %v1541, 4294901760
        %1543 = vmatmul.f32.gmra.mxu0 %v1542
        %v1544 = vpop.f32.mrf.mxu0
        %v1545 = vadd.f32 0.0, %v1544
        %1546 = vdwg.mxu0
        %1547 = vmatpush.msra.mxu0 0.0
        %1548 = vmatpush.msra.mxu0 0.0
        %1549 = vmatpush.msra.mxu0 0.0
        %1550 = vmatpush.msra.mxu0 0.0
        %1551 = vmatpush.msra.mxu0 0.0
        %1552 = vmatpush.msra.mxu0 0.0
        %1553 = vmatpush.msra.mxu0 0.0
        %1554 = vmatpush.msra.mxu0 0.0
        %1555 = vmatpush.msra.mxu0 0.0
        %1556 = vmatpush.msra.mxu0 0.0
        %1557 = vmatpush.msra.mxu0 0.0
        %1558 = vmatpush.msra.mxu0 0.0
        %1559 = vmatpush.msra.mxu0 0.0
        %1560 = vmatpush.msra.mxu0 0.0
        %1561 = vmatpush.msra.mxu0 0.0
        %v1562 = vand.u32 %v1207, 4294901760
        %v1563 = vsub.f32 %v1207, %v1562
        %v1564 = vand.u32 %v1563, 4294901760
        %v1565 = vsub.f32 %v1563, %v1564
        %v1566 = vand.u32 %v1565, 4294901760
        %1567 = vmatpush.msra.mxu0 %v1566
        %v1568 = vand.u32 %v1519, 4294901760
        %1569 = vmatmul.f32.gmra.mxu0 %v1568
        %v1570 = vpop.f32.mrf.mxu0
        %v1571 = vadd.f32 %v1545, %v1570
        %1572 = vdwg.mxu0
        %1573 = vmatpush.msra.mxu0 0.0
        %1574 = vmatpush.msra.mxu0 0.0
        %1575 = vmatpush.msra.mxu0 0.0
        %1576 = vmatpush.msra.mxu0 0.0
        %1577 = vmatpush.msra.mxu0 0.0
        %1578 = vmatpush.msra.mxu0 0.0
        %1579 = vmatpush.msra.mxu0 0.0
        %1580 = vmatpush.msra.mxu0 0.0
        %1581 = vmatpush.msra.mxu0 0.0
        %1582 = vmatpush.msra.mxu0 0.0
        %1583 = vmatpush.msra.mxu0 0.0
        %1584 = vmatpush.msra.mxu0 0.0
        %1585 = vmatpush.msra.mxu0 0.0
        %1586 = vmatpush.msra.mxu0 0.0
        %1587 = vmatpush.msra.mxu0 0.0
        %v1588 = vand.u32 %v1207, 4294901760
        %v1589 = vsub.f32 %v1207, %v1588
        %1590 = vmatpush.msra.mxu0 %v1589
        %v1591 = vand.u32 %v1519, 4294901760
        %v1592 = vsub.f32 %v1519, %v1591
        %1593 = vmatmul.f32.gmra.mxu0 %v1592
        %v1594 = vpop.f32.mrf.mxu0
        %v1595 = vadd.f32 %v1571, %v1594
        %1596 = vdwg.mxu0
        %1597 = vmatpush.msra.mxu0 0.0
        %1598 = vmatpush.msra.mxu0 0.0
        %1599 = vmatpush.msra.mxu0 0.0
        %1600 = vmatpush.msra.mxu0 0.0
        %1601 = vmatpush.msra.mxu0 0.0
        %1602 = vmatpush.msra.mxu0 0.0
        %1603 = vmatpush.msra.mxu0 0.0
        %1604 = vmatpush.msra.mxu0 0.0
        %1605 = vmatpush.msra.mxu0 0.0
        %1606 = vmatpush.msra.mxu0 0.0
        %1607 = vmatpush.msra.mxu0 0.0
        %1608 = vmatpush.msra.mxu0 0.0
        %1609 = vmatpush.msra.mxu0 0.0
        %1610 = vmatpush.msra.mxu0 0.0
        %1611 = vmatpush.msra.mxu0 0.0
        %v1612 = vand.u32 %v1207, 4294901760
        %1613 = vmatpush.msra.mxu0 %v1612
        %v1614 = vand.u32 %v1519, 4294901760
        %v1615 = vsub.f32 %v1519, %v1614
        %v1616 = vand.u32 %v1615, 4294901760
        %1617 = vmatmul.f32.gmra.mxu0 %v1616
        %v1618 = vpop.f32.mrf.mxu0
        %v1619 = vadd.f32 %v1595, %v1618
        %1620 = vdwg.mxu0
        %1621 = vmatpush.msra.mxu0 0.0
        %1622 = vmatpush.msra.mxu0 0.0
        %1623 = vmatpush.msra.mxu0 0.0
        %1624 = vmatpush.msra.mxu0 0.0
        %1625 = vmatpush.msra.mxu0 0.0
        %1626 = vmatpush.msra.mxu0 0.0
        %1627 = vmatpush.msra.mxu0 0.0
        %1628 = vmatpush.msra.mxu0 0.0
        %1629 = vmatpush.msra.mxu0 0.0
        %1630 = vmatpush.msra.mxu0 0.0
        %1631 = vmatpush.msra.mxu0 0.0
        %1632 = vmatpush.msra.mxu0 0.0
        %1633 = vmatpush.msra.mxu0 0.0
        %1634 = vmatpush.msra.mxu0 0.0
        %1635 = vmatpush.msra.mxu0 0.0
        %v1636 = vand.u32 %v1207, 4294901760
        %v1637 = vsub.f32 %v1207, %v1636
        %v1638 = vand.u32 %v1637, 4294901760
        %1639 = vmatpush.msra.mxu0 %v1638
        %v1640 = vand.u32 %v1519, 4294901760
        %1641 = vmatmul.f32.gmra.mxu0 %v1640
        %v1642 = vpop.f32.mrf.mxu0
        %v1643 = vadd.f32 %v1619, %v1642
        %1644 = vdwg.mxu0
        %1645 = vmatpush.msra.mxu0 0.0
        %1646 = vmatpush.msra.mxu0 0.0
        %1647 = vmatpush.msra.mxu0 0.0
        %1648 = vmatpush.msra.mxu0 0.0
        %1649 = vmatpush.msra.mxu0 0.0
        %1650 = vmatpush.msra.mxu0 0.0
        %1651 = vmatpush.msra.mxu0 0.0
        %1652 = vmatpush.msra.mxu0 0.0
        %1653 = vmatpush.msra.mxu0 0.0
        %1654 = vmatpush.msra.mxu0 0.0
        %1655 = vmatpush.msra.mxu0 0.0
        %1656 = vmatpush.msra.mxu0 0.0
        %1657 = vmatpush.msra.mxu0 0.0
        %1658 = vmatpush.msra.mxu0 0.0
        %1659 = vmatpush.msra.mxu0 0.0
        %v1660 = vand.u32 %v1207, 4294901760
        %1661 = vmatpush.msra.mxu0 %v1660
        %v1662 = vand.u32 %v1519, 4294901760
        %1663 = vmatmul.f32.gmra.mxu0 %v1662
        %v1664 = vpop.f32.mrf.mxu0
        %v1665 = vadd.f32 %v1643, %v1664
        %1666 = vdwg.mxu0
        %v1668 = vsel %vm1184, %v1470, 0
        %1670 = vmatpush.msra.mxu0 0.0
        %1671 = vmatpush.msra.mxu0 0.0
        %1672 = vmatpush.msra.mxu0 0.0
        %1673 = vmatpush.msra.mxu0 0.0
        %1674 = vmatpush.msra.mxu0 0.0
        %1675 = vmatpush.msra.mxu0 0.0
        %1676 = vmatpush.msra.mxu0 0.0
        %1677 = vmatpush.msra.mxu0 0.0
        %1678 = vmatpush.msra.mxu0 0.0
        %1679 = vmatpush.msra.mxu0 0.0
        %1680 = vmatpush.msra.mxu0 0.0
        %1681 = vmatpush.msra.mxu0 0.0
        %1682 = vmatpush.msra.mxu0 0.0
        %1683 = vmatpush.msra.mxu0 0.0
        %1684 = vmatpush.msra.mxu0 0.0
        %v1685 = vand.u32 %v1207, 4294901760
        %1686 = vmatpush.msra.mxu0 %v1685
        %v1687 = vand.u32 %v1668, 4294901760
        %v1688 = vsub.f32 %v1668, %v1687
        %v1689 = vand.u32 %v1688, 4294901760
        %v1690 = vsub.f32 %v1688, %v1689
        %v1691 = vand.u32 %v1690, 4294901760
        %1692 = vmatmul.f32.gmra.mxu0 %v1691
        %v1693 = vpop.f32.mrf.mxu0
        %v1694 = vadd.f32 0.0, %v1693
        %1695 = vdwg.mxu0
        %1696 = vmatpush.msra.mxu0 0.0
        %1697 = vmatpush.msra.mxu0 0.0
        %1698 = vmatpush.msra.mxu0 0.0
        %1699 = vmatpush.msra.mxu0 0.0
        %1700 = vmatpush.msra.mxu0 0.0
        %1701 = vmatpush.msra.mxu0 0.0
        %1702 = vmatpush.msra.mxu0 0.0
        %1703 = vmatpush.msra.mxu0 0.0
        %1704 = vmatpush.msra.mxu0 0.0
        %1705 = vmatpush.msra.mxu0 0.0
        %1706 = vmatpush.msra.mxu0 0.0
        %1707 = vmatpush.msra.mxu0 0.0
        %1708 = vmatpush.msra.mxu0 0.0
        %1709 = vmatpush.msra.mxu0 0.0
        %1710 = vmatpush.msra.mxu0 0.0
        %v1711 = vand.u32 %v1207, 4294901760
        %v1712 = vsub.f32 %v1207, %v1711
        %v1713 = vand.u32 %v1712, 4294901760
        %v1714 = vsub.f32 %v1712, %v1713
        %v1715 = vand.u32 %v1714, 4294901760
        %1716 = vmatpush.msra.mxu0 %v1715
        %v1717 = vand.u32 %v1668, 4294901760
        %1718 = vmatmul.f32.gmra.mxu0 %v1717
        %v1719 = vpop.f32.mrf.mxu0
        %v1720 = vadd.f32 %v1694, %v1719
        %1721 = vdwg.mxu0
        %1722 = vmatpush.msra.mxu0 0.0
        %1723 = vmatpush.msra.mxu0 0.0
        %1724 = vmatpush.msra.mxu0 0.0
        %1725 = vmatpush.msra.mxu0 0.0
        %1726 = vmatpush.msra.mxu0 0.0
        %1727 = vmatpush.msra.mxu0 0.0
        %1728 = vmatpush.msra.mxu0 0.0
        %1729 = vmatpush.msra.mxu0 0.0
        %1730 = vmatpush.msra.mxu0 0.0
        %1731 = vmatpush.msra.mxu0 0.0
        %1732 = vmatpush.msra.mxu0 0.0
        %1733 = vmatpush.msra.mxu0 0.0
        %1734 = vmatpush.msra.mxu0 0.0
        %1735 = vmatpush.msra.mxu0 0.0
        %1736 = vmatpush.msra.mxu0 0.0
        %v1737 = vand.u32 %v1207, 4294901760
        %v1738 = vsub.f32 %v1207, %v1737
        %1739 = vmatpush.msra.mxu0 %v1738
        %v1740 = vand.u32 %v1668, 4294901760
        %v1741 = vsub.f32 %v1668, %v1740
        %1742 = vmatmul.f32.gmra.mxu0 %v1741
        %v1743 = vpop.f32.mrf.mxu0
        %v1744 = vadd.f32 %v1720, %v1743
        %1745 = vdwg.mxu0
        %1746 = vmatpush.msra.mxu0 0.0
        %1747 = vmatpush.msra.mxu0 0.0
        %1748 = vmatpush.msra.mxu0 0.0
        %1749 = vmatpush.msra.mxu0 0.0
        %1750 = vmatpush.msra.mxu0 0.0
        %1751 = vmatpush.msra.mxu0 0.0
        %1752 = vmatpush.msra.mxu0 0.0
        %1753 = vmatpush.msra.mxu0 0.0
        %1754 = vmatpush.msra.mxu0 0.0
        %1755 = vmatpush.msra.mxu0 0.0
        %1756 = vmatpush.msra.mxu0 0.0
        %1757 = vmatpush.msra.mxu0 0.0
        %1758 = vmatpush.msra.mxu0 0.0
        %1759 = vmatpush.msra.mxu0 0.0
        %1760 = vmatpush.msra.mxu0 0.0
        %v1761 = vand.u32 %v1207, 4294901760
        %1762 = vmatpush.msra.mxu0 %v1761
        %v1763 = vand.u32 %v1668, 4294901760
        %v1764 = vsub.f32 %v1668, %v1763
        %v1765 = vand.u32 %v1764, 4294901760
        %1766 = vmatmul.f32.gmra.mxu0 %v1765
        %v1767 = vpop.f32.mrf.mxu0
        %v1768 = vadd.f32 %v1744, %v1767
        %1769 = vdwg.mxu0
        %1770 = vmatpush.msra.mxu0 0.0
        %1771 = vmatpush.msra.mxu0 0.0
        %1772 = vmatpush.msra.mxu0 0.0
        %1773 = vmatpush.msra.mxu0 0.0
        %1774 = vmatpush.msra.mxu0 0.0
        %1775 = vmatpush.msra.mxu0 0.0
        %1776 = vmatpush.msra.mxu0 0.0
        %1777 = vmatpush.msra.mxu0 0.0
        %1778 = vmatpush.msra.mxu0 0.0
        %1779 = vmatpush.msra.mxu0 0.0
        %1780 = vmatpush.msra.mxu0 0.0
        %1781 = vmatpush.msra.mxu0 0.0
        %1782 = vmatpush.msra.mxu0 0.0
        %1783 = vmatpush.msra.mxu0 0.0
        %1784 = vmatpush.msra.mxu0 0.0
        %v1785 = vand.u32 %v1207, 4294901760
        %v1786 = vsub.f32 %v1207, %v1785
        %v1787 = vand.u32 %v1786, 4294901760
        %1788 = vmatpush.msra.mxu0 %v1787
        %v1789 = vand.u32 %v1668, 4294901760
        %1790 = vmatmul.f32.gmra.mxu0 %v1789
        %v1791 = vpop.f32.mrf.mxu0
        %v1792 = vadd.f32 %v1768, %v1791
        %1793 = vdwg.mxu0
        %1794 = vmatpush.msra.mxu0 0.0
        %1795 = vmatpush.msra.mxu0 0.0
        %1796 = vmatpush.msra.mxu0 0.0
        %1797 = vmatpush.msra.mxu0 0.0
        %1798 = vmatpush.msra.mxu0 0.0
        %1799 = vmatpush.msra.mxu0 0.0
        %1800 = vmatpush.msra.mxu0 0.0
        %1801 = vmatpush.msra.mxu0 0.0
        %1802 = vmatpush.msra.mxu0 0.0
        %1803 = vmatpush.msra.mxu0 0.0
        %1804 = vmatpush.msra.mxu0 0.0
        %1805 = vmatpush.msra.mxu0 0.0
        %1806 = vmatpush.msra.mxu0 0.0
        %1807 = vmatpush.msra.mxu0 0.0
        %1808 = vmatpush.msra.mxu0 0.0
        %v1809 = vand.u32 %v1207, 4294901760
        %1810 = vmatpush.msra.mxu0 %v1809
        %v1811 = vand.u32 %v1668, 4294901760
        %1812 = vmatmul.f32.gmra.mxu0 %v1811
        %v1813 = vpop.f32.mrf.mxu0
        %v1814 = vadd.f32 %v1792, %v1813
        %1815 = vdwg.mxu0
        %v1817 = vsel %vm1184, %v1502, 0
        %1819 = vmatpush.msra.mxu0 0.0
        %1820 = vmatpush.msra.mxu0 0.0
        %1821 = vmatpush.msra.mxu0 0.0
        %1822 = vmatpush.msra.mxu0 0.0
        %1823 = vmatpush.msra.mxu0 0.0
        %1824 = vmatpush.msra.mxu0 0.0
        %1825 = vmatpush.msra.mxu0 0.0
        %1826 = vmatpush.msra.mxu0 0.0
        %1827 = vmatpush.msra.mxu0 0.0
        %1828 = vmatpush.msra.mxu0 0.0
        %1829 = vmatpush.msra.mxu0 0.0
        %1830 = vmatpush.msra.mxu0 0.0
        %1831 = vmatpush.msra.mxu0 0.0
        %1832 = vmatpush.msra.mxu0 0.0
        %1833 = vmatpush.msra.mxu0 0.0
        %v1834 = vand.u32 %v1207, 4294901760
        %1835 = vmatpush.msra.mxu0 %v1834
        %v1836 = vand.u32 %v1817, 4294901760
        %v1837 = vsub.f32 %v1817, %v1836
        %v1838 = vand.u32 %v1837, 4294901760
        %v1839 = vsub.f32 %v1837, %v1838
        %v1840 = vand.u32 %v1839, 4294901760
        %1841 = vmatmul.f32.gmra.mxu0 %v1840
        %v1842 = vpop.f32.mrf.mxu0
        %v1843 = vadd.f32 0.0, %v1842
        %1844 = vdwg.mxu0
        %1845 = vmatpush.msra.mxu0 0.0
        %1846 = vmatpush.msra.mxu0 0.0
        %1847 = vmatpush.msra.mxu0 0.0
        %1848 = vmatpush.msra.mxu0 0.0
        %1849 = vmatpush.msra.mxu0 0.0
        %1850 = vmatpush.msra.mxu0 0.0
        %1851 = vmatpush.msra.mxu0 0.0
        %1852 = vmatpush.msra.mxu0 0.0
        %1853 = vmatpush.msra.mxu0 0.0
        %1854 = vmatpush.msra.mxu0 0.0
        %1855 = vmatpush.msra.mxu0 0.0
        %1856 = vmatpush.msra.mxu0 0.0
        %1857 = vmatpush.msra.mxu0 0.0
        %1858 = vmatpush.msra.mxu0 0.0
        %1859 = vmatpush.msra.mxu0 0.0
        %v1860 = vand.u32 %v1207, 4294901760
        %v1861 = vsub.f32 %v1207, %v1860
        %v1862 = vand.u32 %v1861, 4294901760
        %v1863 = vsub.f32 %v1861, %v1862
        %v1864 = vand.u32 %v1863, 4294901760
        %1865 = vmatpush.msra.mxu0 %v1864
        %v1866 = vand.u32 %v1817, 4294901760
        %1867 = vmatmul.f32.gmra.mxu0 %v1866
        %v1868 = vpop.f32.mrf.mxu0
        %v1869 = vadd.f32 %v1843, %v1868
        %1870 = vdwg.mxu0
        %1871 = vmatpush.msra.mxu0 0.0
        %1872 = vmatpush.msra.mxu0 0.0
        %1873 = vmatpush.msra.mxu0 0.0
        %1874 = vmatpush.msra.mxu0 0.0
        %1875 = vmatpush.msra.mxu0 0.0
        %1876 = vmatpush.msra.mxu0 0.0
        %1877 = vmatpush.msra.mxu0 0.0
        %1878 = vmatpush.msra.mxu0 0.0
        %1879 = vmatpush.msra.mxu0 0.0
        %1880 = vmatpush.msra.mxu0 0.0
        %1881 = vmatpush.msra.mxu0 0.0
        %1882 = vmatpush.msra.mxu0 0.0
        %1883 = vmatpush.msra.mxu0 0.0
        %1884 = vmatpush.msra.mxu0 0.0
        %1885 = vmatpush.msra.mxu0 0.0
        %v1886 = vand.u32 %v1207, 4294901760
        %v1887 = vsub.f32 %v1207, %v1886
        %1888 = vmatpush.msra.mxu0 %v1887
        %v1889 = vand.u32 %v1817, 4294901760
        %v1890 = vsub.f32 %v1817, %v1889
        %1891 = vmatmul.f32.gmra.mxu0 %v1890
        %v1892 = vpop.f32.mrf.mxu0
        %v1893 = vadd.f32 %v1869, %v1892
        %1894 = vdwg.mxu0
        %1895 = vmatpush.msra.mxu0 0.0
        %1896 = vmatpush.msra.mxu0 0.0
        %1897 = vmatpush.msra.mxu0 0.0
        %1898 = vmatpush.msra.mxu0 0.0
        %1899 = vmatpush.msra.mxu0 0.0
        %1900 = vmatpush.msra.mxu0 0.0
        %1901 = vmatpush.msra.mxu0 0.0
        %1902 = vmatpush.msra.mxu0 0.0
        %1903 = vmatpush.msra.mxu0 0.0
        %1904 = vmatpush.msra.mxu0 0.0
        %1905 = vmatpush.msra.mxu0 0.0
        %1906 = vmatpush.msra.mxu0 0.0
        %1907 = vmatpush.msra.mxu0 0.0
        %1908 = vmatpush.msra.mxu0 0.0
        %1909 = vmatpush.msra.mxu0 0.0
        %v1910 = vand.u32 %v1207, 4294901760
        %1911 = vmatpush.msra.mxu0 %v1910
        %v1912 = vand.u32 %v1817, 4294901760
        %v1913 = vsub.f32 %v1817, %v1912
        %v1914 = vand.u32 %v1913, 4294901760
        %1915 = vmatmul.f32.gmra.mxu0 %v1914
        %v1916 = vpop.f32.mrf.mxu0
        %v1917 = vadd.f32 %v1893, %v1916
        %1918 = vdwg.mxu0
        %1919 = vmatpush.msra.mxu0 0.0
        %1920 = vmatpush.msra.mxu0 0.0
        %1921 = vmatpush.msra.mxu0 0.0
        %1922 = vmatpush.msra.mxu0 0.0
        %1923 = vmatpush.msra.mxu0 0.0
        %1924 = vmatpush.msra.mxu0 0.0
        %1925 = vmatpush.msra.mxu0 0.0
        %1926 = vmatpush.msra.mxu0 0.0
        %1927 = vmatpush.msra.mxu0 0.0
        %1928 = vmatpush.msra.mxu0 0.0
        %1929 = vmatpush.msra.mxu0 0.0
        %1930 = vmatpush.msra.mxu0 0.0
        %1931 = vmatpush.msra.mxu0 0.0
        %1932 = vmatpush.msra.mxu0 0.0
        %1933 = vmatpush.msra.mxu0 0.0
        %v1934 = vand.u32 %v1207, 4294901760
        %v1935 = vsub.f32 %v1207, %v1934
        %v1936 = vand.u32 %v1935, 4294901760
        %1937 = vmatpush.msra.mxu0 %v1936
        %v1938 = vand.u32 %v1817, 4294901760
        %1939 = vmatmul.f32.gmra.mxu0 %v1938
        %v1940 = vpop.f32.mrf.mxu0
        %v1941 = vadd.f32 %v1917, %v1940
        %1942 = vdwg.mxu0
        %1943 = vmatpush.msra.mxu0 0.0
        %1944 = vmatpush.msra.mxu0 0.0
        %1945 = vmatpush.msra.mxu0 0.0
        %1946 = vmatpush.msra.mxu0 0.0
        %1947 = vmatpush.msra.mxu0 0.0
        %1948 = vmatpush.msra.mxu0 0.0
        %1949 = vmatpush.msra.mxu0 0.0
        %1950 = vmatpush.msra.mxu0 0.0
        %1951 = vmatpush.msra.mxu0 0.0
        %1952 = vmatpush.msra.mxu0 0.0
        %1953 = vmatpush.msra.mxu0 0.0
        %1954 = vmatpush.msra.mxu0 0.0
        %1955 = vmatpush.msra.mxu0 0.0
        %1956 = vmatpush.msra.mxu0 0.0
        %1957 = vmatpush.msra.mxu0 0.0
        %v1958 = vand.u32 %v1207, 4294901760
        %1959 = vmatpush.msra.mxu0 %v1958
        %v1960 = vand.u32 %v1817, 4294901760
        %1961 = vmatmul.f32.gmra.mxu0 %v1960
        %v1962 = vpop.f32.mrf.mxu0
        %v1963 = vadd.f32 %v1941, %v1962
        %1964 = vdwg.mxu0
        %1965 = vxpose.xlu0.b32.start [1/16] %v1665, 128
        %1966 = vxpose.xlu0.b32.cont [2/16] 0.0, 128
        %1967 = vxpose.xlu0.b32.cont [3/16] 0.0, 128
        %1968 = vxpose.xlu0.b32.cont [4/16] 0.0, 128
        %1969 = vxpose.xlu0.b32.cont [5/16] 0.0, 128
        %1970 = vxpose.xlu0.b32.cont [6/16] 0.0, 128
        %1971 = vxpose.xlu0.b32.cont [7/16] 0.0, 128
        %1972 = vxpose.xlu0.b32.cont [8/16] 0.0, 128
        %1973 = vxpose.xlu0.b32.cont [9/16] 0.0, 128
        %1974 = vxpose.xlu0.b32.cont [10/16] 0.0, 128
        %1975 = vxpose.xlu0.b32.cont [11/16] 0.0, 128
        %1976 = vxpose.xlu0.b32.cont [12/16] 0.0, 128
        %1977 = vxpose.xlu0.b32.cont [13/16] 0.0, 128
        %1978 = vxpose.xlu0.b32.cont [14/16] 0.0, 128
        %1979 = vxpose.xlu0.b32.cont [15/16] 0.0, 128
        %1980 = vxpose.xlu0.b32.end [16/16] 0.0, 128
        %v1981 = vpop.trf.xlu0
        %v1982 = vpop.trf.xlu0
        %v1983 = vpop.trf.xlu0
        %v1984 = vpop.trf.xlu0
        %v1985 = vpop.trf.xlu0
        %v1986 = vpop.trf.xlu0
        %v1987 = vpop.trf.xlu0
        %v1988 = vpop.trf.xlu0
        %v1989 = vpop.trf.xlu0
        %v1990 = vpop.trf.xlu0
        %v1991 = vpop.trf.xlu0
        %v1992 = vpop.trf.xlu0
        %v1993 = vpop.trf.xlu0
        %v1994 = vpop.trf.xlu0
        %v1995 = vpop.trf.xlu0
        %v1996 = vpop.trf.xlu0
        %1997 = vxpose.xlu0.b32.start [1/16] %v1814, 128
        %1998 = vxpose.xlu0.b32.cont [2/16] 0.0, 128
        %1999 = vxpose.xlu0.b32.cont [3/16] 0.0, 128
        %2000 = vxpose.xlu0.b32.cont [4/16] 0.0, 128
        %2001 = vxpose.xlu0.b32.cont [5/16] 0.0, 128
        %2002 = vxpose.xlu0.b32.cont [6/16] 0.0, 128
        %2003 = vxpose.xlu0.b32.cont [7/16] 0.0, 128
        %2004 = vxpose.xlu0.b32.cont [8/16] 0.0, 128
        %2005 = vxpose.xlu0.b32.cont [9/16] 0.0, 128
        %2006 = vxpose.xlu0.b32.cont [10/16] 0.0, 128
        %2007 = vxpose.xlu0.b32.cont [11/16] 0.0, 128
        %2008 = vxpose.xlu0.b32.cont [12/16] 0.0, 128
        %2009 = vxpose.xlu0.b32.cont [13/16] 0.0, 128
        %2010 = vxpose.xlu0.b32.cont [14/16] 0.0, 128
        %2011 = vxpose.xlu0.b32.cont [15/16] 0.0, 128
        %2012 = vxpose.xlu0.b32.end [16/16] 0.0, 128
        %v2013 = vpop.trf.xlu0
        %v2014 = vpop.trf.xlu0
        %v2015 = vpop.trf.xlu0
        %v2016 = vpop.trf.xlu0
        %v2017 = vpop.trf.xlu0
        %v2018 = vpop.trf.xlu0
        %v2019 = vpop.trf.xlu0
        %v2020 = vpop.trf.xlu0
        %v2021 = vpop.trf.xlu0
        %v2022 = vpop.trf.xlu0
        %v2023 = vpop.trf.xlu0
        %v2024 = vpop.trf.xlu0
        %v2025 = vpop.trf.xlu0
        %v2026 = vpop.trf.xlu0
        %v2027 = vpop.trf.xlu0
        %v2028 = vpop.trf.xlu0
        %2029 = vxpose.xlu0.b32.start [1/16] %v1963, 128
        %2030 = vxpose.xlu0.b32.cont [2/16] 0.0, 128
        %2031 = vxpose.xlu0.b32.cont [3/16] 0.0, 128
        %2032 = vxpose.xlu0.b32.cont [4/16] 0.0, 128
        %2033 = vxpose.xlu0.b32.cont [5/16] 0.0, 128
        %2034 = vxpose.xlu0.b32.cont [6/16] 0.0, 128
        %2035 = vxpose.xlu0.b32.cont [7/16] 0.0, 128
        %2036 = vxpose.xlu0.b32.cont [8/16] 0.0, 128
        %2037 = vxpose.xlu0.b32.cont [9/16] 0.0, 128
        %2038 = vxpose.xlu0.b32.cont [10/16] 0.0, 128
        %2039 = vxpose.xlu0.b32.cont [11/16] 0.0, 128
        %2040 = vxpose.xlu0.b32.cont [12/16] 0.0, 128
        %2041 = vxpose.xlu0.b32.cont [13/16] 0.0, 128
        %2042 = vxpose.xlu0.b32.cont [14/16] 0.0, 128
        %2043 = vxpose.xlu0.b32.cont [15/16] 0.0, 128
        %2044 = vxpose.xlu0.b32.end [16/16] 0.0, 128
        %v2045 = vpop.trf.xlu0
        %v2046 = vpop.trf.xlu0
        %v2047 = vpop.trf.xlu0
        %v2048 = vpop.trf.xlu0
        %v2049 = vpop.trf.xlu0
        %v2050 = vpop.trf.xlu0
        %v2051 = vpop.trf.xlu0
        %v2052 = vpop.trf.xlu0
        %v2053 = vpop.trf.xlu0
        %v2054 = vpop.trf.xlu0
        %v2055 = vpop.trf.xlu0
        %v2056 = vpop.trf.xlu0
        %v2057 = vpop.trf.xlu0
        %v2058 = vpop.trf.xlu0
        %v2059 = vpop.trf.xlu0
        %v2060 = vpop.trf.xlu0
        %2064 = vrot.lane.b32.xlu0 %v1981, 4
        %v2065 = vpop.permute.xlu0 %2064
        %2066 = vrot.lane.b32.xlu0 %v2013, 4
        %v2067 = vpop.permute.xlu0 %2066
        %2068 = vrot.lane.b32.xlu0 %v2045, 4
        %v2069 = vpop.permute.xlu0 %2068
        %vm2073 = vcmask 31744
        %v2074 = vsel %vm2073, %v1981, %v2065
        %v2075 = vsel %vm2073, %v2013, %v2067
        %v2076 = vsel %vm2073, %v2045, %v2069
        %v2080 = vrot.slane %v2074, 4
        %v2081 = vrot.slane %v2075, 4
        %v2082 = vrot.slane %v2076, 4
        %vm2086 = vcmask 1043456
        %v2087 = vsel %vm2086, %v2074, %v2080
        %v2088 = vsel %vm2086, %v2075, %v2081
        %v2089 = vsel %vm2086, %v2076, %v2082
        %v2090 = vsub.f32 %v1092, %v2087
        %v2091 = vsub.f32 %v1124, %v2088
        %v2092 = vsub.f32 %v1156, %v2089
        %v2093 = vand.u32 2147483647, %v2090
        %v2094 = vand.u32 2147483647, %v2091
        %v2095 = vand.u32 2147483647, %v2092
        %v2096 = vadd.f32 %v2093, %v2094
        %v2097 = vadd.f32 %v2096, %v2095
        %v2098 = vld [vmem:[%s5] sm:$0xff]
        %v2099 = vld [vmem:[%s6] sm:$0xff]
        %v2101 = vsel %vm1184, %v2097, 0
        %2103 = vmatpush.msra.mxu0 0.0
        %2104 = vmatpush.msra.mxu0 0.0
        %2105 = vmatpush.msra.mxu0 0.0
        %2106 = vmatpush.msra.mxu0 0.0
        %2107 = vmatpush.msra.mxu0 0.0
        %2108 = vmatpush.msra.mxu0 0.0
        %2109 = vmatpush.msra.mxu0 0.0
        %2110 = vmatpush.msra.mxu0 0.0
        %2111 = vmatpush.msra.mxu0 0.0
        %2112 = vmatpush.msra.mxu0 0.0
        %2113 = vmatpush.msra.mxu0 0.0
        %2114 = vmatpush.msra.mxu0 0.0
        %2115 = vmatpush.msra.mxu0 0.0
        %2116 = vmatpush.msra.mxu0 0.0
        %2117 = vmatpush.msra.mxu0 0.0
        %v2118 = vand.u32 %v2098, 4294901760
        %2119 = vmatpush.msra.mxu0 %v2118
        %v2120 = vand.u32 %v2101, 4294901760
        %v2121 = vsub.f32 %v2101, %v2120
        %v2122 = vand.u32 %v2121, 4294901760
        %v2123 = vsub.f32 %v2121, %v2122
        %v2124 = vand.u32 %v2123, 4294901760
        %2125 = vmatmul.f32.gmra.mxu0 %v2124
        %v2126 = vpop.f32.mrf.mxu0
        %v2127 = vadd.f32 0.0, %v2126
        %2128 = vdwg.mxu0
        %2129 = vmatpush.msra.mxu0 0.0
        %2130 = vmatpush.msra.mxu0 0.0
        %2131 = vmatpush.msra.mxu0 0.0
        %2132 = vmatpush.msra.mxu0 0.0
        %2133 = vmatpush.msra.mxu0 0.0
        %2134 = vmatpush.msra.mxu0 0.0
        %2135 = vmatpush.msra.mxu0 0.0
        %2136 = vmatpush.msra.mxu0 0.0
        %2137 = vmatpush.msra.mxu0 0.0
        %2138 = vmatpush.msra.mxu0 0.0
        %2139 = vmatpush.msra.mxu0 0.0
        %2140 = vmatpush.msra.mxu0 0.0
        %2141 = vmatpush.msra.mxu0 0.0
        %2142 = vmatpush.msra.mxu0 0.0
        %2143 = vmatpush.msra.mxu0 0.0
        %v2144 = vand.u32 %v2098, 4294901760
        %v2145 = vsub.f32 %v2098, %v2144
        %v2146 = vand.u32 %v2145, 4294901760
        %v2147 = vsub.f32 %v2145, %v2146
        %v2148 = vand.u32 %v2147, 4294901760
        %2149 = vmatpush.msra.mxu0 %v2148
        %v2150 = vand.u32 %v2101, 4294901760
        %2151 = vmatmul.f32.gmra.mxu0 %v2150
        %v2152 = vpop.f32.mrf.mxu0
        %v2153 = vadd.f32 %v2127, %v2152
        %2154 = vdwg.mxu0
        %2155 = vmatpush.msra.mxu0 0.0
        %2156 = vmatpush.msra.mxu0 0.0
        %2157 = vmatpush.msra.mxu0 0.0
        %2158 = vmatpush.msra.mxu0 0.0
        %2159 = vmatpush.msra.mxu0 0.0
        %2160 = vmatpush.msra.mxu0 0.0
        %2161 = vmatpush.msra.mxu0 0.0
        %2162 = vmatpush.msra.mxu0 0.0
        %2163 = vmatpush.msra.mxu0 0.0
        %2164 = vmatpush.msra.mxu0 0.0
        %2165 = vmatpush.msra.mxu0 0.0
        %2166 = vmatpush.msra.mxu0 0.0
        %2167 = vmatpush.msra.mxu0 0.0
        %2168 = vmatpush.msra.mxu0 0.0
        %2169 = vmatpush.msra.mxu0 0.0
        %v2170 = vand.u32 %v2098, 4294901760
        %v2171 = vsub.f32 %v2098, %v2170
        %2172 = vmatpush.msra.mxu0 %v2171
        %v2173 = vand.u32 %v2101, 4294901760
        %v2174 = vsub.f32 %v2101, %v2173
        %2175 = vmatmul.f32.gmra.mxu0 %v2174
        %v2176 = vpop.f32.mrf.mxu0
        %v2177 = vadd.f32 %v2153, %v2176
        %2178 = vdwg.mxu0
        %2179 = vmatpush.msra.mxu0 0.0
        %2180 = vmatpush.msra.mxu0 0.0
        %2181 = vmatpush.msra.mxu0 0.0
        %2182 = vmatpush.msra.mxu0 0.0
        %2183 = vmatpush.msra.mxu0 0.0
        %2184 = vmatpush.msra.mxu0 0.0
        %2185 = vmatpush.msra.mxu0 0.0
        %2186 = vmatpush.msra.mxu0 0.0
        %2187 = vmatpush.msra.mxu0 0.0
        %2188 = vmatpush.msra.mxu0 0.0
        %2189 = vmatpush.msra.mxu0 0.0
        %2190 = vmatpush.msra.mxu0 0.0
        %2191 = vmatpush.msra.mxu0 0.0
        %2192 = vmatpush.msra.mxu0 0.0
        %2193 = vmatpush.msra.mxu0 0.0
        %v2194 = vand.u32 %v2098, 4294901760
        %2195 = vmatpush.msra.mxu0 %v2194
        %v2196 = vand.u32 %v2101, 4294901760
        %v2197 = vsub.f32 %v2101, %v2196
        %v2198 = vand.u32 %v2197, 4294901760
        %2199 = vmatmul.f32.gmra.mxu0 %v2198
        %v2200 = vpop.f32.mrf.mxu0
        %v2201 = vadd.f32 %v2177, %v2200
        %2202 = vdwg.mxu0
        %2203 = vmatpush.msra.mxu0 0.0
        %2204 = vmatpush.msra.mxu0 0.0
        %2205 = vmatpush.msra.mxu0 0.0
        %2206 = vmatpush.msra.mxu0 0.0
        %2207 = vmatpush.msra.mxu0 0.0
        %2208 = vmatpush.msra.mxu0 0.0
        %2209 = vmatpush.msra.mxu0 0.0
        %2210 = vmatpush.msra.mxu0 0.0
        %2211 = vmatpush.msra.mxu0 0.0
        %2212 = vmatpush.msra.mxu0 0.0
        %2213 = vmatpush.msra.mxu0 0.0
        %2214 = vmatpush.msra.mxu0 0.0
        %2215 = vmatpush.msra.mxu0 0.0
        %2216 = vmatpush.msra.mxu0 0.0
        %2217 = vmatpush.msra.mxu0 0.0
        %v2218 = vand.u32 %v2098, 4294901760
        %v2219 = vsub.f32 %v2098, %v2218
        %v2220 = vand.u32 %v2219, 4294901760
        %2221 = vmatpush.msra.mxu0 %v2220
        %v2222 = vand.u32 %v2101, 4294901760
        %2223 = vmatmul.f32.gmra.mxu0 %v2222
        %v2224 = vpop.f32.mrf.mxu0
        %v2225 = vadd.f32 %v2201, %v2224
        %2226 = vdwg.mxu0
        %2227 = vmatpush.msra.mxu0 0.0
        %2228 = vmatpush.msra.mxu0 0.0
        %2229 = vmatpush.msra.mxu0 0.0
        %2230 = vmatpush.msra.mxu0 0.0
        %2231 = vmatpush.msra.mxu0 0.0
        %2232 = vmatpush.msra.mxu0 0.0
        %2233 = vmatpush.msra.mxu0 0.0
        %2234 = vmatpush.msra.mxu0 0.0
        %2235 = vmatpush.msra.mxu0 0.0
        %2236 = vmatpush.msra.mxu0 0.0
        %2237 = vmatpush.msra.mxu0 0.0
        %2238 = vmatpush.msra.mxu0 0.0
        %2239 = vmatpush.msra.mxu0 0.0
        %2240 = vmatpush.msra.mxu0 0.0
        %2241 = vmatpush.msra.mxu0 0.0
        %v2242 = vand.u32 %v2098, 4294901760
        %2243 = vmatpush.msra.mxu0 %v2242
        %v2244 = vand.u32 %v2101, 4294901760
        %2245 = vmatmul.f32.gmra.mxu0 %v2244
        %v2246 = vpop.f32.mrf.mxu0
        %v2247 = vadd.f32 %v2225, %v2246
        %2248 = vdwg.mxu0
        %2249 = vxpose.xlu0.b32.start [1/16] %v2247, 128
        %2250 = vxpose.xlu0.b32.cont [2/16] 0.0, 128
        %2251 = vxpose.xlu0.b32.cont [3/16] 0.0, 128
        %2252 = vxpose.xlu0.b32.cont [4/16] 0.0, 128
        %2253 = vxpose.xlu0.b32.cont [5/16] 0.0, 128
        %2254 = vxpose.xlu0.b32.cont [6/16] 0.0, 128
        %2255 = vxpose.xlu0.b32.cont [7/16] 0.0, 128
        %2256 = vxpose.xlu0.b32.cont [8/16] 0.0, 128
        %2257 = vxpose.xlu0.b32.cont [9/16] 0.0, 128
        %2258 = vxpose.xlu0.b32.cont [10/16] 0.0, 128
        %2259 = vxpose.xlu0.b32.cont [11/16] 0.0, 128
        %2260 = vxpose.xlu0.b32.cont [12/16] 0.0, 128
        %2261 = vxpose.xlu0.b32.cont [13/16] 0.0, 128
        %2262 = vxpose.xlu0.b32.cont [14/16] 0.0, 128
        %2263 = vxpose.xlu0.b32.cont [15/16] 0.0, 128
        %2264 = vxpose.xlu0.b32.end [16/16] 0.0, 128
        %v2265 = vpop.trf.xlu0
        %v2266 = vpop.trf.xlu0
        %v2267 = vpop.trf.xlu0
        %v2268 = vpop.trf.xlu0
        %v2269 = vpop.trf.xlu0
        %v2270 = vpop.trf.xlu0
        %v2271 = vpop.trf.xlu0
        %v2272 = vpop.trf.xlu0
        %v2273 = vpop.trf.xlu0
        %v2274 = vpop.trf.xlu0
        %v2275 = vpop.trf.xlu0
        %v2276 = vpop.trf.xlu0
        %v2277 = vpop.trf.xlu0
        %v2278 = vpop.trf.xlu0
        %v2279 = vpop.trf.xlu0
        %v2280 = vpop.trf.xlu0
        %v2282 = vsel %vm1184, %v2265, 0
        %v2285 = vsel %vm1184, %v2266, 0
        %2287 = vmatpush.msra.mxu0 0.0
        %2288 = vmatpush.msra.mxu0 0.0
        %2289 = vmatpush.msra.mxu0 0.0
        %2290 = vmatpush.msra.mxu0 0.0
        %2291 = vmatpush.msra.mxu0 0.0
        %2292 = vmatpush.msra.mxu0 0.0
        %2293 = vmatpush.msra.mxu0 0.0
        %2294 = vmatpush.msra.mxu0 0.0
        %2295 = vmatpush.msra.mxu0 0.0
        %2296 = vmatpush.msra.mxu0 0.0
        %2297 = vmatpush.msra.mxu0 0.0
        %2298 = vmatpush.msra.mxu0 0.0
        %2299 = vmatpush.msra.mxu0 0.0
        %2300 = vmatpush.msra.mxu0 0.0
        %2301 = vmatpush.msra.mxu0 0.0
        %v2302 = vand.u32 %v2099, 4294901760
        %2303 = vmatpush.msra.mxu0 %v2302
        %v2304 = vand.u32 %v2282, 4294901760
        %v2305 = vsub.f32 %v2282, %v2304
        %v2306 = vand.u32 %v2305, 4294901760
        %v2307 = vsub.f32 %v2305, %v2306
        %v2308 = vand.u32 %v2307, 4294901760
        %2309 = vmatmul.f32.gmra.mxu0 %v2308
        %v2310 = vpop.f32.mrf.mxu0
        %v2311 = vadd.f32 0.0, %v2310
        %v2312 = vand.u32 %v2285, 4294901760
        %v2313 = vsub.f32 %v2285, %v2312
        %v2314 = vand.u32 %v2313, 4294901760
        %v2315 = vsub.f32 %v2313, %v2314
        %v2316 = vand.u32 %v2315, 4294901760
        %2317 = vmatmul.f32.gmra.mxu0 %v2316
        %v2318 = vpop.f32.mrf.mxu0
        %v2319 = vadd.f32 0.0, %v2318
        %2320 = vdwg.mxu0
        %2321 = vmatpush.msra.mxu0 0.0
        %2322 = vmatpush.msra.mxu0 0.0
        %2323 = vmatpush.msra.mxu0 0.0
        %2324 = vmatpush.msra.mxu0 0.0
        %2325 = vmatpush.msra.mxu0 0.0
        %2326 = vmatpush.msra.mxu0 0.0
        %2327 = vmatpush.msra.mxu0 0.0
        %2328 = vmatpush.msra.mxu0 0.0
        %2329 = vmatpush.msra.mxu0 0.0
        %2330 = vmatpush.msra.mxu0 0.0
        %2331 = vmatpush.msra.mxu0 0.0
        %2332 = vmatpush.msra.mxu0 0.0
        %2333 = vmatpush.msra.mxu0 0.0
        %2334 = vmatpush.msra.mxu0 0.0
        %2335 = vmatpush.msra.mxu0 0.0
        %v2336 = vand.u32 %v2099, 4294901760
        %v2337 = vsub.f32 %v2099, %v2336
        %v2338 = vand.u32 %v2337, 4294901760
        %v2339 = vsub.f32 %v2337, %v2338
        %v2340 = vand.u32 %v2339, 4294901760
        %2341 = vmatpush.msra.mxu0 %v2340
        %v2342 = vand.u32 %v2282, 4294901760
        %2343 = vmatmul.f32.gmra.mxu0 %v2342
        %v2344 = vpop.f32.mrf.mxu0
        %v2345 = vadd.f32 %v2311, %v2344
        %v2346 = vand.u32 %v2285, 4294901760
        %2347 = vmatmul.f32.gmra.mxu0 %v2346
        %v2348 = vpop.f32.mrf.mxu0
        %v2349 = vadd.f32 %v2319, %v2348
        %2350 = vdwg.mxu0
        %2351 = vmatpush.msra.mxu0 0.0
        %2352 = vmatpush.msra.mxu0 0.0
        %2353 = vmatpush.msra.mxu0 0.0
        %2354 = vmatpush.msra.mxu0 0.0
        %2355 = vmatpush.msra.mxu0 0.0
        %2356 = vmatpush.msra.mxu0 0.0
        %2357 = vmatpush.msra.mxu0 0.0
        %2358 = vmatpush.msra.mxu0 0.0
        %2359 = vmatpush.msra.mxu0 0.0
        %2360 = vmatpush.msra.mxu0 0.0
        %2361 = vmatpush.msra.mxu0 0.0
        %2362 = vmatpush.msra.mxu0 0.0
        %2363 = vmatpush.msra.mxu0 0.0
        %2364 = vmatpush.msra.mxu0 0.0
        %2365 = vmatpush.msra.mxu0 0.0
        %v2366 = vand.u32 %v2099, 4294901760
        %v2367 = vsub.f32 %v2099, %v2366
        %2368 = vmatpush.msra.mxu0 %v2367
        %v2369 = vand.u32 %v2282, 4294901760
        %v2370 = vsub.f32 %v2282, %v2369
        %2371 = vmatmul.f32.gmra.mxu0 %v2370
        %v2372 = vpop.f32.mrf.mxu0
        %v2373 = vadd.f32 %v2345, %v2372
        %v2374 = vand.u32 %v2285, 4294901760
        %v2375 = vsub.f32 %v2285, %v2374
        %2376 = vmatmul.f32.gmra.mxu0 %v2375
        %v2377 = vpop.f32.mrf.mxu0
        %v2378 = vadd.f32 %v2349, %v2377
        %2379 = vdwg.mxu0
        %2380 = vmatpush.msra.mxu0 0.0
        %2381 = vmatpush.msra.mxu0 0.0
        %2382 = vmatpush.msra.mxu0 0.0
        %2383 = vmatpush.msra.mxu0 0.0
        %2384 = vmatpush.msra.mxu0 0.0
        %2385 = vmatpush.msra.mxu0 0.0
        %2386 = vmatpush.msra.mxu0 0.0
        %2387 = vmatpush.msra.mxu0 0.0
        %2388 = vmatpush.msra.mxu0 0.0
        %2389 = vmatpush.msra.mxu0 0.0
        %2390 = vmatpush.msra.mxu0 0.0
        %2391 = vmatpush.msra.mxu0 0.0
        %2392 = vmatpush.msra.mxu0 0.0
        %2393 = vmatpush.msra.mxu0 0.0
        %2394 = vmatpush.msra.mxu0 0.0
        %v2395 = vand.u32 %v2099, 4294901760
        %2396 = vmatpush.msra.mxu0 %v2395
        %v2397 = vand.u32 %v2282, 4294901760
        %v2398 = vsub.f32 %v2282, %v2397
        %v2399 = vand.u32 %v2398, 4294901760
        %2400 = vmatmul.f32.gmra.mxu0 %v2399
        %v2401 = vpop.f32.mrf.mxu0
        %v2402 = vadd.f32 %v2373, %v2401
        %v2403 = vand.u32 %v2285, 4294901760
        %v2404 = vsub.f32 %v2285, %v2403
        %v2405 = vand.u32 %v2404, 4294901760
        %2406 = vmatmul.f32.gmra.mxu0 %v2405
        %v2407 = vpop.f32.mrf.mxu0
        %v2408 = vadd.f32 %v2378, %v2407
        %2409 = vdwg.mxu0
        %2410 = vmatpush.msra.mxu0 0.0
        %2411 = vmatpush.msra.mxu0 0.0
        %2412 = vmatpush.msra.mxu0 0.0
        %2413 = vmatpush.msra.mxu0 0.0
        %2414 = vmatpush.msra.mxu0 0.0
        %2415 = vmatpush.msra.mxu0 0.0
        %2416 = vmatpush.msra.mxu0 0.0
        %2417 = vmatpush.msra.mxu0 0.0
        %2418 = vmatpush.msra.mxu0 0.0
        %2419 = vmatpush.msra.mxu0 0.0
        %2420 = vmatpush.msra.mxu0 0.0
        %2421 = vmatpush.msra.mxu0 0.0
        %2422 = vmatpush.msra.mxu0 0.0
        %2423 = vmatpush.msra.mxu0 0.0
        %2424 = vmatpush.msra.mxu0 0.0
        %v2425 = vand.u32 %v2099, 4294901760
        %v2426 = vsub.f32 %v2099, %v2425
        %v2427 = vand.u32 %v2426, 4294901760
        %2428 = vmatpush.msra.mxu0 %v2427
        %v2429 = vand.u32 %v2282, 4294901760
        %2430 = vmatmul.f32.gmra.mxu0 %v2429
        %v2431 = vpop.f32.mrf.mxu0
        %v2432 = vadd.f32 %v2402, %v2431
        %v2433 = vand.u32 %v2285, 4294901760
        %2434 = vmatmul.f32.gmra.mxu0 %v2433
        %v2435 = vpop.f32.mrf.mxu0
        %v2436 = vadd.f32 %v2408, %v2435
        %2437 = vdwg.mxu0
        %2438 = vmatpush.msra.mxu0 0.0
        %2439 = vmatpush.msra.mxu0 0.0
        %2440 = vmatpush.msra.mxu0 0.0
        %2441 = vmatpush.msra.mxu0 0.0
        %2442 = vmatpush.msra.mxu0 0.0
        %2443 = vmatpush.msra.mxu0 0.0
        %2444 = vmatpush.msra.mxu0 0.0
        %2445 = vmatpush.msra.mxu0 0.0
        %2446 = vmatpush.msra.mxu0 0.0
        %2447 = vmatpush.msra.mxu0 0.0
        %2448 = vmatpush.msra.mxu0 0.0
        %2449 = vmatpush.msra.mxu0 0.0
        %2450 = vmatpush.msra.mxu0 0.0
        %2451 = vmatpush.msra.mxu0 0.0
        %2452 = vmatpush.msra.mxu0 0.0
        %v2453 = vand.u32 %v2099, 4294901760
        %2454 = vmatpush.msra.mxu0 %v2453
        %v2455 = vand.u32 %v2282, 4294901760
        %2456 = vmatmul.f32.gmra.mxu0 %v2455
        %v2457 = vpop.f32.mrf.mxu0
        %v2458 = vadd.f32 %v2432, %v2457
        %v2459 = vand.u32 %v2285, 4294901760
        %2460 = vmatmul.f32.gmra.mxu0 %v2459
        %v2461 = vpop.f32.mrf.mxu0
        %v2462 = vadd.f32 %v2436, %v2461
        %2463 = vdwg.mxu0
        %2464 = vxpose.xlu0.b32.start [1/16] %v2458, 128
        %2465 = vxpose.xlu0.b32.cont [2/16] %v2462, 128
        %2466 = vxpose.xlu0.b32.cont [3/16] 0.0, 128
        %2467 = vxpose.xlu0.b32.cont [4/16] 0.0, 128
        %2468 = vxpose.xlu0.b32.cont [5/16] 0.0, 128
        %2469 = vxpose.xlu0.b32.cont [6/16] 0.0, 128
        %2470 = vxpose.xlu0.b32.cont [7/16] 0.0, 128
        %2471 = vxpose.xlu0.b32.cont [8/16] 0.0, 128
        %2472 = vxpose.xlu0.b32.cont [9/16] 0.0, 128
        %2473 = vxpose.xlu0.b32.cont [10/16] 0.0, 128
        %2474 = vxpose.xlu0.b32.cont [11/16] 0.0, 128
        %2475 = vxpose.xlu0.b32.cont [12/16] 0.0, 128
        %2476 = vxpose.xlu0.b32.cont [13/16] 0.0, 128
        %2477 = vxpose.xlu0.b32.cont [14/16] 0.0, 128
        %2478 = vxpose.xlu0.b32.cont [15/16] 0.0, 128
        %2479 = vxpose.xlu0.b32.end [16/16] 0.0, 128
        %v2480 = vpop.trf.xlu0
        %v2481 = vpop.trf.xlu0
        %v2482 = vpop.trf.xlu0
        %v2483 = vpop.trf.xlu0
        %v2484 = vpop.trf.xlu0
        %v2485 = vpop.trf.xlu0
        %v2486 = vpop.trf.xlu0
        %v2487 = vpop.trf.xlu0
        %v2488 = vpop.trf.xlu0
        %v2489 = vpop.trf.xlu0
        %v2490 = vpop.trf.xlu0
        %v2491 = vpop.trf.xlu0
        %v2492 = vpop.trf.xlu0
        %v2493 = vpop.trf.xlu0
        %v2494 = vpop.trf.xlu0
        %v2495 = vpop.trf.xlu0
        %v2496 = vadd.f32 %v1204, %v2480
        %v2497 = vadd.f32 %v1205, %v2481
        %v2498 = vld [vmem:[%s7] sm:$0xf]
        %v2499 = vld [vmem:[%s8] sm:$0xf]
        %v2500 = vsel %vm2073, %v1981, 0
        %v2503 = vsel %vm2086, %v2498, 0
        %2505 = vmatpush.msra.mxu0 0.0
        %2506 = vmatpush.msra.mxu0 0.0
        %2507 = vmatpush.msra.mxu0 0.0
        %2508 = vmatpush.msra.mxu0 0.0
        %2509 = vmatpush.msra.mxu0 0.0
        %2510 = vmatpush.msra.mxu0 0.0
        %2511 = vmatpush.msra.mxu0 0.0
        %2512 = vmatpush.msra.mxu0 0.0
        %2513 = vmatpush.msra.mxu0 0.0
        %2514 = vmatpush.msra.mxu0 0.0
        %2515 = vmatpush.msra.mxu0 0.0
        %2516 = vmatpush.msra.mxu0 0.0
        %2517 = vmatpush.msra.mxu0 0.0
        %2518 = vmatpush.msra.mxu0 0.0
        %2519 = vmatpush.msra.mxu0 0.0
        %v2520 = vand.u32 %v2503, 4294901760
        %2521 = vmatpush.msra.mxu0 %v2520
        %v2522 = vand.u32 %v2500, 4294901760
        %v2523 = vsub.f32 %v2500, %v2522
        %v2524 = vand.u32 %v2523, 4294901760
        %v2525 = vsub.f32 %v2523, %v2524
        %v2526 = vand.u32 %v2525, 4294901760
        %2527 = vmatmul.f32.gmra.mxu0 %v2526
        %v2528 = vpop.f32.mrf.mxu0
        %v2529 = vadd.f32 0.0, %v2528
        %2530 = vdwg.mxu0
        %2531 = vmatpush.msra.mxu0 0.0
        %2532 = vmatpush.msra.mxu0 0.0
        %2533 = vmatpush.msra.mxu0 0.0
        %2534 = vmatpush.msra.mxu0 0.0
        %2535 = vmatpush.msra.mxu0 0.0
        %2536 = vmatpush.msra.mxu0 0.0
        %2537 = vmatpush.msra.mxu0 0.0
        %2538 = vmatpush.msra.mxu0 0.0
        %2539 = vmatpush.msra.mxu0 0.0
        %2540 = vmatpush.msra.mxu0 0.0
        %2541 = vmatpush.msra.mxu0 0.0
        %2542 = vmatpush.msra.mxu0 0.0
        %2543 = vmatpush.msra.mxu0 0.0
        %2544 = vmatpush.msra.mxu0 0.0
        %2545 = vmatpush.msra.mxu0 0.0
        %v2546 = vand.u32 %v2503, 4294901760
        %v2547 = vsub.f32 %v2503, %v2546
        %v2548 = vand.u32 %v2547, 4294901760
        %v2549 = vsub.f32 %v2547, %v2548
        %v2550 = vand.u32 %v2549, 4294901760
        %2551 = vmatpush.msra.mxu0 %v2550
        %v2552 = vand.u32 %v2500, 4294901760
        %2553 = vmatmul.f32.gmra.mxu0 %v2552
        %v2554 = vpop.f32.mrf.mxu0
        %v2555 = vadd.f32 %v2529, %v2554
        %2556 = vdwg.mxu0
        %2557 = vmatpush.msra.mxu0 0.0
        %2558 = vmatpush.msra.mxu0 0.0
        %2559 = vmatpush.msra.mxu0 0.0
        %2560 = vmatpush.msra.mxu0 0.0
        %2561 = vmatpush.msra.mxu0 0.0
        %2562 = vmatpush.msra.mxu0 0.0
        %2563 = vmatpush.msra.mxu0 0.0
        %2564 = vmatpush.msra.mxu0 0.0
        %2565 = vmatpush.msra.mxu0 0.0
        %2566 = vmatpush.msra.mxu0 0.0
        %2567 = vmatpush.msra.mxu0 0.0
        %2568 = vmatpush.msra.mxu0 0.0
        %2569 = vmatpush.msra.mxu0 0.0
        %2570 = vmatpush.msra.mxu0 0.0
        %2571 = vmatpush.msra.mxu0 0.0
        %v2572 = vand.u32 %v2503, 4294901760
        %v2573 = vsub.f32 %v2503, %v2572
        %2574 = vmatpush.msra.mxu0 %v2573
        %v2575 = vand.u32 %v2500, 4294901760
        %v2576 = vsub.f32 %v2500, %v2575
        %2577 = vmatmul.f32.gmra.mxu0 %v2576
        %v2578 = vpop.f32.mrf.mxu0
        %v2579 = vadd.f32 %v2555, %v2578
        %2580 = vdwg.mxu0
        %2581 = vmatpush.msra.mxu0 0.0
        %2582 = vmatpush.msra.mxu0 0.0
        %2583 = vmatpush.msra.mxu0 0.0
        %2584 = vmatpush.msra.mxu0 0.0
        %2585 = vmatpush.msra.mxu0 0.0
        %2586 = vmatpush.msra.mxu0 0.0
        %2587 = vmatpush.msra.mxu0 0.0
        %2588 = vmatpush.msra.mxu0 0.0
        %2589 = vmatpush.msra.mxu0 0.0
        %2590 = vmatpush.msra.mxu0 0.0
        %2591 = vmatpush.msra.mxu0 0.0
        %2592 = vmatpush.msra.mxu0 0.0
        %2593 = vmatpush.msra.mxu0 0.0
        %2594 = vmatpush.msra.mxu0 0.0
        %2595 = vmatpush.msra.mxu0 0.0
        %v2596 = vand.u32 %v2503, 4294901760
        %2597 = vmatpush.msra.mxu0 %v2596
        %v2598 = vand.u32 %v2500, 4294901760
        %v2599 = vsub.f32 %v2500, %v2598
        %v2600 = vand.u32 %v2599, 4294901760
        %2601 = vmatmul.f32.gmra.mxu0 %v2600
        %v2602 = vpop.f32.mrf.mxu0
        %v2603 = vadd.f32 %v2579, %v2602
        %2604 = vdwg.mxu0
        %2605 = vmatpush.msra.mxu0 0.0
        %2606 = vmatpush.msra.mxu0 0.0
        %2607 = vmatpush.msra.mxu0 0.0
        %2608 = vmatpush.msra.mxu0 0.0
        %2609 = vmatpush.msra.mxu0 0.0
        %2610 = vmatpush.msra.mxu0 0.0
        %2611 = vmatpush.msra.mxu0 0.0
        %2612 = vmatpush.msra.mxu0 0.0
        %2613 = vmatpush.msra.mxu0 0.0
        %2614 = vmatpush.msra.mxu0 0.0
        %2615 = vmatpush.msra.mxu0 0.0
        %2616 = vmatpush.msra.mxu0 0.0
        %2617 = vmatpush.msra.mxu0 0.0
        %2618 = vmatpush.msra.mxu0 0.0
        %2619 = vmatpush.msra.mxu0 0.0
        %v2620 = vand.u32 %v2503, 4294901760
        %v2621 = vsub.f32 %v2503, %v2620
        %v2622 = vand.u32 %v2621, 4294901760
        %2623 = vmatpush.msra.mxu0 %v2622
        %v2624 = vand.u32 %v2500, 4294901760
        %2625 = vmatmul.f32.gmra.mxu0 %v2624
        %v2626 = vpop.f32.mrf.mxu0
        %v2627 = vadd.f32 %v2603, %v2626
        %2628 = vdwg.mxu0
        %2629 = vmatpush.msra.mxu0 0.0
        %2630 = vmatpush.msra.mxu0 0.0
        %2631 = vmatpush.msra.mxu0 0.0
        %2632 = vmatpush.msra.mxu0 0.0
        %2633 = vmatpush.msra.mxu0 0.0
        %2634 = vmatpush.msra.mxu0 0.0
        %2635 = vmatpush.msra.mxu0 0.0
        %2636 = vmatpush.msra.mxu0 0.0
        %2637 = vmatpush.msra.mxu0 0.0
        %2638 = vmatpush.msra.mxu0 0.0
        %2639 = vmatpush.msra.mxu0 0.0
        %2640 = vmatpush.msra.mxu0 0.0
        %2641 = vmatpush.msra.mxu0 0.0
        %2642 = vmatpush.msra.mxu0 0.0
        %2643 = vmatpush.msra.mxu0 0.0
        %v2644 = vand.u32 %v2503, 4294901760
        %2645 = vmatpush.msra.mxu0 %v2644
        %v2646 = vand.u32 %v2500, 4294901760
        %2647 = vmatmul.f32.gmra.mxu0 %v2646
        %v2648 = vpop.f32.mrf.mxu0
        %v2649 = vadd.f32 %v2627, %v2648
        %2650 = vdwg.mxu0
        %v2651 = vsel %vm2073, %v2013, 0
        %2653 = vmatpush.msra.mxu0 0.0
        %2654 = vmatpush.msra.mxu0 0.0
        %2655 = vmatpush.msra.mxu0 0.0
        %2656 = vmatpush.msra.mxu0 0.0
        %2657 = vmatpush.msra.mxu0 0.0
        %2658 = vmatpush.msra.mxu0 0.0
        %2659 = vmatpush.msra.mxu0 0.0
        %2660 = vmatpush.msra.mxu0 0.0
        %2661 = vmatpush.msra.mxu0 0.0
        %2662 = vmatpush.msra.mxu0 0.0
        %2663 = vmatpush.msra.mxu0 0.0
        %2664 = vmatpush.msra.mxu0 0.0
        %2665 = vmatpush.msra.mxu0 0.0
        %2666 = vmatpush.msra.mxu0 0.0
        %2667 = vmatpush.msra.mxu0 0.0
        %v2668 = vand.u32 %v2503, 4294901760
        %2669 = vmatpush.msra.mxu0 %v2668
        %v2670 = vand.u32 %v2651, 4294901760
        %v2671 = vsub.f32 %v2651, %v2670
        %v2672 = vand.u32 %v2671, 4294901760
        %v2673 = vsub.f32 %v2671, %v2672
        %v2674 = vand.u32 %v2673, 4294901760
        %2675 = vmatmul.f32.gmra.mxu0 %v2674
        %v2676 = vpop.f32.mrf.mxu0
        %v2677 = vadd.f32 0.0, %v2676
        %2678 = vdwg.mxu0
        %2679 = vmatpush.msra.mxu0 0.0
        %2680 = vmatpush.msra.mxu0 0.0
        %2681 = vmatpush.msra.mxu0 0.0
        %2682 = vmatpush.msra.mxu0 0.0
        %2683 = vmatpush.msra.mxu0 0.0
        %2684 = vmatpush.msra.mxu0 0.0
        %2685 = vmatpush.msra.mxu0 0.0
        %2686 = vmatpush.msra.mxu0 0.0
        %2687 = vmatpush.msra.mxu0 0.0
        %2688 = vmatpush.msra.mxu0 0.0
        %2689 = vmatpush.msra.mxu0 0.0
        %2690 = vmatpush.msra.mxu0 0.0
        %2691 = vmatpush.msra.mxu0 0.0
        %2692 = vmatpush.msra.mxu0 0.0
        %2693 = vmatpush.msra.mxu0 0.0
        %v2694 = vand.u32 %v2503, 4294901760
        %v2695 = vsub.f32 %v2503, %v2694
        %v2696 = vand.u32 %v2695, 4294901760
        %v2697 = vsub.f32 %v2695, %v2696
        %v2698 = vand.u32 %v2697, 4294901760
        %2699 = vmatpush.msra.mxu0 %v2698
        %v2700 = vand.u32 %v2651, 4294901760
        %2701 = vmatmul.f32.gmra.mxu0 %v2700
        %v2702 = vpop.f32.mrf.mxu0
        %v2703 = vadd.f32 %v2677, %v2702
        %2704 = vdwg.mxu0
        %2705 = vmatpush.msra.mxu0 0.0
        %2706 = vmatpush.msra.mxu0 0.0
        %2707 = vmatpush.msra.mxu0 0.0
        %2708 = vmatpush.msra.mxu0 0.0
        %2709 = vmatpush.msra.mxu0 0.0
        %2710 = vmatpush.msra.mxu0 0.0
        %2711 = vmatpush.msra.mxu0 0.0
        %2712 = vmatpush.msra.mxu0 0.0
        %2713 = vmatpush.msra.mxu0 0.0
        %2714 = vmatpush.msra.mxu0 0.0
        %2715 = vmatpush.msra.mxu0 0.0
        %2716 = vmatpush.msra.mxu0 0.0
        %2717 = vmatpush.msra.mxu0 0.0
        %2718 = vmatpush.msra.mxu0 0.0
        %2719 = vmatpush.msra.mxu0 0.0
        %v2720 = vand.u32 %v2503, 4294901760
        %v2721 = vsub.f32 %v2503, %v2720
        %2722 = vmatpush.msra.mxu0 %v2721
        %v2723 = vand.u32 %v2651, 4294901760
        %v2724 = vsub.f32 %v2651, %v2723
        %2725 = vmatmul.f32.gmra.mxu0 %v2724
        %v2726 = vpop.f32.mrf.mxu0
        %v2727 = vadd.f32 %v2703, %v2726
        %2728 = vdwg.mxu0
        %2729 = vmatpush.msra.mxu0 0.0
        %2730 = vmatpush.msra.mxu0 0.0
        %2731 = vmatpush.msra.mxu0 0.0
        %2732 = vmatpush.msra.mxu0 0.0
        %2733 = vmatpush.msra.mxu0 0.0
        %2734 = vmatpush.msra.mxu0 0.0
        %2735 = vmatpush.msra.mxu0 0.0
        %2736 = vmatpush.msra.mxu0 0.0
        %2737 = vmatpush.msra.mxu0 0.0
        %2738 = vmatpush.msra.mxu0 0.0
        %2739 = vmatpush.msra.mxu0 0.0
        %2740 = vmatpush.msra.mxu0 0.0
        %2741 = vmatpush.msra.mxu0 0.0
        %2742 = vmatpush.msra.mxu0 0.0
        %2743 = vmatpush.msra.mxu0 0.0
        %v2744 = vand.u32 %v2503, 4294901760
        %2745 = vmatpush.msra.mxu0 %v2744
        %v2746 = vand.u32 %v2651, 4294901760
        %v2747 = vsub.f32 %v2651, %v2746
        %v2748 = vand.u32 %v2747, 4294901760
        %2749 = vmatmul.f32.gmra.mxu0 %v2748
        %v2750 = vpop.f32.mrf.mxu0
        %v2751 = vadd.f32 %v2727, %v2750
        %2752 = vdwg.mxu0
        %2753 = vmatpush.msra.mxu0 0.0
        %2754 = vmatpush.msra.mxu0 0.0
        %2755 = vmatpush.msra.mxu0 0.0
        %2756 = vmatpush.msra.mxu0 0.0
        %2757 = vmatpush.msra.mxu0 0.0
        %2758 = vmatpush.msra.mxu0 0.0
        %2759 = vmatpush.msra.mxu0 0.0
        %2760 = vmatpush.msra.mxu0 0.0
        %2761 = vmatpush.msra.mxu0 0.0
        %2762 = vmatpush.msra.mxu0 0.0
        %2763 = vmatpush.msra.mxu0 0.0
        %2764 = vmatpush.msra.mxu0 0.0
        %2765 = vmatpush.msra.mxu0 0.0
        %2766 = vmatpush.msra.mxu0 0.0
        %2767 = vmatpush.msra.mxu0 0.0
        %v2768 = vand.u32 %v2503, 4294901760
        %v2769 = vsub.f32 %v2503, %v2768
        %v2770 = vand.u32 %v2769, 4294901760
        %2771 = vmatpush.msra.mxu0 %v2770
        %v2772 = vand.u32 %v2651, 4294901760
        %2773 = vmatmul.f32.gmra.mxu0 %v2772
        %v2774 = vpop.f32.mrf.mxu0
        %v2775 = vadd.f32 %v2751, %v2774
        %2776 = vdwg.mxu0
        %2777 = vmatpush.msra.mxu0 0.0
        %2778 = vmatpush.msra.mxu0 0.0
        %2779 = vmatpush.msra.mxu0 0.0
        %2780 = vmatpush.msra.mxu0 0.0
        %2781 = vmatpush.msra.mxu0 0.0
        %2782 = vmatpush.msra.mxu0 0.0
        %2783 = vmatpush.msra.mxu0 0.0
        %2784 = vmatpush.msra.mxu0 0.0
        %2785 = vmatpush.msra.mxu0 0.0
        %2786 = vmatpush.msra.mxu0 0.0
        %2787 = vmatpush.msra.mxu0 0.0
        %2788 = vmatpush.msra.mxu0 0.0
        %2789 = vmatpush.msra.mxu0 0.0
        %2790 = vmatpush.msra.mxu0 0.0
        %2791 = vmatpush.msra.mxu0 0.0
        %v2792 = vand.u32 %v2503, 4294901760
        %2793 = vmatpush.msra.mxu0 %v2792
        %v2794 = vand.u32 %v2651, 4294901760
        %2795 = vmatmul.f32.gmra.mxu0 %v2794
        %v2796 = vpop.f32.mrf.mxu0
        %v2797 = vadd.f32 %v2775, %v2796
        %2798 = vdwg.mxu0
        %v2799 = vsel %vm2073, %v2045, 0
        %2801 = vmatpush.msra.mxu0 0.0
        %2802 = vmatpush.msra.mxu0 0.0
        %2803 = vmatpush.msra.mxu0 0.0
        %2804 = vmatpush.msra.mxu0 0.0
        %2805 = vmatpush.msra.mxu0 0.0
        %2806 = vmatpush.msra.mxu0 0.0
        %2807 = vmatpush.msra.mxu0 0.0
        %2808 = vmatpush.msra.mxu0 0.0
        %2809 = vmatpush.msra.mxu0 0.0
        %2810 = vmatpush.msra.mxu0 0.0
        %2811 = vmatpush.msra.mxu0 0.0
        %2812 = vmatpush.msra.mxu0 0.0
        %2813 = vmatpush.msra.mxu0 0.0
        %2814 = vmatpush.msra.mxu0 0.0
        %2815 = vmatpush.msra.mxu0 0.0
        %v2816 = vand.u32 %v2503, 4294901760
        %2817 = vmatpush.msra.mxu0 %v2816
        %v2818 = vand.u32 %v2799, 4294901760
        %v2819 = vsub.f32 %v2799, %v2818
        %v2820 = vand.u32 %v2819, 4294901760
        %v2821 = vsub.f32 %v2819, %v2820
        %v2822 = vand.u32 %v2821, 4294901760
        %2823 = vmatmul.f32.gmra.mxu0 %v2822
        %v2824 = vpop.f32.mrf.mxu0
        %v2825 = vadd.f32 0.0, %v2824
        %2826 = vdwg.mxu0
        %2827 = vmatpush.msra.mxu0 0.0
        %2828 = vmatpush.msra.mxu0 0.0
        %2829 = vmatpush.msra.mxu0 0.0
        %2830 = vmatpush.msra.mxu0 0.0
        %2831 = vmatpush.msra.mxu0 0.0
        %2832 = vmatpush.msra.mxu0 0.0
        %2833 = vmatpush.msra.mxu0 0.0
        %2834 = vmatpush.msra.mxu0 0.0
        %2835 = vmatpush.msra.mxu0 0.0
        %2836 = vmatpush.msra.mxu0 0.0
        %2837 = vmatpush.msra.mxu0 0.0
        %2838 = vmatpush.msra.mxu0 0.0
        %2839 = vmatpush.msra.mxu0 0.0
        %2840 = vmatpush.msra.mxu0 0.0
        %2841 = vmatpush.msra.mxu0 0.0
        %v2842 = vand.u32 %v2503, 4294901760
        %v2843 = vsub.f32 %v2503, %v2842
        %v2844 = vand.u32 %v2843, 4294901760
        %v2845 = vsub.f32 %v2843, %v2844
        %v2846 = vand.u32 %v2845, 4294901760
        %2847 = vmatpush.msra.mxu0 %v2846
        %v2848 = vand.u32 %v2799, 4294901760
        %2849 = vmatmul.f32.gmra.mxu0 %v2848
        %v2850 = vpop.f32.mrf.mxu0
        %v2851 = vadd.f32 %v2825, %v2850
        %2852 = vdwg.mxu0
        %2853 = vmatpush.msra.mxu0 0.0
        %2854 = vmatpush.msra.mxu0 0.0
        %2855 = vmatpush.msra.mxu0 0.0
        %2856 = vmatpush.msra.mxu0 0.0
        %2857 = vmatpush.msra.mxu0 0.0
        %2858 = vmatpush.msra.mxu0 0.0
        %2859 = vmatpush.msra.mxu0 0.0
        %2860 = vmatpush.msra.mxu0 0.0
        %2861 = vmatpush.msra.mxu0 0.0
        %2862 = vmatpush.msra.mxu0 0.0
        %2863 = vmatpush.msra.mxu0 0.0
        %2864 = vmatpush.msra.mxu0 0.0
        %2865 = vmatpush.msra.mxu0 0.0
        %2866 = vmatpush.msra.mxu0 0.0
        %2867 = vmatpush.msra.mxu0 0.0
        %v2868 = vand.u32 %v2503, 4294901760
        %v2869 = vsub.f32 %v2503, %v2868
        %2870 = vmatpush.msra.mxu0 %v2869
        %v2871 = vand.u32 %v2799, 4294901760
        %v2872 = vsub.f32 %v2799, %v2871
        %2873 = vmatmul.f32.gmra.mxu0 %v2872
        %v2874 = vpop.f32.mrf.mxu0
        %v2875 = vadd.f32 %v2851, %v2874
        %2876 = vdwg.mxu0
        %2877 = vmatpush.msra.mxu0 0.0
        %2878 = vmatpush.msra.mxu0 0.0
        %2879 = vmatpush.msra.mxu0 0.0
        %2880 = vmatpush.msra.mxu0 0.0
        %2881 = vmatpush.msra.mxu0 0.0
        %2882 = vmatpush.msra.mxu0 0.0
        %2883 = vmatpush.msra.mxu0 0.0
        %2884 = vmatpush.msra.mxu0 0.0
        %2885 = vmatpush.msra.mxu0 0.0
        %2886 = vmatpush.msra.mxu0 0.0
        %2887 = vmatpush.msra.mxu0 0.0
        %2888 = vmatpush.msra.mxu0 0.0
        %2889 = vmatpush.msra.mxu0 0.0
        %2890 = vmatpush.msra.mxu0 0.0
        %2891 = vmatpush.msra.mxu0 0.0
        %v2892 = vand.u32 %v2503, 4294901760
        %2893 = vmatpush.msra.mxu0 %v2892
        %v2894 = vand.u32 %v2799, 4294901760
        %v2895 = vsub.f32 %v2799, %v2894
        %v2896 = vand.u32 %v2895, 4294901760
        %2897 = vmatmul.f32.gmra.mxu0 %v2896
        %v2898 = vpop.f32.mrf.mxu0
        %v2899 = vadd.f32 %v2875, %v2898
        %2900 = vdwg.mxu0
        %2901 = vmatpush.msra.mxu0 0.0
        %2902 = vmatpush.msra.mxu0 0.0
        %2903 = vmatpush.msra.mxu0 0.0
        %2904 = vmatpush.msra.mxu0 0.0
        %2905 = vmatpush.msra.mxu0 0.0
        %2906 = vmatpush.msra.mxu0 0.0
        %2907 = vmatpush.msra.mxu0 0.0
        %2908 = vmatpush.msra.mxu0 0.0
        %2909 = vmatpush.msra.mxu0 0.0
        %2910 = vmatpush.msra.mxu0 0.0
        %2911 = vmatpush.msra.mxu0 0.0
        %2912 = vmatpush.msra.mxu0 0.0
        %2913 = vmatpush.msra.mxu0 0.0
        %2914 = vmatpush.msra.mxu0 0.0
        %2915 = vmatpush.msra.mxu0 0.0
        %v2916 = vand.u32 %v2503, 4294901760
        %v2917 = vsub.f32 %v2503, %v2916
        %v2918 = vand.u32 %v2917, 4294901760
        %2919 = vmatpush.msra.mxu0 %v2918
        %v2920 = vand.u32 %v2799, 4294901760
        %2921 = vmatmul.f32.gmra.mxu0 %v2920
        %v2922 = vpop.f32.mrf.mxu0
        %v2923 = vadd.f32 %v2899, %v2922
        %2924 = vdwg.mxu0
        %2925 = vmatpush.msra.mxu0 0.0
        %2926 = vmatpush.msra.mxu0 0.0
        %2927 = vmatpush.msra.mxu0 0.0
        %2928 = vmatpush.msra.mxu0 0.0
        %2929 = vmatpush.msra.mxu0 0.0
        %2930 = vmatpush.msra.mxu0 0.0
        %2931 = vmatpush.msra.mxu0 0.0
        %2932 = vmatpush.msra.mxu0 0.0
        %2933 = vmatpush.msra.mxu0 0.0
        %2934 = vmatpush.msra.mxu0 0.0
        %2935 = vmatpush.msra.mxu0 0.0
        %2936 = vmatpush.msra.mxu0 0.0
        %2937 = vmatpush.msra.mxu0 0.0
        %2938 = vmatpush.msra.mxu0 0.0
        %2939 = vmatpush.msra.mxu0 0.0
        %v2940 = vand.u32 %v2503, 4294901760
        %2941 = vmatpush.msra.mxu0 %v2940
        %v2942 = vand.u32 %v2799, 4294901760
        %2943 = vmatmul.f32.gmra.mxu0 %v2942
        %v2944 = vpop.f32.mrf.mxu0
        %v2945 = vadd.f32 %v2923, %v2944
        %2946 = vdwg.mxu0
        %2947 = vxpose.xlu0.b32.start [1/16] %v2649, 128
        %2948 = vxpose.xlu0.b32.cont [2/16] 0.0, 128
        %2949 = vxpose.xlu0.b32.cont [3/16] 0.0, 128
        %2950 = vxpose.xlu0.b32.cont [4/16] 0.0, 128
        %2951 = vxpose.xlu0.b32.cont [5/16] 0.0, 128
        %2952 = vxpose.xlu0.b32.cont [6/16] 0.0, 128
        %2953 = vxpose.xlu0.b32.cont [7/16] 0.0, 128
        %2954 = vxpose.xlu0.b32.cont [8/16] 0.0, 128
        %2955 = vxpose.xlu0.b32.cont [9/16] 0.0, 128
        %2956 = vxpose.xlu0.b32.cont [10/16] 0.0, 128
        %2957 = vxpose.xlu0.b32.cont [11/16] 0.0, 128
        %2958 = vxpose.xlu0.b32.cont [12/16] 0.0, 128
        %2959 = vxpose.xlu0.b32.cont [13/16] 0.0, 128
        %2960 = vxpose.xlu0.b32.cont [14/16] 0.0, 128
        %2961 = vxpose.xlu0.b32.cont [15/16] 0.0, 128
        %2962 = vxpose.xlu0.b32.end [16/16] 0.0, 128
        %v2963 = vpop.trf.xlu0
        %v2964 = vpop.trf.xlu0
        %v2965 = vpop.trf.xlu0
        %v2966 = vpop.trf.xlu0
        %v2967 = vpop.trf.xlu0
        %v2968 = vpop.trf.xlu0
        %v2969 = vpop.trf.xlu0
        %v2970 = vpop.trf.xlu0
        %v2971 = vpop.trf.xlu0
        %v2972 = vpop.trf.xlu0
        %v2973 = vpop.trf.xlu0
        %v2974 = vpop.trf.xlu0
        %v2975 = vpop.trf.xlu0
        %v2976 = vpop.trf.xlu0
        %v2977 = vpop.trf.xlu0
        %v2978 = vpop.trf.xlu0
        %2979 = vxpose.xlu0.b32.start [1/16] %v2797, 128
        %2980 = vxpose.xlu0.b32.cont [2/16] 0.0, 128
        %2981 = vxpose.xlu0.b32.cont [3/16] 0.0, 128
        %2982 = vxpose.xlu0.b32.cont [4/16] 0.0, 128
        %2983 = vxpose.xlu0.b32.cont [5/16] 0.0, 128
        %2984 = vxpose.xlu0.b32.cont [6/16] 0.0, 128
        %2985 = vxpose.xlu0.b32.cont [7/16] 0.0, 128
        %2986 = vxpose.xlu0.b32.cont [8/16] 0.0, 128
        %2987 = vxpose.xlu0.b32.cont [9/16] 0.0, 128
        %2988 = vxpose.xlu0.b32.cont [10/16] 0.0, 128
        %2989 = vxpose.xlu0.b32.cont [11/16] 0.0, 128
        %2990 = vxpose.xlu0.b32.cont [12/16] 0.0, 128
        %2991 = vxpose.xlu0.b32.cont [13/16] 0.0, 128
        %2992 = vxpose.xlu0.b32.cont [14/16] 0.0, 128
        %2993 = vxpose.xlu0.b32.cont [15/16] 0.0, 128
        %2994 = vxpose.xlu0.b32.end [16/16] 0.0, 128
        %v2995 = vpop.trf.xlu0
        %v2996 = vpop.trf.xlu0
        %v2997 = vpop.trf.xlu0
        %v2998 = vpop.trf.xlu0
        %v2999 = vpop.trf.xlu0
        %v3000 = vpop.trf.xlu0
        %v3001 = vpop.trf.xlu0
        %v3002 = vpop.trf.xlu0
        %v3003 = vpop.trf.xlu0
        %v3004 = vpop.trf.xlu0
        %v3005 = vpop.trf.xlu0
        %v3006 = vpop.trf.xlu0
        %v3007 = vpop.trf.xlu0
        %v3008 = vpop.trf.xlu0
        %v3009 = vpop.trf.xlu0
        %v3010 = vpop.trf.xlu0
        %3011 = vxpose.xlu0.b32.start [1/16] %v2945, 128
        %3012 = vxpose.xlu0.b32.cont [2/16] 0.0, 128
        %3013 = vxpose.xlu0.b32.cont [3/16] 0.0, 128
        %3014 = vxpose.xlu0.b32.cont [4/16] 0.0, 128
        %3015 = vxpose.xlu0.b32.cont [5/16] 0.0, 128
        %3016 = vxpose.xlu0.b32.cont [6/16] 0.0, 128
        %3017 = vxpose.xlu0.b32.cont [7/16] 0.0, 128
        %3018 = vxpose.xlu0.b32.cont [8/16] 0.0, 128
        %3019 = vxpose.xlu0.b32.cont [9/16] 0.0, 128
        %3020 = vxpose.xlu0.b32.cont [10/16] 0.0, 128
        %3021 = vxpose.xlu0.b32.cont [11/16] 0.0, 128
        %3022 = vxpose.xlu0.b32.cont [12/16] 0.0, 128
        %3023 = vxpose.xlu0.b32.cont [13/16] 0.0, 128
        %3024 = vxpose.xlu0.b32.cont [14/16] 0.0, 128
        %3025 = vxpose.xlu0.b32.cont [15/16] 0.0, 128
        %3026 = vxpose.xlu0.b32.end [16/16] 0.0, 128
        %v3027 = vpop.trf.xlu0
        %v3028 = vpop.trf.xlu0
        %v3029 = vpop.trf.xlu0
        %v3030 = vpop.trf.xlu0
        %v3031 = vpop.trf.xlu0
        %v3032 = vpop.trf.xlu0
        %v3033 = vpop.trf.xlu0
        %v3034 = vpop.trf.xlu0
        %v3035 = vpop.trf.xlu0
        %v3036 = vpop.trf.xlu0
        %v3037 = vpop.trf.xlu0
        %v3038 = vpop.trf.xlu0
        %v3039 = vpop.trf.xlu0
        %v3040 = vpop.trf.xlu0
        %v3041 = vpop.trf.xlu0
        %v3042 = vpop.trf.xlu0
        %v3044 = vsel %vm2073, %v2963, 0
        %v3047 = vsel %vm2086, %v2499, 0
        %3049 = vmatpush.msra.mxu0 0.0
        %3050 = vmatpush.msra.mxu0 0.0
        %3051 = vmatpush.msra.mxu0 0.0
        %3052 = vmatpush.msra.mxu0 0.0
        %3053 = vmatpush.msra.mxu0 0.0
        %3054 = vmatpush.msra.mxu0 0.0
        %3055 = vmatpush.msra.mxu0 0.0
        %3056 = vmatpush.msra.mxu0 0.0
        %3057 = vmatpush.msra.mxu0 0.0
        %3058 = vmatpush.msra.mxu0 0.0
        %3059 = vmatpush.msra.mxu0 0.0
        %3060 = vmatpush.msra.mxu0 0.0
        %3061 = vmatpush.msra.mxu0 0.0
        %3062 = vmatpush.msra.mxu0 0.0
        %3063 = vmatpush.msra.mxu0 0.0
        %v3064 = vand.u32 %v3047, 4294901760
        %3065 = vmatpush.msra.mxu0 %v3064
        %v3066 = vand.u32 %v3044, 4294901760
        %v3067 = vsub.f32 %v3044, %v3066
        %v3068 = vand.u32 %v3067, 4294901760
        %v3069 = vsub.f32 %v3067, %v3068
        %v3070 = vand.u32 %v3069, 4294901760
        %3071 = vmatmul.f32.gmra.mxu0 %v3070
        %v3072 = vpop.f32.mrf.mxu0
        %v3073 = vadd.f32 0.0, %v3072
        %3074 = vdwg.mxu0
        %3075 = vmatpush.msra.mxu0 0.0
        %3076 = vmatpush.msra.mxu0 0.0
        %3077 = vmatpush.msra.mxu0 0.0
        %3078 = vmatpush.msra.mxu0 0.0
        %3079 = vmatpush.msra.mxu0 0.0
        %3080 = vmatpush.msra.mxu0 0.0
        %3081 = vmatpush.msra.mxu0 0.0
        %3082 = vmatpush.msra.mxu0 0.0
        %3083 = vmatpush.msra.mxu0 0.0
        %3084 = vmatpush.msra.mxu0 0.0
        %3085 = vmatpush.msra.mxu0 0.0
        %3086 = vmatpush.msra.mxu0 0.0
        %3087 = vmatpush.msra.mxu0 0.0
        %3088 = vmatpush.msra.mxu0 0.0
        %3089 = vmatpush.msra.mxu0 0.0
        %v3090 = vand.u32 %v3047, 4294901760
        %v3091 = vsub.f32 %v3047, %v3090
        %v3092 = vand.u32 %v3091, 4294901760
        %v3093 = vsub.f32 %v3091, %v3092
        %v3094 = vand.u32 %v3093, 4294901760
        %3095 = vmatpush.msra.mxu0 %v3094
        %v3096 = vand.u32 %v3044, 4294901760
        %3097 = vmatmul.f32.gmra.mxu0 %v3096
        %v3098 = vpop.f32.mrf.mxu0
        %v3099 = vadd.f32 %v3073, %v3098
        %3100 = vdwg.mxu0
        %3101 = vmatpush.msra.mxu0 0.0
        %3102 = vmatpush.msra.mxu0 0.0
        %3103 = vmatpush.msra.mxu0 0.0
        %3104 = vmatpush.msra.mxu0 0.0
        %3105 = vmatpush.msra.mxu0 0.0
        %3106 = vmatpush.msra.mxu0 0.0
        %3107 = vmatpush.msra.mxu0 0.0
        %3108 = vmatpush.msra.mxu0 0.0
        %3109 = vmatpush.msra.mxu0 0.0
        %3110 = vmatpush.msra.mxu0 0.0
        %3111 = vmatpush.msra.mxu0 0.0
        %3112 = vmatpush.msra.mxu0 0.0
        %3113 = vmatpush.msra.mxu0 0.0
        %3114 = vmatpush.msra.mxu0 0.0
        %3115 = vmatpush.msra.mxu0 0.0
        %v3116 = vand.u32 %v3047, 4294901760
        %v3117 = vsub.f32 %v3047, %v3116
        %3118 = vmatpush.msra.mxu0 %v3117
        %v3119 = vand.u32 %v3044, 4294901760
        %v3120 = vsub.f32 %v3044, %v3119
        %3121 = vmatmul.f32.gmra.mxu0 %v3120
        %v3122 = vpop.f32.mrf.mxu0
        %v3123 = vadd.f32 %v3099, %v3122
        %3124 = vdwg.mxu0
        %3125 = vmatpush.msra.mxu0 0.0
        %3126 = vmatpush.msra.mxu0 0.0
        %3127 = vmatpush.msra.mxu0 0.0
        %3128 = vmatpush.msra.mxu0 0.0
        %3129 = vmatpush.msra.mxu0 0.0
        %3130 = vmatpush.msra.mxu0 0.0
        %3131 = vmatpush.msra.mxu0 0.0
        %3132 = vmatpush.msra.mxu0 0.0
        %3133 = vmatpush.msra.mxu0 0.0
        %3134 = vmatpush.msra.mxu0 0.0
        %3135 = vmatpush.msra.mxu0 0.0
        %3136 = vmatpush.msra.mxu0 0.0
        %3137 = vmatpush.msra.mxu0 0.0
        %3138 = vmatpush.msra.mxu0 0.0
        %3139 = vmatpush.msra.mxu0 0.0
        %v3140 = vand.u32 %v3047, 4294901760
        %3141 = vmatpush.msra.mxu0 %v3140
        %v3142 = vand.u32 %v3044, 4294901760
        %v3143 = vsub.f32 %v3044, %v3142
        %v3144 = vand.u32 %v3143, 4294901760
        %3145 = vmatmul.f32.gmra.mxu0 %v3144
        %v3146 = vpop.f32.mrf.mxu0
        %v3147 = vadd.f32 %v3123, %v3146
        %3148 = vdwg.mxu0
        %3149 = vmatpush.msra.mxu0 0.0
        %3150 = vmatpush.msra.mxu0 0.0
        %3151 = vmatpush.msra.mxu0 0.0
        %3152 = vmatpush.msra.mxu0 0.0
        %3153 = vmatpush.msra.mxu0 0.0
        %3154 = vmatpush.msra.mxu0 0.0
        %3155 = vmatpush.msra.mxu0 0.0
        %3156 = vmatpush.msra.mxu0 0.0
        %3157 = vmatpush.msra.mxu0 0.0
        %3158 = vmatpush.msra.mxu0 0.0
        %3159 = vmatpush.msra.mxu0 0.0
        %3160 = vmatpush.msra.mxu0 0.0
        %3161 = vmatpush.msra.mxu0 0.0
        %3162 = vmatpush.msra.mxu0 0.0
        %3163 = vmatpush.msra.mxu0 0.0
        %v3164 = vand.u32 %v3047, 4294901760
        %v3165 = vsub.f32 %v3047, %v3164
        %v3166 = vand.u32 %v3165, 4294901760
        %3167 = vmatpush.msra.mxu0 %v3166
        %v3168 = vand.u32 %v3044, 4294901760
        %3169 = vmatmul.f32.gmra.mxu0 %v3168
        %v3170 = vpop.f32.mrf.mxu0
        %v3171 = vadd.f32 %v3147, %v3170
        %3172 = vdwg.mxu0
        %3173 = vmatpush.msra.mxu0 0.0
        %3174 = vmatpush.msra.mxu0 0.0
        %3175 = vmatpush.msra.mxu0 0.0
        %3176 = vmatpush.msra.mxu0 0.0
        %3177 = vmatpush.msra.mxu0 0.0
        %3178 = vmatpush.msra.mxu0 0.0
        %3179 = vmatpush.msra.mxu0 0.0
        %3180 = vmatpush.msra.mxu0 0.0
        %3181 = vmatpush.msra.mxu0 0.0
        %3182 = vmatpush.msra.mxu0 0.0
        %3183 = vmatpush.msra.mxu0 0.0
        %3184 = vmatpush.msra.mxu0 0.0
        %3185 = vmatpush.msra.mxu0 0.0
        %3186 = vmatpush.msra.mxu0 0.0
        %3187 = vmatpush.msra.mxu0 0.0
        %v3188 = vand.u32 %v3047, 4294901760
        %3189 = vmatpush.msra.mxu0 %v3188
        %v3190 = vand.u32 %v3044, 4294901760
        %3191 = vmatmul.f32.gmra.mxu0 %v3190
        %v3192 = vpop.f32.mrf.mxu0
        %v3193 = vadd.f32 %v3171, %v3192
        %3194 = vdwg.mxu0
        %v3196 = vsel %vm2073, %v2995, 0
        %3198 = vmatpush.msra.mxu0 0.0
        %3199 = vmatpush.msra.mxu0 0.0
        %3200 = vmatpush.msra.mxu0 0.0
        %3201 = vmatpush.msra.mxu0 0.0
        %3202 = vmatpush.msra.mxu0 0.0
        %3203 = vmatpush.msra.mxu0 0.0
        %3204 = vmatpush.msra.mxu0 0.0
        %3205 = vmatpush.msra.mxu0 0.0
        %3206 = vmatpush.msra.mxu0 0.0
        %3207 = vmatpush.msra.mxu0 0.0
        %3208 = vmatpush.msra.mxu0 0.0
        %3209 = vmatpush.msra.mxu0 0.0
        %3210 = vmatpush.msra.mxu0 0.0
        %3211 = vmatpush.msra.mxu0 0.0
        %3212 = vmatpush.msra.mxu0 0.0
        %v3213 = vand.u32 %v3047, 4294901760
        %3214 = vmatpush.msra.mxu0 %v3213
        %v3215 = vand.u32 %v3196, 4294901760
        %v3216 = vsub.f32 %v3196, %v3215
        %v3217 = vand.u32 %v3216, 4294901760
        %v3218 = vsub.f32 %v3216, %v3217
        %v3219 = vand.u32 %v3218, 4294901760
        %3220 = vmatmul.f32.gmra.mxu0 %v3219
        %v3221 = vpop.f32.mrf.mxu0
        %v3222 = vadd.f32 0.0, %v3221
        %3223 = vdwg.mxu0
        %3224 = vmatpush.msra.mxu0 0.0
        %3225 = vmatpush.msra.mxu0 0.0
        %3226 = vmatpush.msra.mxu0 0.0
        %3227 = vmatpush.msra.mxu0 0.0
        %3228 = vmatpush.msra.mxu0 0.0
        %3229 = vmatpush.msra.mxu0 0.0
        %3230 = vmatpush.msra.mxu0 0.0
        %3231 = vmatpush.msra.mxu0 0.0
        %3232 = vmatpush.msra.mxu0 0.0
        %3233 = vmatpush.msra.mxu0 0.0
        %3234 = vmatpush.msra.mxu0 0.0
        %3235 = vmatpush.msra.mxu0 0.0
        %3236 = vmatpush.msra.mxu0 0.0
        %3237 = vmatpush.msra.mxu0 0.0
        %3238 = vmatpush.msra.mxu0 0.0
        %v3239 = vand.u32 %v3047, 4294901760
        %v3240 = vsub.f32 %v3047, %v3239
        %v3241 = vand.u32 %v3240, 4294901760
        %v3242 = vsub.f32 %v3240, %v3241
        %v3243 = vand.u32 %v3242, 4294901760
        %3244 = vmatpush.msra.mxu0 %v3243
        %v3245 = vand.u32 %v3196, 4294901760
        %3246 = vmatmul.f32.gmra.mxu0 %v3245
        %v3247 = vpop.f32.mrf.mxu0
        %v3248 = vadd.f32 %v3222, %v3247
        %3249 = vdwg.mxu0
        %3250 = vmatpush.msra.mxu0 0.0
        %3251 = vmatpush.msra.mxu0 0.0
        %3252 = vmatpush.msra.mxu0 0.0
        %3253 = vmatpush.msra.mxu0 0.0
        %3254 = vmatpush.msra.mxu0 0.0
        %3255 = vmatpush.msra.mxu0 0.0
        %3256 = vmatpush.msra.mxu0 0.0
        %3257 = vmatpush.msra.mxu0 0.0
        %3258 = vmatpush.msra.mxu0 0.0
        %3259 = vmatpush.msra.mxu0 0.0
        %3260 = vmatpush.msra.mxu0 0.0
        %3261 = vmatpush.msra.mxu0 0.0
        %3262 = vmatpush.msra.mxu0 0.0
        %3263 = vmatpush.msra.mxu0 0.0
        %3264 = vmatpush.msra.mxu0 0.0
        %v3265 = vand.u32 %v3047, 4294901760
        %v3266 = vsub.f32 %v3047, %v3265
        %3267 = vmatpush.msra.mxu0 %v3266
        %v3268 = vand.u32 %v3196, 4294901760
        %v3269 = vsub.f32 %v3196, %v3268
        %3270 = vmatmul.f32.gmra.mxu0 %v3269
        %v3271 = vpop.f32.mrf.mxu0
        %v3272 = vadd.f32 %v3248, %v3271
        %3273 = vdwg.mxu0
        %3274 = vmatpush.msra.mxu0 0.0
        %3275 = vmatpush.msra.mxu0 0.0
        %3276 = vmatpush.msra.mxu0 0.0
        %3277 = vmatpush.msra.mxu0 0.0
        %3278 = vmatpush.msra.mxu0 0.0
        %3279 = vmatpush.msra.mxu0 0.0
        %3280 = vmatpush.msra.mxu0 0.0
        %3281 = vmatpush.msra.mxu0 0.0
        %3282 = vmatpush.msra.mxu0 0.0
        %3283 = vmatpush.msra.mxu0 0.0
        %3284 = vmatpush.msra.mxu0 0.0
        %3285 = vmatpush.msra.mxu0 0.0
        %3286 = vmatpush.msra.mxu0 0.0
        %3287 = vmatpush.msra.mxu0 0.0
        %3288 = vmatpush.msra.mxu0 0.0
        %v3289 = vand.u32 %v3047, 4294901760
        %3290 = vmatpush.msra.mxu0 %v3289
        %v3291 = vand.u32 %v3196, 4294901760
        %v3292 = vsub.f32 %v3196, %v3291
        %v3293 = vand.u32 %v3292, 4294901760
        %3294 = vmatmul.f32.gmra.mxu0 %v3293
        %v3295 = vpop.f32.mrf.mxu0
        %v3296 = vadd.f32 %v3272, %v3295
        %3297 = vdwg.mxu0
        %3298 = vmatpush.msra.mxu0 0.0
        %3299 = vmatpush.msra.mxu0 0.0
        %3300 = vmatpush.msra.mxu0 0.0
        %3301 = vmatpush.msra.mxu0 0.0
        %3302 = vmatpush.msra.mxu0 0.0
        %3303 = vmatpush.msra.mxu0 0.0
        %3304 = vmatpush.msra.mxu0 0.0
        %3305 = vmatpush.msra.mxu0 0.0
        %3306 = vmatpush.msra.mxu0 0.0
        %3307 = vmatpush.msra.mxu0 0.0
        %3308 = vmatpush.msra.mxu0 0.0
        %3309 = vmatpush.msra.mxu0 0.0
        %3310 = vmatpush.msra.mxu0 0.0
        %3311 = vmatpush.msra.mxu0 0.0
        %3312 = vmatpush.msra.mxu0 0.0
        %v3313 = vand.u32 %v3047, 4294901760
        %v3314 = vsub.f32 %v3047, %v3313
        %v3315 = vand.u32 %v3314, 4294901760
        %3316 = vmatpush.msra.mxu0 %v3315
        %v3317 = vand.u32 %v3196, 4294901760
        %3318 = vmatmul.f32.gmra.mxu0 %v3317
        %v3319 = vpop.f32.mrf.mxu0
        %v3320 = vadd.f32 %v3296, %v3319
        %3321 = vdwg.mxu0
        %3322 = vmatpush.msra.mxu0 0.0
        %3323 = vmatpush.msra.mxu0 0.0
        %3324 = vmatpush.msra.mxu0 0.0
        %3325 = vmatpush.msra.mxu0 0.0
        %3326 = vmatpush.msra.mxu0 0.0
        %3327 = vmatpush.msra.mxu0 0.0
        %3328 = vmatpush.msra.mxu0 0.0
        %3329 = vmatpush.msra.mxu0 0.0
        %3330 = vmatpush.msra.mxu0 0.0
        %3331 = vmatpush.msra.mxu0 0.0
        %3332 = vmatpush.msra.mxu0 0.0
        %3333 = vmatpush.msra.mxu0 0.0
        %3334 = vmatpush.msra.mxu0 0.0
        %3335 = vmatpush.msra.mxu0 0.0
        %3336 = vmatpush.msra.mxu0 0.0
        %v3337 = vand.u32 %v3047, 4294901760
        %3338 = vmatpush.msra.mxu0 %v3337
        %v3339 = vand.u32 %v3196, 4294901760
        %3340 = vmatmul.f32.gmra.mxu0 %v3339
        %v3341 = vpop.f32.mrf.mxu0
        %v3342 = vadd.f32 %v3320, %v3341
        %3343 = vdwg.mxu0
        %v3345 = vsel %vm2073, %v3027, 0
        %3347 = vmatpush.msra.mxu0 0.0
        %3348 = vmatpush.msra.mxu0 0.0
        %3349 = vmatpush.msra.mxu0 0.0
        %3350 = vmatpush.msra.mxu0 0.0
        %3351 = vmatpush.msra.mxu0 0.0
        %3352 = vmatpush.msra.mxu0 0.0
        %3353 = vmatpush.msra.mxu0 0.0
        %3354 = vmatpush.msra.mxu0 0.0
        %3355 = vmatpush.msra.mxu0 0.0
        %3356 = vmatpush.msra.mxu0 0.0
        %3357 = vmatpush.msra.mxu0 0.0
        %3358 = vmatpush.msra.mxu0 0.0
        %3359 = vmatpush.msra.mxu0 0.0
        %3360 = vmatpush.msra.mxu0 0.0
        %3361 = vmatpush.msra.mxu0 0.0
        %v3362 = vand.u32 %v3047, 4294901760
        %3363 = vmatpush.msra.mxu0 %v3362
        %v3364 = vand.u32 %v3345, 4294901760
        %v3365 = vsub.f32 %v3345, %v3364
        %v3366 = vand.u32 %v3365, 4294901760
        %v3367 = vsub.f32 %v3365, %v3366
        %v3368 = vand.u32 %v3367, 4294901760
        %3369 = vmatmul.f32.gmra.mxu0 %v3368
        %v3370 = vpop.f32.mrf.mxu0
        %v3371 = vadd.f32 0.0, %v3370
        %3372 = vdwg.mxu0
        %3373 = vmatpush.msra.mxu0 0.0
        %3374 = vmatpush.msra.mxu0 0.0
        %3375 = vmatpush.msra.mxu0 0.0
        %3376 = vmatpush.msra.mxu0 0.0
        %3377 = vmatpush.msra.mxu0 0.0
        %3378 = vmatpush.msra.mxu0 0.0
        %3379 = vmatpush.msra.mxu0 0.0
        %3380 = vmatpush.msra.mxu0 0.0
        %3381 = vmatpush.msra.mxu0 0.0
        %3382 = vmatpush.msra.mxu0 0.0
        %3383 = vmatpush.msra.mxu0 0.0
        %3384 = vmatpush.msra.mxu0 0.0
        %3385 = vmatpush.msra.mxu0 0.0
        %3386 = vmatpush.msra.mxu0 0.0
        %3387 = vmatpush.msra.mxu0 0.0
        %v3388 = vand.u32 %v3047, 4294901760
        %v3389 = vsub.f32 %v3047, %v3388
        %v3390 = vand.u32 %v3389, 4294901760
        %v3391 = vsub.f32 %v3389, %v3390
        %v3392 = vand.u32 %v3391, 4294901760
        %3393 = vmatpush.msra.mxu0 %v3392
        %v3394 = vand.u32 %v3345, 4294901760
        %3395 = vmatmul.f32.gmra.mxu0 %v3394
        %v3396 = vpop.f32.mrf.mxu0
        %v3397 = vadd.f32 %v3371, %v3396
        %3398 = vdwg.mxu0
        %3399 = vmatpush.msra.mxu0 0.0
        %3400 = vmatpush.msra.mxu0 0.0
        %3401 = vmatpush.msra.mxu0 0.0
        %3402 = vmatpush.msra.mxu0 0.0
        %3403 = vmatpush.msra.mxu0 0.0
        %3404 = vmatpush.msra.mxu0 0.0
        %3405 = vmatpush.msra.mxu0 0.0
        %3406 = vmatpush.msra.mxu0 0.0
        %3407 = vmatpush.msra.mxu0 0.0
        %3408 = vmatpush.msra.mxu0 0.0
        %3409 = vmatpush.msra.mxu0 0.0
        %3410 = vmatpush.msra.mxu0 0.0
        %3411 = vmatpush.msra.mxu0 0.0
        %3412 = vmatpush.msra.mxu0 0.0
        %3413 = vmatpush.msra.mxu0 0.0
        %v3414 = vand.u32 %v3047, 4294901760
        %v3415 = vsub.f32 %v3047, %v3414
        %3416 = vmatpush.msra.mxu0 %v3415
        %v3417 = vand.u32 %v3345, 4294901760
        %v3418 = vsub.f32 %v3345, %v3417
        %3419 = vmatmul.f32.gmra.mxu0 %v3418
        %v3420 = vpop.f32.mrf.mxu0
        %v3421 = vadd.f32 %v3397, %v3420
        %3422 = vdwg.mxu0
        %3423 = vmatpush.msra.mxu0 0.0
        %3424 = vmatpush.msra.mxu0 0.0
        %3425 = vmatpush.msra.mxu0 0.0
        %3426 = vmatpush.msra.mxu0 0.0
        %3427 = vmatpush.msra.mxu0 0.0
        %3428 = vmatpush.msra.mxu0 0.0
        %3429 = vmatpush.msra.mxu0 0.0
        %3430 = vmatpush.msra.mxu0 0.0
        %3431 = vmatpush.msra.mxu0 0.0
        %3432 = vmatpush.msra.mxu0 0.0
        %3433 = vmatpush.msra.mxu0 0.0
        %3434 = vmatpush.msra.mxu0 0.0
        %3435 = vmatpush.msra.mxu0 0.0
        %3436 = vmatpush.msra.mxu0 0.0
        %3437 = vmatpush.msra.mxu0 0.0
        %v3438 = vand.u32 %v3047, 4294901760
        %3439 = vmatpush.msra.mxu0 %v3438
        %v3440 = vand.u32 %v3345, 4294901760
        %v3441 = vsub.f32 %v3345, %v3440
        %v3442 = vand.u32 %v3441, 4294901760
        %3443 = vmatmul.f32.gmra.mxu0 %v3442
        %v3444 = vpop.f32.mrf.mxu0
        %v3445 = vadd.f32 %v3421, %v3444
        %3446 = vdwg.mxu0
        %3447 = vmatpush.msra.mxu0 0.0
        %3448 = vmatpush.msra.mxu0 0.0
        %3449 = vmatpush.msra.mxu0 0.0
        %3450 = vmatpush.msra.mxu0 0.0
        %3451 = vmatpush.msra.mxu0 0.0
        %3452 = vmatpush.msra.mxu0 0.0
        %3453 = vmatpush.msra.mxu0 0.0
        %3454 = vmatpush.msra.mxu0 0.0
        %3455 = vmatpush.msra.mxu0 0.0
        %3456 = vmatpush.msra.mxu0 0.0
        %3457 = vmatpush.msra.mxu0 0.0
        %3458 = vmatpush.msra.mxu0 0.0
        %3459 = vmatpush.msra.mxu0 0.0
        %3460 = vmatpush.msra.mxu0 0.0
        %3461 = vmatpush.msra.mxu0 0.0
        %v3462 = vand.u32 %v3047, 4294901760
        %v3463 = vsub.f32 %v3047, %v3462
        %v3464 = vand.u32 %v3463, 4294901760
        %3465 = vmatpush.msra.mxu0 %v3464
        %v3466 = vand.u32 %v3345, 4294901760
        %3467 = vmatmul.f32.gmra.mxu0 %v3466
        %v3468 = vpop.f32.mrf.mxu0
        %v3469 = vadd.f32 %v3445, %v3468
        %3470 = vdwg.mxu0
        %3471 = vmatpush.msra.mxu0 0.0
        %3472 = vmatpush.msra.mxu0 0.0
        %3473 = vmatpush.msra.mxu0 0.0
        %3474 = vmatpush.msra.mxu0 0.0
        %3475 = vmatpush.msra.mxu0 0.0
        %3476 = vmatpush.msra.mxu0 0.0
        %3477 = vmatpush.msra.mxu0 0.0
        %3478 = vmatpush.msra.mxu0 0.0
        %3479 = vmatpush.msra.mxu0 0.0
        %3480 = vmatpush.msra.mxu0 0.0
        %3481 = vmatpush.msra.mxu0 0.0
        %3482 = vmatpush.msra.mxu0 0.0
        %3483 = vmatpush.msra.mxu0 0.0
        %3484 = vmatpush.msra.mxu0 0.0
        %3485 = vmatpush.msra.mxu0 0.0
        %v3486 = vand.u32 %v3047, 4294901760
        %3487 = vmatpush.msra.mxu0 %v3486
        %v3488 = vand.u32 %v3345, 4294901760
        %3489 = vmatmul.f32.gmra.mxu0 %v3488
        %v3490 = vpop.f32.mrf.mxu0
        %v3491 = vadd.f32 %v3469, %v3490
        %3492 = vdwg.mxu0
        %3493 = vxpose.xlu0.b32.start [1/16] %v3193, 128
        %3494 = vxpose.xlu0.b32.cont [2/16] 0.0, 128
        %3495 = vxpose.xlu0.b32.cont [3/16] 0.0, 128
        %3496 = vxpose.xlu0.b32.cont [4/16] 0.0, 128
        %3497 = vxpose.xlu0.b32.cont [5/16] 0.0, 128
        %3498 = vxpose.xlu0.b32.cont [6/16] 0.0, 128
        %3499 = vxpose.xlu0.b32.cont [7/16] 0.0, 128
        %3500 = vxpose.xlu0.b32.cont [8/16] 0.0, 128
        %3501 = vxpose.xlu0.b32.cont [9/16] 0.0, 128
        %3502 = vxpose.xlu0.b32.cont [10/16] 0.0, 128
        %3503 = vxpose.xlu0.b32.cont [11/16] 0.0, 128
        %3504 = vxpose.xlu0.b32.cont [12/16] 0.0, 128
        %3505 = vxpose.xlu0.b32.cont [13/16] 0.0, 128
        %3506 = vxpose.xlu0.b32.cont [14/16] 0.0, 128
        %3507 = vxpose.xlu0.b32.cont [15/16] 0.0, 128
        %3508 = vxpose.xlu0.b32.end [16/16] 0.0, 128
        %v3509 = vpop.trf.xlu0
        %v3510 = vpop.trf.xlu0
        %v3511 = vpop.trf.xlu0
        %v3512 = vpop.trf.xlu0
        %v3513 = vpop.trf.xlu0
        %v3514 = vpop.trf.xlu0
        %v3515 = vpop.trf.xlu0
        %v3516 = vpop.trf.xlu0
        %v3517 = vpop.trf.xlu0
        %v3518 = vpop.trf.xlu0
        %v3519 = vpop.trf.xlu0
        %v3520 = vpop.trf.xlu0
        %v3521 = vpop.trf.xlu0
        %v3522 = vpop.trf.xlu0
        %v3523 = vpop.trf.xlu0
        %v3524 = vpop.trf.xlu0
        %3525 = vxpose.xlu0.b32.start [1/16] %v3342, 128
        %3526 = vxpose.xlu0.b32.cont [2/16] 0.0, 128
        %3527 = vxpose.xlu0.b32.cont [3/16] 0.0, 128
        %3528 = vxpose.xlu0.b32.cont [4/16] 0.0, 128
        %3529 = vxpose.xlu0.b32.cont [5/16] 0.0, 128
        %3530 = vxpose.xlu0.b32.cont [6/16] 0.0, 128
        %3531 = vxpose.xlu0.b32.cont [7/16] 0.0, 128
        %3532 = vxpose.xlu0.b32.cont [8/16] 0.0, 128
        %3533 = vxpose.xlu0.b32.cont [9/16] 0.0, 128
        %3534 = vxpose.xlu0.b32.cont [10/16] 0.0, 128
        %3535 = vxpose.xlu0.b32.cont [11/16] 0.0, 128
        %3536 = vxpose.xlu0.b32.cont [12/16] 0.0, 128
        %3537 = vxpose.xlu0.b32.cont [13/16] 0.0, 128
        %3538 = vxpose.xlu0.b32.cont [14/16] 0.0, 128
        %3539 = vxpose.xlu0.b32.cont [15/16] 0.0, 128
        %3540 = vxpose.xlu0.b32.end [16/16] 0.0, 128
        %v3541 = vpop.trf.xlu0
        %v3542 = vpop.trf.xlu0
        %v3543 = vpop.trf.xlu0
        %v3544 = vpop.trf.xlu0
        %v3545 = vpop.trf.xlu0
        %v3546 = vpop.trf.xlu0
        %v3547 = vpop.trf.xlu0
        %v3548 = vpop.trf.xlu0
        %v3549 = vpop.trf.xlu0
        %v3550 = vpop.trf.xlu0
        %v3551 = vpop.trf.xlu0
        %v3552 = vpop.trf.xlu0
        %v3553 = vpop.trf.xlu0
        %v3554 = vpop.trf.xlu0
        %v3555 = vpop.trf.xlu0
        %v3556 = vpop.trf.xlu0
        %3557 = vxpose.xlu0.b32.start [1/16] %v3491, 128
        %3558 = vxpose.xlu0.b32.cont [2/16] 0.0, 128
        %3559 = vxpose.xlu0.b32.cont [3/16] 0.0, 128
        %3560 = vxpose.xlu0.b32.cont [4/16] 0.0, 128
        %3561 = vxpose.xlu0.b32.cont [5/16] 0.0, 128
        %3562 = vxpose.xlu0.b32.cont [6/16] 0.0, 128
        %3563 = vxpose.xlu0.b32.cont [7/16] 0.0, 128
        %3564 = vxpose.xlu0.b32.cont [8/16] 0.0, 128
        %3565 = vxpose.xlu0.b32.cont [9/16] 0.0, 128
        %3566 = vxpose.xlu0.b32.cont [10/16] 0.0, 128
        %3567 = vxpose.xlu0.b32.cont [11/16] 0.0, 128
        %3568 = vxpose.xlu0.b32.cont [12/16] 0.0, 128
        %3569 = vxpose.xlu0.b32.cont [13/16] 0.0, 128
        %3570 = vxpose.xlu0.b32.cont [14/16] 0.0, 128
        %3571 = vxpose.xlu0.b32.cont [15/16] 0.0, 128
        %3572 = vxpose.xlu0.b32.end [16/16] 0.0, 128
        %v3573 = vpop.trf.xlu0
        %v3574 = vpop.trf.xlu0
        %v3575 = vpop.trf.xlu0
        %v3576 = vpop.trf.xlu0
        %v3577 = vpop.trf.xlu0
        %v3578 = vpop.trf.xlu0
        %v3579 = vpop.trf.xlu0
        %v3580 = vpop.trf.xlu0
        %v3581 = vpop.trf.xlu0
        %v3582 = vpop.trf.xlu0
        %v3583 = vpop.trf.xlu0
        %v3584 = vpop.trf.xlu0
        %v3585 = vpop.trf.xlu0
        %v3586 = vpop.trf.xlu0
        %v3587 = vpop.trf.xlu0
        %v3588 = vpop.trf.xlu0
        %3592 = vrot.lane.b32.xlu0 %v3509, 2
        %v3593 = vpop.permute.xlu0 %3592
        %3594 = vrot.lane.b32.xlu0 %v3541, 2
        %v3595 = vpop.permute.xlu0 %3594
        %3596 = vrot.lane.b32.xlu0 %v3573, 2
        %v3597 = vpop.permute.xlu0 %3596
        %vm3601 = vcmask 15360
        %v3602 = vsel %vm3601, %v3509, %v3593
        %v3603 = vsel %vm3601, %v3541, %v3595
        %v3604 = vsel %vm3601, %v3573, %v3597
        %v3608 = vrot.slane %v3602, 6
        %v3609 = vrot.slane %v3603, 6
        %v3610 = vrot.slane %v3604, 6
        %vm3614 = vcmask 1041408
        %v3615 = vsel %vm3614, %v3602, %v3608
        %v3616 = vsel %vm3614, %v3603, %v3609
        %v3617 = vsel %vm3614, %v3604, %v3610
        %v3618 = vsub.f32 %v1981, %v3615
        %v3619 = vsub.f32 %v2013, %v3616
        %v3620 = vsub.f32 %v2045, %v3617
        %v3621 = vand.u32 2147483647, %v3618
        %v3622 = vand.u32 2147483647, %v3619
        %v3623 = vand.u32 2147483647, %v3620
        %v3624 = vadd.f32 %v3621, %v3622
        %v3625 = vadd.f32 %v3624, %v3623
        %v3626 = vld [vmem:[%s9] sm:$0xf]
        %v3627 = vld [vmem:[%s10] sm:$0xf]
        %v3629 = vsel %vm2073, %v3625, 0
        %v3632 = vsel %vm2086, %v3626, 0
        %3634 = vmatpush.msra.mxu0 0.0
        %3635 = vmatpush.msra.mxu0 0.0
        %3636 = vmatpush.msra.mxu0 0.0
        %3637 = vmatpush.msra.mxu0 0.0
        %3638 = vmatpush.msra.mxu0 0.0
        %3639 = vmatpush.msra.mxu0 0.0
        %3640 = vmatpush.msra.mxu0 0.0
        %3641 = vmatpush.msra.mxu0 0.0
        %3642 = vmatpush.msra.mxu0 0.0
        %3643 = vmatpush.msra.mxu0 0.0
        %3644 = vmatpush.msra.mxu0 0.0
        %3645 = vmatpush.msra.mxu0 0.0
        %3646 = vmatpush.msra.mxu0 0.0
        %3647 = vmatpush.msra.mxu0 0.0
        %3648 = vmatpush.msra.mxu0 0.0
        %v3649 = vand.u32 %v3632, 4294901760
        %3650 = vmatpush.msra.mxu0 %v3649
        %v3651 = vand.u32 %v3629, 4294901760
        %v3652 = vsub.f32 %v3629, %v3651
        %v3653 = vand.u32 %v3652, 4294901760
        %v3654 = vsub.f32 %v3652, %v3653
        %v3655 = vand.u32 %v3654, 4294901760
        %3656 = vmatmul.f32.gmra.mxu0 %v3655
        %v3657 = vpop.f32.mrf.mxu0
        %v3658 = vadd.f32 0.0, %v3657
        %3659 = vdwg.mxu0
        %3660 = vmatpush.msra.mxu0 0.0
        %3661 = vmatpush.msra.mxu0 0.0
        %3662 = vmatpush.msra.mxu0 0.0
        %3663 = vmatpush.msra.mxu0 0.0
        %3664 = vmatpush.msra.mxu0 0.0
        %3665 = vmatpush.msra.mxu0 0.0
        %3666 = vmatpush.msra.mxu0 0.0
        %3667 = vmatpush.msra.mxu0 0.0
        %3668 = vmatpush.msra.mxu0 0.0
        %3669 = vmatpush.msra.mxu0 0.0
        %3670 = vmatpush.msra.mxu0 0.0
        %3671 = vmatpush.msra.mxu0 0.0
        %3672 = vmatpush.msra.mxu0 0.0
        %3673 = vmatpush.msra.mxu0 0.0
        %3674 = vmatpush.msra.mxu0 0.0
        %v3675 = vand.u32 %v3632, 4294901760
        %v3676 = vsub.f32 %v3632, %v3675
        %v3677 = vand.u32 %v3676, 4294901760
        %v3678 = vsub.f32 %v3676, %v3677
        %v3679 = vand.u32 %v3678, 4294901760
        %3680 = vmatpush.msra.mxu0 %v3679
        %v3681 = vand.u32 %v3629, 4294901760
        %3682 = vmatmul.f32.gmra.mxu0 %v3681
        %v3683 = vpop.f32.mrf.mxu0
        %v3684 = vadd.f32 %v3658, %v3683
        %3685 = vdwg.mxu0
        %3686 = vmatpush.msra.mxu0 0.0
        %3687 = vmatpush.msra.mxu0 0.0
        %3688 = vmatpush.msra.mxu0 0.0
        %3689 = vmatpush.msra.mxu0 0.0
        %3690 = vmatpush.msra.mxu0 0.0
        %3691 = vmatpush.msra.mxu0 0.0
        %3692 = vmatpush.msra.mxu0 0.0
        %3693 = vmatpush.msra.mxu0 0.0
        %3694 = vmatpush.msra.mxu0 0.0
        %3695 = vmatpush.msra.mxu0 0.0
        %3696 = vmatpush.msra.mxu0 0.0
        %3697 = vmatpush.msra.mxu0 0.0
        %3698 = vmatpush.msra.mxu0 0.0
        %3699 = vmatpush.msra.mxu0 0.0
        %3700 = vmatpush.msra.mxu0 0.0
        %v3701 = vand.u32 %v3632, 4294901760
        %v3702 = vsub.f32 %v3632, %v3701
        %3703 = vmatpush.msra.mxu0 %v3702
        %v3704 = vand.u32 %v3629, 4294901760
        %v3705 = vsub.f32 %v3629, %v3704
        %3706 = vmatmul.f32.gmra.mxu0 %v3705
        %v3707 = vpop.f32.mrf.mxu0
        %v3708 = vadd.f32 %v3684, %v3707
        %3709 = vdwg.mxu0
        %3710 = vmatpush.msra.mxu0 0.0
        %3711 = vmatpush.msra.mxu0 0.0
        %3712 = vmatpush.msra.mxu0 0.0
        %3713 = vmatpush.msra.mxu0 0.0
        %3714 = vmatpush.msra.mxu0 0.0
        %3715 = vmatpush.msra.mxu0 0.0
        %3716 = vmatpush.msra.mxu0 0.0
        %3717 = vmatpush.msra.mxu0 0.0
        %3718 = vmatpush.msra.mxu0 0.0
        %3719 = vmatpush.msra.mxu0 0.0
        %3720 = vmatpush.msra.mxu0 0.0
        %3721 = vmatpush.msra.mxu0 0.0
        %3722 = vmatpush.msra.mxu0 0.0
        %3723 = vmatpush.msra.mxu0 0.0
        %3724 = vmatpush.msra.mxu0 0.0
        %v3725 = vand.u32 %v3632, 4294901760
        %3726 = vmatpush.msra.mxu0 %v3725
        %v3727 = vand.u32 %v3629, 4294901760
        %v3728 = vsub.f32 %v3629, %v3727
        %v3729 = vand.u32 %v3728, 4294901760
        %3730 = vmatmul.f32.gmra.mxu0 %v3729
        %v3731 = vpop.f32.mrf.mxu0
        %v3732 = vadd.f32 %v3708, %v3731
        %3733 = vdwg.mxu0
        %3734 = vmatpush.msra.mxu0 0.0
        %3735 = vmatpush.msra.mxu0 0.0
        %3736 = vmatpush.msra.mxu0 0.0
        %3737 = vmatpush.msra.mxu0 0.0
        %3738 = vmatpush.msra.mxu0 0.0
        %3739 = vmatpush.msra.mxu0 0.0
        %3740 = vmatpush.msra.mxu0 0.0
        %3741 = vmatpush.msra.mxu0 0.0
        %3742 = vmatpush.msra.mxu0 0.0
        %3743 = vmatpush.msra.mxu0 0.0
        %3744 = vmatpush.msra.mxu0 0.0
        %3745 = vmatpush.msra.mxu0 0.0
        %3746 = vmatpush.msra.mxu0 0.0
        %3747 = vmatpush.msra.mxu0 0.0
        %3748 = vmatpush.msra.mxu0 0.0
        %v3749 = vand.u32 %v3632, 4294901760
        %v3750 = vsub.f32 %v3632, %v3749
        %v3751 = vand.u32 %v3750, 4294901760
        %3752 = vmatpush.msra.mxu0 %v3751
        %v3753 = vand.u32 %v3629, 4294901760
        %3754 = vmatmul.f32.gmra.mxu0 %v3753
        %v3755 = vpop.f32.mrf.mxu0
        %v3756 = vadd.f32 %v3732, %v3755
        %3757 = vdwg.mxu0
        %3758 = vmatpush.msra.mxu0 0.0
        %3759 = vmatpush.msra.mxu0 0.0
        %3760 = vmatpush.msra.mxu0 0.0
        %3761 = vmatpush.msra.mxu0 0.0
        %3762 = vmatpush.msra.mxu0 0.0
        %3763 = vmatpush.msra.mxu0 0.0
        %3764 = vmatpush.msra.mxu0 0.0
        %3765 = vmatpush.msra.mxu0 0.0
        %3766 = vmatpush.msra.mxu0 0.0
        %3767 = vmatpush.msra.mxu0 0.0
        %3768 = vmatpush.msra.mxu0 0.0
        %3769 = vmatpush.msra.mxu0 0.0
        %3770 = vmatpush.msra.mxu0 0.0
        %3771 = vmatpush.msra.mxu0 0.0
        %3772 = vmatpush.msra.mxu0 0.0
        %v3773 = vand.u32 %v3632, 4294901760
        %3774 = vmatpush.msra.mxu0 %v3773
        %v3775 = vand.u32 %v3629, 4294901760
        %3776 = vmatmul.f32.gmra.mxu0 %v3775
        %v3777 = vpop.f32.mrf.mxu0
        %v3778 = vadd.f32 %v3756, %v3777
        %3779 = vdwg.mxu0
        %3780 = vxpose.xlu0.b32.start [1/16] %v3778, 128
        %3781 = vxpose.xlu0.b32.cont [2/16] 0.0, 128
        %3782 = vxpose.xlu0.b32.cont [3/16] 0.0, 128
        %3783 = vxpose.xlu0.b32.cont [4/16] 0.0, 128
        %3784 = vxpose.xlu0.b32.cont [5/16] 0.0, 128
        %3785 = vxpose.xlu0.b32.cont [6/16] 0.0, 128
        %3786 = vxpose.xlu0.b32.cont [7/16] 0.0, 128
        %3787 = vxpose.xlu0.b32.cont [8/16] 0.0, 128
        %3788 = vxpose.xlu0.b32.cont [9/16] 0.0, 128
        %3789 = vxpose.xlu0.b32.cont [10/16] 0.0, 128
        %3790 = vxpose.xlu0.b32.cont [11/16] 0.0, 128
        %3791 = vxpose.xlu0.b32.cont [12/16] 0.0, 128
        %3792 = vxpose.xlu0.b32.cont [13/16] 0.0, 128
        %3793 = vxpose.xlu0.b32.cont [14/16] 0.0, 128
        %3794 = vxpose.xlu0.b32.cont [15/16] 0.0, 128
        %3795 = vxpose.xlu0.b32.end [16/16] 0.0, 128
        %v3796 = vpop.trf.xlu0
        %v3797 = vpop.trf.xlu0
        %v3798 = vpop.trf.xlu0
        %v3799 = vpop.trf.xlu0
        %v3800 = vpop.trf.xlu0
        %v3801 = vpop.trf.xlu0
        %v3802 = vpop.trf.xlu0
        %v3803 = vpop.trf.xlu0
        %v3804 = vpop.trf.xlu0
        %v3805 = vpop.trf.xlu0
        %v3806 = vpop.trf.xlu0
        %v3807 = vpop.trf.xlu0
        %v3808 = vpop.trf.xlu0
        %v3809 = vpop.trf.xlu0
        %v3810 = vpop.trf.xlu0
        %v3811 = vpop.trf.xlu0
        %v3813 = vsel %vm2073, %v3796, 0
        %v3816 = vsel %vm2073, %v3797, 0
        %v3819 = vsel %vm2086, %v3627, 0
        %3821 = vmatpush.msra.mxu0 0.0
        %3822 = vmatpush.msra.mxu0 0.0
        %3823 = vmatpush.msra.mxu0 0.0
        %3824 = vmatpush.msra.mxu0 0.0
        %3825 = vmatpush.msra.mxu0 0.0
        %3826 = vmatpush.msra.mxu0 0.0
        %3827 = vmatpush.msra.mxu0 0.0
        %3828 = vmatpush.msra.mxu0 0.0
        %3829 = vmatpush.msra.mxu0 0.0
        %3830 = vmatpush.msra.mxu0 0.0
        %3831 = vmatpush.msra.mxu0 0.0
        %3832 = vmatpush.msra.mxu0 0.0
        %3833 = vmatpush.msra.mxu0 0.0
        %3834 = vmatpush.msra.mxu0 0.0
        %3835 = vmatpush.msra.mxu0 0.0
        %v3836 = vand.u32 %v3819, 4294901760
        %3837 = vmatpush.msra.mxu0 %v3836
        %v3838 = vand.u32 %v3813, 4294901760
        %v3839 = vsub.f32 %v3813, %v3838
        %v3840 = vand.u32 %v3839, 4294901760
        %v3841 = vsub.f32 %v3839, %v3840
        %v3842 = vand.u32 %v3841, 4294901760
        %3843 = vmatmul.f32.gmra.mxu0 %v3842
        %v3844 = vpop.f32.mrf.mxu0
        %v3845 = vadd.f32 0.0, %v3844
        %v3846 = vand.u32 %v3816, 4294901760
        %v3847 = vsub.f32 %v3816, %v3846
        %v3848 = vand.u32 %v3847, 4294901760
        %v3849 = vsub.f32 %v3847, %v3848
        %v3850 = vand.u32 %v3849, 4294901760
        %3851 = vmatmul.f32.gmra.mxu0 %v3850
        %v3852 = vpop.f32.mrf.mxu0
        %v3853 = vadd.f32 0.0, %v3852
        %3854 = vdwg.mxu0
        %3855 = vmatpush.msra.mxu0 0.0
        %3856 = vmatpush.msra.mxu0 0.0
        %3857 = vmatpush.msra.mxu0 0.0
        %3858 = vmatpush.msra.mxu0 0.0
        %3859 = vmatpush.msra.mxu0 0.0
        %3860 = vmatpush.msra.mxu0 0.0
        %3861 = vmatpush.msra.mxu0 0.0
        %3862 = vmatpush.msra.mxu0 0.0
        %3863 = vmatpush.msra.mxu0 0.0
        %3864 = vmatpush.msra.mxu0 0.0
        %3865 = vmatpush.msra.mxu0 0.0
        %3866 = vmatpush.msra.mxu0 0.0
        %3867 = vmatpush.msra.mxu0 0.0
        %3868 = vmatpush.msra.mxu0 0.0
        %3869 = vmatpush.msra.mxu0 0.0
        %v3870 = vand.u32 %v3819, 4294901760
        %v3871 = vsub.f32 %v3819, %v3870
        %v3872 = vand.u32 %v3871, 4294901760
        %v3873 = vsub.f32 %v3871, %v3872
        %v3874 = vand.u32 %v3873, 4294901760
        %3875 = vmatpush.msra.mxu0 %v3874
        %v3876 = vand.u32 %v3813, 4294901760
        %3877 = vmatmul.f32.gmra.mxu0 %v3876
        %v3878 = vpop.f32.mrf.mxu0
        %v3879 = vadd.f32 %v3845, %v3878
        %v3880 = vand.u32 %v3816, 4294901760
        %3881 = vmatmul.f32.gmra.mxu0 %v3880
        %v3882 = vpop.f32.mrf.mxu0
        %v3883 = vadd.f32 %v3853, %v3882
        %3884 = vdwg.mxu0
        %3885 = vmatpush.msra.mxu0 0.0
        %3886 = vmatpush.msra.mxu0 0.0
        %3887 = vmatpush.msra.mxu0 0.0
        %3888 = vmatpush.msra.mxu0 0.0
        %3889 = vmatpush.msra.mxu0 0.0
        %3890 = vmatpush.msra.mxu0 0.0
        %3891 = vmatpush.msra.mxu0 0.0
        %3892 = vmatpush.msra.mxu0 0.0
        %3893 = vmatpush.msra.mxu0 0.0
        %3894 = vmatpush.msra.mxu0 0.0
        %3895 = vmatpush.msra.mxu0 0.0
        %3896 = vmatpush.msra.mxu0 0.0
        %3897 = vmatpush.msra.mxu0 0.0
        %3898 = vmatpush.msra.mxu0 0.0
        %3899 = vmatpush.msra.mxu0 0.0
        %v3900 = vand.u32 %v3819, 4294901760
        %v3901 = vsub.f32 %v3819, %v3900
        %3902 = vmatpush.msra.mxu0 %v3901
        %v3903 = vand.u32 %v3813, 4294901760
        %v3904 = vsub.f32 %v3813, %v3903
        %3905 = vmatmul.f32.gmra.mxu0 %v3904
        %v3906 = vpop.f32.mrf.mxu0
        %v3907 = vadd.f32 %v3879, %v3906
        %v3908 = vand.u32 %v3816, 4294901760
        %v3909 = vsub.f32 %v3816, %v3908
        %3910 = vmatmul.f32.gmra.mxu0 %v3909
        %v3911 = vpop.f32.mrf.mxu0
        %v3912 = vadd.f32 %v3883, %v3911
        %3913 = vdwg.mxu0
        %3914 = vmatpush.msra.mxu0 0.0
        %3915 = vmatpush.msra.mxu0 0.0
        %3916 = vmatpush.msra.mxu0 0.0
        %3917 = vmatpush.msra.mxu0 0.0
        %3918 = vmatpush.msra.mxu0 0.0
        %3919 = vmatpush.msra.mxu0 0.0
        %3920 = vmatpush.msra.mxu0 0.0
        %3921 = vmatpush.msra.mxu0 0.0
        %3922 = vmatpush.msra.mxu0 0.0
        %3923 = vmatpush.msra.mxu0 0.0
        %3924 = vmatpush.msra.mxu0 0.0
        %3925 = vmatpush.msra.mxu0 0.0
        %3926 = vmatpush.msra.mxu0 0.0
        %3927 = vmatpush.msra.mxu0 0.0
        %3928 = vmatpush.msra.mxu0 0.0
        %v3929 = vand.u32 %v3819, 4294901760
        %3930 = vmatpush.msra.mxu0 %v3929
        %v3931 = vand.u32 %v3813, 4294901760
        %v3932 = vsub.f32 %v3813, %v3931
        %v3933 = vand.u32 %v3932, 4294901760
        %3934 = vmatmul.f32.gmra.mxu0 %v3933
        %v3935 = vpop.f32.mrf.mxu0
        %v3936 = vadd.f32 %v3907, %v3935
        %v3937 = vand.u32 %v3816, 4294901760
        %v3938 = vsub.f32 %v3816, %v3937
        %v3939 = vand.u32 %v3938, 4294901760
        %3940 = vmatmul.f32.gmra.mxu0 %v3939
        %v3941 = vpop.f32.mrf.mxu0
        %v3942 = vadd.f32 %v3912, %v3941
        %3943 = vdwg.mxu0
        %3944 = vmatpush.msra.mxu0 0.0
        %3945 = vmatpush.msra.mxu0 0.0
        %3946 = vmatpush.msra.mxu0 0.0
        %3947 = vmatpush.msra.mxu0 0.0
        %3948 = vmatpush.msra.mxu0 0.0
        %3949 = vmatpush.msra.mxu0 0.0
        %3950 = vmatpush.msra.mxu0 0.0
        %3951 = vmatpush.msra.mxu0 0.0
        %3952 = vmatpush.msra.mxu0 0.0
        %3953 = vmatpush.msra.mxu0 0.0
        %3954 = vmatpush.msra.mxu0 0.0
        %3955 = vmatpush.msra.mxu0 0.0
        %3956 = vmatpush.msra.mxu0 0.0
        %3957 = vmatpush.msra.mxu0 0.0
        %3958 = vmatpush.msra.mxu0 0.0
        %v3959 = vand.u32 %v3819, 4294901760
        %v3960 = vsub.f32 %v3819, %v3959
        %v3961 = vand.u32 %v3960, 4294901760
        %3962 = vmatpush.msra.mxu0 %v3961
        %v3963 = vand.u32 %v3813, 4294901760
        %3964 = vmatmul.f32.gmra.mxu0 %v3963
        %v3965 = vpop.f32.mrf.mxu0
        %v3966 = vadd.f32 %v3936, %v3965
        %v3967 = vand.u32 %v3816, 4294901760
        %3968 = vmatmul.f32.gmra.mxu0 %v3967
        %v3969 = vpop.f32.mrf.mxu0
        %v3970 = vadd.f32 %v3942, %v3969
        %3971 = vdwg.mxu0
        %3972 = vmatpush.msra.mxu0 0.0
        %3973 = vmatpush.msra.mxu0 0.0
        %3974 = vmatpush.msra.mxu0 0.0
        %3975 = vmatpush.msra.mxu0 0.0
        %3976 = vmatpush.msra.mxu0 0.0
        %3977 = vmatpush.msra.mxu0 0.0
        %3978 = vmatpush.msra.mxu0 0.0
        %3979 = vmatpush.msra.mxu0 0.0
        %3980 = vmatpush.msra.mxu0 0.0
        %3981 = vmatpush.msra.mxu0 0.0
        %3982 = vmatpush.msra.mxu0 0.0
        %3983 = vmatpush.msra.mxu0 0.0
        %3984 = vmatpush.msra.mxu0 0.0
        %3985 = vmatpush.msra.mxu0 0.0
        %3986 = vmatpush.msra.mxu0 0.0
        %v3987 = vand.u32 %v3819, 4294901760
        %3988 = vmatpush.msra.mxu0 %v3987
        %v3989 = vand.u32 %v3813, 4294901760
        %3990 = vmatmul.f32.gmra.mxu0 %v3989
        %v3991 = vpop.f32.mrf.mxu0
        %v3992 = vadd.f32 %v3966, %v3991
        %v3993 = vand.u32 %v3816, 4294901760
        %3994 = vmatmul.f32.gmra.mxu0 %v3993
        %v3995 = vpop.f32.mrf.mxu0
        %v3996 = vadd.f32 %v3970, %v3995
        %3997 = vdwg.mxu0
        %3998 = vxpose.xlu0.b32.start [1/16] %v3992, 128
        %3999 = vxpose.xlu0.b32.cont [2/16] %v3996, 128
        %4000 = vxpose.xlu0.b32.cont [3/16] 0.0, 128
        %4001 = vxpose.xlu0.b32.cont [4/16] 0.0, 128
        %4002 = vxpose.xlu0.b32.cont [5/16] 0.0, 128
        %4003 = vxpose.xlu0.b32.cont [6/16] 0.0, 128
        %4004 = vxpose.xlu0.b32.cont [7/16] 0.0, 128
        %4005 = vxpose.xlu0.b32.cont [8/16] 0.0, 128
        %4006 = vxpose.xlu0.b32.cont [9/16] 0.0, 128
        %4007 = vxpose.xlu0.b32.cont [10/16] 0.0, 128
        %4008 = vxpose.xlu0.b32.cont [11/16] 0.0, 128
        %4009 = vxpose.xlu0.b32.cont [12/16] 0.0, 128
        %4010 = vxpose.xlu0.b32.cont [13/16] 0.0, 128
        %4011 = vxpose.xlu0.b32.cont [14/16] 0.0, 128
        %4012 = vxpose.xlu0.b32.cont [15/16] 0.0, 128
        %4013 = vxpose.xlu0.b32.end [16/16] 0.0, 128
        %v4014 = vpop.trf.xlu0
        %v4015 = vpop.trf.xlu0
        %v4016 = vpop.trf.xlu0
        %v4017 = vpop.trf.xlu0
        %v4018 = vpop.trf.xlu0
        %v4019 = vpop.trf.xlu0
        %v4020 = vpop.trf.xlu0
        %v4021 = vpop.trf.xlu0
        %v4022 = vpop.trf.xlu0
        %v4023 = vpop.trf.xlu0
        %v4024 = vpop.trf.xlu0
        %v4025 = vpop.trf.xlu0
        %v4026 = vpop.trf.xlu0
        %v4027 = vpop.trf.xlu0
        %v4028 = vpop.trf.xlu0
        %v4029 = vpop.trf.xlu0
        %v4030 = vadd.f32 %v2496, %v4014
        %v4031 = vadd.f32 %v2497, %v4015
        %v4032 = vsub.f32 0.0, %v4030
        %v4033 = vsub.f32 0.0, %v4031
        %v4034 = vmul.f32 %v4032, 1.442695
        %v4035 = vpow.pop %v4034
        %v4036 = vmul.f32 %v4033, 1.442695
        %v4037 = vpow.pop %v4036
        %v4038 = vadd.f32 %v4035, 1.0
        %v4039 = vadd.f32 %v4037, 1.0
        %v4040 = vrcp.pop %v4038
        %v4041 = vmul.f32 %v4038, %v4040
        %v4042 = vsub.f32 1.0, %v4041
        %v4043 = vmul.f32 %v4040, %v4042
        %v4044 = vadd.f32 %v4040, %v4043
        %vm4045 = vweird.f32 %v4038
        %vm4046 = vweird.f32 %v4040
        %vm4047 = vmor %vm4045, %vm4046
        %v4048 = vsel %vm4047, %v4040, %v4044
        %v4049 = vand.u32 2147483647, %v4038
        %vm4050 = vcmp.eq.f32.partialorder %v4049, 8.507059e+37
        %v4051 = vand.u32 %v4038, 2147483648
        %v4052 = vor.u32 1.1754944e-38, %v4051
        %v4053 = vsel %vm4050, %v4052, %v4048
        %v4054 = vmul.f32 1.0, %v4053
        %v4055 = vrcp.pop %v4039
        %v4056 = vmul.f32 %v4039, %v4055
        %v4057 = vsub.f32 1.0, %v4056
        %v4058 = vmul.f32 %v4055, %v4057
        %v4059 = vadd.f32 %v4055, %v4058
        %vm4060 = vweird.f32 %v4039
        %vm4061 = vweird.f32 %v4055
        %vm4062 = vmor %vm4060, %vm4061
        %v4063 = vsel %vm4062, %v4055, %v4059
        %v4064 = vand.u32 2147483647, %v4039
        %vm4065 = vcmp.eq.f32.partialorder %v4064, 8.507059e+37
        %v4066 = vand.u32 %v4039, 2147483648
        %v4067 = vor.u32 1.1754944e-38, %v4066
        %v4068 = vsel %vm4065, %v4067, %v4063
        %v4069 = vmul.f32 1.0, %v4068
        %v4070 = vsub.f32 %v4054, 0.5
        %v4071 = vsub.f32 %v4069, 0.5
        %v4072 = vand.u32 2147483647, %v4070
        %v4073 = vand.u32 2147483647, %v4071
        %v4074 = vmul.f32 %v4072, 100.0
        %v4075 = vmul.f32 %v4073, 100.0
        %v4076 = vmin.f32 %v4074, 1.0
        %v4077 = vmin.f32 %v4075, 1.0
        %v4078 = vmul.f32 %v4076, 0.5
        %v4079 = vmul.f32 %v4077, 0.5
        %v4080 = vsub.f32 0.0, %v4078
        %v4081 = vsub.f32 0.0, %v4079
        %v4082 = vmul.f32 %v4080, 1.442695
        %v4083 = vpow.pop %v4082
        %v4084 = vmul.f32 %v4081, 1.442695
        %v4085 = vpow.pop %v4084
        %v4086 = vadd.f32 %v4083, 1.0
        %v4087 = vadd.f32 %v4085, 1.0
        %v4088 = vrcp.pop %v4086
        %v4089 = vmul.f32 %v4086, %v4088
        %v4090 = vsub.f32 1.0, %v4089
        %v4091 = vmul.f32 %v4088, %v4090
        %v4092 = vadd.f32 %v4088, %v4091
        %vm4093 = vweird.f32 %v4086
        %vm4094 = vweird.f32 %v4088
        %vm4095 = vmor %vm4093, %vm4094
        %v4096 = vsel %vm4095, %v4088, %v4092
        %v4097 = vand.u32 2147483647, %v4086
        %vm4098 = vcmp.eq.f32.partialorder %v4097, 8.507059e+37
        %v4099 = vand.u32 %v4086, 2147483648
        %v4100 = vor.u32 1.1754944e-38, %v4099
        %v4101 = vsel %vm4098, %v4100, %v4096
        %v4102 = vmul.f32 1.0, %v4101
        %v4103 = vrcp.pop %v4087
        %v4104 = vmul.f32 %v4087, %v4103
        %v4105 = vsub.f32 1.0, %v4104
        %v4106 = vmul.f32 %v4103, %v4105
        %v4107 = vadd.f32 %v4103, %v4106
        %vm4108 = vweird.f32 %v4087
        %vm4109 = vweird.f32 %v4103
        %vm4110 = vmor %vm4108, %vm4109
        %v4111 = vsel %vm4110, %v4103, %v4107
        %v4112 = vand.u32 2147483647, %v4087
        %vm4113 = vcmp.eq.f32.partialorder %v4112, 8.507059e+37
        %v4114 = vand.u32 %v4087, 2147483648
        %v4115 = vor.u32 1.1754944e-38, %v4114
        %v4116 = vsel %vm4113, %v4115, %v4111
        %v4117 = vmul.f32 1.0, %v4116
        %v4118 = vsub.f32 1.0, %v4102
        %v4119 = vsub.f32 1.0, %v4117
        %v4120 = vmul.f32 %v4118, 2.0
        %v4121 = vmul.f32 %v4119, 2.0
        %4122 = vst.msk [vmem:[%s406] sm:$0xff] %vm417, %v4120
        %4123 = vst.msk [vmem:[%s406 + $0x8] sm:$0xff] %vm417, %v4121
        %s4124 = sand.u32 %s272, 1
        %s4125 = scalar_lea.sflag [#allocation4], %s4124
        %s4126 = sand.u32 %s272, 1
        %s4127 = smul.addr %s4126, 16
        %s4128 = scalar_lea.vmem [#allocation5], %s4127
        // Predicated region
        $region69: #{tpu_custom_call.1} parent=63 // pred_check
          %p4129 = pneg %p282
        $region70: #{tpu_custom_call.1} parent=63 // pred_check_branch
          %4131 = sbr.rel (%p4129) target = $region72
        $region71: #{tpu_custom_call.1} parent=63 // pred_region
          %4133 = vsyncadd %s4125, 0
          %s4134 = smul.addr %s28, 2
          %s4135 = smul.addr %s4134, 8
          %s4136 = scalar_lea.hbm %s11, %s4135
          %s4137 = sshll.u32 %s4128, 4
          %s4138 = int_to_ptr.vmem [resolvable:$true] %s4137
          %s4139 = sshll.u32 %s4136, 4
          %s4140 = int_to_ptr.hbm [resolvable:$true] %s4139
          %4145 = dma.vmem_to_hbm [thread:$0]  %s4138, 256, %s4140, %s4125, 128, 128, 8
        $region72: #{tpu_custom_call.1} parent=63 // pred_fallthru
          _
      $region64: #{tpu_custom_call.1} parent=5 // pred_fallthru
        _
      %p4146 = scmp.le.s32.totalorder 2, %s23
      // Predicated region
      $region73: #{tpu_custom_call.1} parent=5 // pred_check
        %p4147 = pneg %p4146
      $region74: #{tpu_custom_call.1} parent=5 // pred_check_branch
        %4149 = sbr.rel (%p4147) target = $region76
      $region75: #{tpu_custom_call.1} parent=5 // pred_region
        %s4150 = ssub.s32 %s23, 2
        // Predicated region
        $region77: #{tpu_custom_call.1} parent=75 // pred_check
          %p4151 = pneg %p288
        $region78: #{tpu_custom_call.1} parent=75 // pred_check_branch
          %4153 = sbr.rel (%p4151) target = $region80
        $region79: #{tpu_custom_call.1} parent=75 // pred_region
          %s4154 = sand.u32 %s273, 1
          %s4155 = scalar_lea.sflag [#allocation4], %s4154
          %s4156 = sand.u32 %s273, 1
          %s4157 = smul.addr %s4156, 16
          %s4158 = scalar_lea.vmem [#allocation5], %s4157
          %4160 = dma.done %s4155, 256
        $region80: #{tpu_custom_call.1} parent=75 // pred_fallthru
          _
      $region76: #{tpu_custom_call.1} parent=5 // pred_fallthru
        _
    $region6: #{tpu_custom_call.1} parent=1 // loop_footer
      %s27 = sadd.s32 1, %s23
    $region7: #{tpu_custom_call.1} parent=1 // loop_footer_branch
      %22 = sbr.rel target = $region3
    $region8: #{tpu_custom_call.1} parent=1 // loop_exit
      _
    %4161 = vsyncpa [#allocation3], 1
    %s4162 = scalar_lea.sflag [#allocation3], 1
    %4163 = vsyncpa %s4162, 1
    %4164 = vsyncpa [#allocation4], 1
    %s4165 = scalar_lea.sflag [#allocation4], 1
    %4166 = vsyncpa %s4165, 1

</llo_original>
